<compile_context>
chip_gen: v6e
topology: v6e:2x2x1
jax: 0.10.0
libtpu: 0.0.40
codegen_flags: <defaults>
</compile_context>

<pallas_src>
import functools
import math

import jax
import jax.numpy as jnp
from jax.experimental import pallas as pl
from jax.experimental.pallas import tpu as pltpu

LANE = 128            # channel / feature padding -> lane-dense stores
F32 = jnp.float32


# ----------------------------------------------------------------------------
# small helpers
# ----------------------------------------------------------------------------
def _round_up(n, m):
    return -(-n // m) * m


def _pad_axis(x, axis, size):
    pads = [(0, 0)] * x.ndim
    pads[axis] = (0, size - x.shape[axis])
    return jnp.pad(x, pads)


def _full_spec(shape):
    nd = len(shape)
    return pl.BlockSpec(tuple(shape), lambda *_: (0,) * nd)


# ----------------------------------------------------------------------------
# Pallas kernels
# ----------------------------------------------------------------------------
def _conv_relu_pool_kernel(p_ref, w_ref, b_ref, o_ref):
    # GEMM over im2col patches.  Rows come in 4 pooling-quadrant blocks
    # [(dy,dx)=(0,0),(0,1),(1,0),(1,1)], identically ordered inside each block,
    # so the 2x2/stride-2 max pool is an elementwise max of the 4 blocks.
    y = jnp.dot(p_ref[...], w_ref[...], preferred_element_type=jnp.float32)
    y = jnp.maximum(y + b_ref[...], 0.0)
    q = o_ref.shape[0]
    o_ref[...] = jnp.maximum(jnp.maximum(y[0:q], y[q:2 * q]),
                             jnp.maximum(y[2 * q:3 * q], y[3 * q:4 * q]))


def _head_kernel(p_ref, w3_ref, b3_ref, w1_ref, b1_ref, w2_ref, b2_ref,
                 logits_ref, feat_ref):
    # conv3 GEMM + ReLU + 2x2 pool + fc1 + ReLU + fc2, all VMEM resident.
    batch = logits_ref.shape[0]
    y = jnp.dot(p_ref[...], w3_ref[...], preferred_element_type=jnp.float32)
    y = jnp.maximum(y + b3_ref[...], 0.0)                      # (16*B, 128)
    q = y.shape[0] // 4                                        # 4*B rows per quadrant
    pooled = jnp.maximum(jnp.maximum(y[0:q], y[q:2 * q]),
                         jnp.maximum(y[2 * q:3 * q], y[3 * q:4 * q]))  # rows = (s, b)
    # Flatten to (B, 4*128).  Matches torch's .view(-1, 2*2*50) because the fc1
    # weight rows were permuted/padded accordingly at prep time.
    xfc = jnp.concatenate(
        [pooled[s * batch:(s + 1) * batch, :] for s in range(4)], axis=1)
    feat = jnp.dot(xfc, w1_ref[...], preferred_element_type=jnp.float32) + b1_ref[...]
    feat = jnp.maximum(feat, 0.0)
    logits = jnp.dot(feat, w2_ref[...], preferred_element_type=jnp.float32) + b2_ref[...]
    feat_ref[...] = feat
    logits_ref[...] = logits


def _conv_relu_pool(patches, w, b):
    rows, k = patches.shape
    n = w.shape[1]
    out_rows = rows // 4
    return pl.pallas_call(
        _conv_relu_pool_kernel,
        out_shape=jax.ShapeDtypeStruct((out_rows, n), F32),
        grid=(1,),
        in_specs=[_full_spec((rows, k)), _full_spec((k, n)), _full_spec((1, n))],
        out_specs=_full_spec((out_rows, n)),
        compiler_params=pltpu.CompilerParams(dimension_semantics=("arbitrary",)),
    )(patches, w, b)


def _head(patches, w3, b3, w1, b1, w2, b2, batch):
    n1 = w1.shape[1]
    n2 = w2.shape[1]
    return pl.pallas_call(
        _head_kernel,
        out_shape=(jax.ShapeDtypeStruct((batch, n2), F32),
                   jax.ShapeDtypeStruct((batch, n1), F32)),
        grid=(1,),
        in_specs=[_full_spec(patches.shape), _full_spec(w3.shape), _full_spec(b3.shape),
                  _full_spec(w1.shape), _full_spec(b1.shape),
                  _full_spec(w2.shape), _full_spec(b2.shape)],
        out_specs=[_full_spec((batch, n2)), _full_spec((batch, n1))],
        compiler_params=pltpu.CompilerParams(dimension_semantics=("arbitrary",)),
    )(patches, w3, b3, w1, b1, w2, b2)


# ----------------------------------------------------------------------------
# Glue: im2col with pooling-quadrant row ordering (pure XLA data movement)
# ----------------------------------------------------------------------------
def _im2col_pool_quadrants(a, kh, kw, batch_major=True):
    """a: (B, H, W, C) NHWC, valid conv, even output size.
    Rows ordered (dy, dx, [b, ph, pw]) (or (dy, dx, ph, pw, b)); cols = (tap, c)."""
    B, H, W, C = a.shape
    oh, ow = H - kh + 1, W - kw + 1
    ph, pw = oh // 2, ow // 2
    taps = [a[:, i:i + oh, j:j + ow, :] for i in range(kh) for j in range(kw)]
    p = jnp.stack(taps, axis=3)                        # (B, oh, ow, T, C)
    p = p.reshape(B, ph, 2, pw, 2, kh * kw, C)         # b, ph, dy, pw, dx, t, c
    if batch_major:
        p = p.transpose(2, 4, 0, 1, 3, 5, 6)           # dy, dx, b, ph, pw, t, c
    else:
        p = p.transpose(2, 4, 1, 3, 0, 5, 6)           # dy, dx, ph, pw, b, t, c
    return p.reshape(4 * B * ph * pw, kh * kw * C)


# ----------------------------------------------------------------------------
# Parameter preparation (runs ONCE, outside the forward hot path)
# ----------------------------------------------------------------------------
def prepare_params(p, channels, classes):
    nf1 = _round_up(500, LANE)                     # 512
    nf2 = _round_up(max(classes, 1), LANE)         # 128 for classes=10

    # conv1: (20, Cin, 5, 5) -> (25*Cin, 128); rows = (tap, cin)
    w1 = p["conv1_w"].astype(F32).transpose(2, 3, 1, 0).reshape(25 * channels, 20)
    w1 = _pad_axis(w1, 1, LANE)
    b1 = _pad_axis(p["conv1_b"].astype(F32), 0, LANE).reshape(1, LANE)

    # conv2: (50, 20, 5, 5) -> (25*128, 128); rows = (tap, cin_padded)
    w2 = p["conv2_w"].astype(F32).transpose(2, 3, 1, 0).reshape(25, 20, 50)
    w2 = _pad_axis(_pad_axis(w2, 1, LANE), 2, LANE).reshape(25 * LANE, LANE)
    b2 = _pad_axis(p["conv2_b"].astype(F32), 0, LANE).reshape(1, LANE)

    # conv3: (50, 50, 3, 3) -> (9*128, 128)
    w3 = p["conv3_w"].astype(F32).transpose(2, 3, 1, 0).reshape(9, 50, 50)
    w3 = _pad_axis(_pad_axis(w3, 1, LANE), 2, LANE).reshape(9 * LANE, LANE)
    b3 = _pad_axis(p["conv3_b"].astype(F32), 0, LANE).reshape(1, LANE)

    # fc1: (500, 200) with torch flatten order (c, p, q) -> (4*128, 512);
    # rows = (s = p*2+q, c_padded) to match the kernel's (spatial, channel) flatten.
    wf1 = p["fc1_w"].astype(F32).reshape(500, 50, 2, 2).transpose(2, 3, 1, 0)
    wf1 = wf1.reshape(4, 50, 500)
    wf1 = _pad_axis(_pad_axis(wf1, 1, LANE), 2, nf1).reshape(4 * LANE, nf1)
    bf1 = _pad_axis(p["fc1_b"].astype(F32), 0, nf1).reshape(1, nf1)

    # fc2: (classes, 500) -> (512, 128)
    wf2 = _pad_axis(_pad_axis(p["fc2_w"].astype(F32).T, 0, nf1), 1, nf2)
    bf2 = _pad_axis(p["fc2_b"].astype(F32), 0, nf2).reshape(1, nf2)

    return dict(w1=w1, b1=b1, w2=w2, b2=b2, w3=w3, b3=b3,
                wf1=wf1, bf1=bf1, wf2=wf2, bf2=bf2)


# ----------------------------------------------------------------------------
# Forward (matches medium.forward; feat flag returns (logits, feature))
# ----------------------------------------------------------------------------
def medium_forward(x_nchw, kp, classes, feat=False):
    B, _, H, W = x_nchw.shape
    assert H == 28 and W == 28, "fc1 = Linear(2*2*50, .) implies 28x28 input"
    x = jnp.transpose(x_nchw, (0, 2, 3, 1)).astype(F32)        # internal NHWC

    h1 = (H - 5 + 1) // 2                                      # 12
    p1 = _im2col_pool_quadrants(x, 5, 5, batch_major=True)
    a1 = _conv_relu_pool(p1, kp["w1"], kp["b1"]).reshape(B, h1, h1, LANE)

    h2 = (h1 - 5 + 1) // 2                                     # 4
    p2 = _im2col_pool_quadrants(a1, 5, 5, batch_major=True)
    a2 = _conv_relu_pool(p2, kp["w2"], kp["b2"]).reshape(B, h2, h2, LANE)

    a2p = jnp.pad(a2, ((0, 0), (1, 1), (1, 1), (0, 0)))        # conv3 zero padding
    p3 = _im2col_pool_quadrants(a2p, 3, 3, batch_major=False)
    logits_p, feat_p = _head(p3, kp["w3"], kp["b3"], kp["wf1"], kp["bf1"],
                             kp["wf2"], kp["bf2"], B)

    logits = logits_p[:, :classes]
    if feat:
        return logits, feat_p[:, :500]
    return logits
# TODO(synk): `self.number` counter / `sign` argument are host-side Python
# bookkeeping with no tensor compute; not represented in the kernels.


# ----------------------------------------------------------------------------
# Deterministic synthetic init (PyTorch-style U(-1/sqrt(fan_in), 1/sqrt(fan_in)))
# ----------------------------------------------------------------------------
def init_params(key, channels, classes):
    def uinit(k, shape, fan_in):
        bound = 1.0 / math.sqrt(fan_in)
        return jax.random.uniform(k, shape, F32, -bound, bound)

    ks = jax.random.split(key, 10)
    p = {}
    p["conv1_w"] = uinit(ks[0], (20, channels, 5, 5), channels * 25)
    p["conv1_b"] = uinit(ks[1], (20,), channels * 25)
    p["conv2_w"] = uinit(ks[2], (50, 20, 5, 5), 20 * 25)
    p["conv2_b"] = uinit(ks[3], (50,), 20 * 25)
    p["conv3_w"] = uinit(ks[4], (50, 50, 3, 3), 50 * 9)
    p["conv3_b"] = uinit(ks[5], (50,), 50 * 9)
    p["fc1_w"] = uinit(ks[6], (500, 2 * 2 * 50), 200)
    p["fc1_b"] = uinit(ks[7], (500,), 200)
    p["fc2_w"] = uinit(ks[8], (classes, 500), 500)
    p["fc2_b"] = uinit(ks[9], (classes,), 500)
    return p


if __name__ == "__main__":
    channels, classes, batch = 1, 10, 2          # 28x28 input implied by fc1 dims
    key = jax.random.PRNGKey(0)
    pkey, xkey = jax.random.split(key)
    params = init_params(pkey, channels, classes)
    kparams = prepare_params(params, channels, classes)     # one-time weight prep
    x = jax.random.normal(xkey, (batch, channels, 28, 28), dtype=jnp.float32)

    fwd = jax.jit(functools.partial(medium_forward, classes=classes))
    logits = fwd(x, kparams)
    logits = jax.block_until_ready(logits)
    assert logits.shape == (batch, classes), logits.shape
    assert bool(jnp.all(jnp.isfinite(logits)))
    print("KERNEL_OK")
</pallas_src>

<mosaic_0001>
module attributes {stable_mosaic.version = 11 : i64} {
  func.func @_conv_relu_pool_kernel(%arg0: i32, %arg1: memref<1152x25xf32, #tpu.memory_space<vmem>>, %arg2: memref<25x128xf32, #tpu.memory_space<vmem>>, %arg3: memref<1x128xf32, #tpu.memory_space<vmem>>, %arg4: memref<288x128xf32, #tpu.memory_space<vmem>>) attributes {dimension_semantics = [#tpu.dimension_semantics<arbitrary>], iteration_bounds = array<i64: 1>, scalar_prefetch = 0 : i64, scratch_operands = 0 : i64, tpu.core_type = #tpu.core_type<tc>, window_params = [{pipeline_mode = #tpu.pipeline_mode<synchronous>, transform_indices = @transform_0, window_bounds = array<i64: 1152, 25>}, {pipeline_mode = #tpu.pipeline_mode<synchronous>, transform_indices = @transform_1, window_bounds = array<i64: 25, 128>}, {pipeline_mode = #tpu.pipeline_mode<synchronous>, transform_indices = @transform_2, window_bounds = array<i64: 1, 128>}, {pipeline_mode = #tpu.pipeline_mode<synchronous>, transform_indices = @transform_3, window_bounds = array<i64: 288, 128>}]} {
    %c0 = arith.constant 0 : index
    %c0_0 = arith.constant 0 : index
    %0 = vector.load %arg1[%c0, %c0_0] : memref<1152x25xf32, #tpu.memory_space<vmem>>, vector<1152x25xf32>
    %c0_1 = arith.constant 0 : index
    %c0_2 = arith.constant 0 : index
    %1 = vector.load %arg2[%c0_1, %c0_2] : memref<25x128xf32, #tpu.memory_space<vmem>>, vector<25x128xf32>
    %cst = arith.constant dense<0.000000e+00> : vector<1152x128xf32>
    %2 = tpu.matmul %0, %1, %cst {dimension_numbers = #tpu.dot_dimension_numbers<[1], [0], [0], [1], [0, 0, 1, 1], [], []>} : vector<1152x25xf32>, vector<25x128xf32>, vector<1152x128xf32> -> vector<1152x128xf32>
    %c0_3 = arith.constant 0 : index
    %c0_4 = arith.constant 0 : index
    %3 = vector.load %arg3[%c0_3, %c0_4] : memref<1x128xf32, #tpu.memory_space<vmem>>, vector<1x128xf32>
    %4 = vector.broadcast %3 : vector<1x128xf32> to vector<1152x128xf32>
    %5 = arith.addf %2, %4 : vector<1152x128xf32>
    %cst_5 = arith.constant 0.000000e+00 : f32
    %6 = vector.broadcast %cst_5 : f32 to vector<1152x128xf32>
    %7 = arith.maximumf %5, %6 : vector<1152x128xf32>
    %8 = vector.extract_strided_slice %7 {offsets = [0, 0], sizes = [288, 128], strides = [1, 1]} : vector<1152x128xf32> to vector<288x128xf32>
    %9 = vector.extract_strided_slice %7 {offsets = [288, 0], sizes = [288, 128], strides = [1, 1]} : vector<1152x128xf32> to vector<288x128xf32>
    %10 = arith.maximumf %8, %9 : vector<288x128xf32>
    %11 = vector.extract_strided_slice %7 {offsets = [576, 0], sizes = [288, 128], strides = [1, 1]} : vector<1152x128xf32> to vector<288x128xf32>
    %12 = vector.extract_strided_slice %7 {offsets = [864, 0], sizes = [288, 128], strides = [1, 1]} : vector<1152x128xf32> to vector<288x128xf32>
    %13 = arith.maximumf %11, %12 : vector<288x128xf32>
    %14 = arith.maximumf %10, %13 : vector<288x128xf32>
    %c0_6 = arith.constant 0 : index
    %c0_7 = arith.constant 0 : index
    %15 = vector.load %arg4[%c0_6, %c0_7] : memref<288x128xf32, #tpu.memory_space<vmem>>, vector<288x128xf32>
    tpu.vector_store %arg4[%c0_6, %c0_7], %14 {strides = array<i32>} : memref<288x128xf32, #tpu.memory_space<vmem>>, vector<288x128xf32>,
    return
  }
  func.func @transform_0(%arg0: i32) -> (i32, i32) {
    %c0_i32 = arith.constant 0 : i32
    %c0_i32_0 = arith.constant 0 : i32
    %c0_i32_1 = arith.constant 0 : i32
    return %c0_i32, %c0_i32_0 : i32, i32
  }
  func.func @transform_1(%arg0: i32) -> (i32, i32) {
    %c0_i32 = arith.constant 0 : i32
    %c0_i32_0 = arith.constant 0 : i32
    %c0_i32_1 = arith.constant 0 : i32
    return %c0_i32, %c0_i32_0 : i32, i32
  }
  func.func @transform_2(%arg0: i32) -> (i32, i32) {
    %c0_i32 = arith.constant 0 : i32
    %c0_i32_0 = arith.constant 0 : i32
    %c0_i32_1 = arith.constant 0 : i32
    return %c0_i32, %c0_i32_0 : i32, i32
  }
  func.func @transform_3(%arg0: i32) -> (i32, i32) {
    %c0_i32 = arith.constant 0 : i32
    %c0_i32_0 = arith.constant 0 : i32
    %c0_i32_1 = arith.constant 0 : i32
    return %c0_i32, %c0_i32_0 : i32, i32
  }
}

module attributes {stable_mosaic.version = 11 : i64} {
  func.func @_conv_relu_pool_kernel(%arg0: i32, %arg1: memref<128x3200xf32, #tpu.memory_space<vmem>>, %arg2: memref<3200x128xf32, #tpu.memory_space<vmem>>, %arg3: memref<1x128xf32, #tpu.memory_space<vmem>>, %arg4: memref<32x128xf32, #tpu.memory_space<vmem>>) attributes {dimension_semantics = [#tpu.dimension_semantics<arbitrary>], iteration_bounds = array<i64: 1>, scalar_prefetch = 0 : i64, scratch_operands = 0 : i64, tpu.core_type = #tpu.core_type<tc>, window_params = [{pipeline_mode = #tpu.pipeline_mode<synchronous>, transform_indices = @transform_0, window_bounds = array<i64: 128, 3200>}, {pipeline_mode = #tpu.pipeline_mode<synchronous>, transform_indices = @transform_1, window_bounds = array<i64: 3200, 128>}, {pipeline_mode = #tpu.pipeline_mode<synchronous>, transform_indices = @transform_2, window_bounds = array<i64: 1, 128>}, {pipeline_mode = #tpu.pipeline_mode<synchronous>, transform_indices = @transform_3, window_bounds = array<i64: 32, 128>}]} {
    %c0 = arith.constant 0 : index
    %c0_0 = arith.constant 0 : index
    %0 = vector.load %arg1[%c0, %c0_0] : memref<128x3200xf32, #tpu.memory_space<vmem>>, vector<128x3200xf32>
    %c0_1 = arith.constant 0 : index
    %c0_2 = arith.constant 0 : index
    %1 = vector.load %arg2[%c0_1, %c0_2] : memref<3200x128xf32, #tpu.memory_space<vmem>>, vector<3200x128xf32>
    %cst = arith.constant dense<0.000000e+00> : vector<128x128xf32>
    %2 = tpu.matmul %0, %1, %cst {dimension_numbers = #tpu.dot_dimension_numbers<[1], [0], [0], [1], [0, 0, 1, 1], [], []>} : vector<128x3200xf32>, vector<3200x128xf32>, vector<128x128xf32> -> vector<128x128xf32>
    %c0_3 = arith.constant 0 : index
    %c0_4 = arith.constant 0 : index
    %3 = vector.load %arg3[%c0_3, %c0_4] : memref<1x128xf32, #tpu.memory_space<vmem>>, vector<1x128xf32>
    %4 = vector.broadcast %3 : vector<1x128xf32> to vector<128x128xf32>
    %5 = arith.addf %2, %4 : vector<128x128xf32>
    %cst_5 = arith.constant 0.000000e+00 : f32
    %6 = vector.broadcast %cst_5 : f32 to vector<128x128xf32>
    %7 = arith.maximumf %5, %6 : vector<128x128xf32>
    %8 = vector.extract_strided_slice %7 {offsets = [0, 0], sizes = [32, 128], strides = [1, 1]} : vector<128x128xf32> to vector<32x128xf32>
    %9 = vector.extract_strided_slice %7 {offsets = [32, 0], sizes = [32, 128], strides = [1, 1]} : vector<128x128xf32> to vector<32x128xf32>
    %10 = arith.maximumf %8, %9 : vector<32x128xf32>
    %11 = vector.extract_strided_slice %7 {offsets = [64, 0], sizes = [32, 128], strides = [1, 1]} : vector<128x128xf32> to vector<32x128xf32>
    %12 = vector.extract_strided_slice %7 {offsets = [96, 0], sizes = [32, 128], strides = [1, 1]} : vector<128x128xf32> to vector<32x128xf32>
    %13 = arith.maximumf %11, %12 : vector<32x128xf32>
    %14 = arith.maximumf %10, %13 : vector<32x128xf32>
    %c0_6 = arith.constant 0 : index
    %c0_7 = arith.constant 0 : index
    %15 = vector.load %arg4[%c0_6, %c0_7] : memref<32x128xf32, #tpu.memory_space<vmem>>, vector<32x128xf32>
    tpu.vector_store %arg4[%c0_6, %c0_7], %14 {strides = array<i32>} : memref<32x128xf32, #tpu.memory_space<vmem>>, vector<32x128xf32>,
    return
  }
  func.func @transform_0(%arg0: i32) -> (i32, i32) {
    %c0_i32 = arith.constant 0 : i32
    %c0_i32_0 = arith.constant 0 : i32
    %c0_i32_1 = arith.constant 0 : i32
    return %c0_i32, %c0_i32_0 : i32, i32
  }
  func.func @transform_1(%arg0: i32) -> (i32, i32) {
    %c0_i32 = arith.constant 0 : i32
    %c0_i32_0 = arith.constant 0 : i32
    %c0_i32_1 = arith.constant 0 : i32
    return %c0_i32, %c0_i32_0 : i32, i32
  }
  func.func @transform_2(%arg0: i32) -> (i32, i32) {
    %c0_i32 = arith.constant 0 : i32
    %c0_i32_0 = arith.constant 0 : i32
    %c0_i32_1 = arith.constant 0 : i32
    return %c0_i32, %c0_i32_0 : i32, i32
  }
  func.func @transform_3(%arg0: i32) -> (i32, i32) {
    %c0_i32 = arith.constant 0 : i32
    %c0_i32_0 = arith.constant 0 : i32
    %c0_i32_1 = arith.constant 0 : i32
    return %c0_i32, %c0_i32_0 : i32, i32
  }
}

module attributes {stable_mosaic.version = 11 : i64} {
  func.func @_head_kernel(%arg0: i32, %arg1: memref<32x1152xf32, #tpu.memory_space<vmem>>, %arg2: memref<1152x128xf32, #tpu.memory_space<vmem>>, %arg3: memref<1x128xf32, #tpu.memory_space<vmem>>, %arg4: memref<512x512xf32, #tpu.memory_space<vmem>>, %arg5: memref<1x512xf32, #tpu.memory_space<vmem>>, %arg6: memref<512x128xf32, #tpu.memory_space<vmem>>, %arg7: memref<1x128xf32, #tpu.memory_space<vmem>>, %arg8: memref<2x128xf32, #tpu.memory_space<vmem>>, %arg9: memref<2x512xf32, #tpu.memory_space<vmem>>) attributes {dimension_semantics = [#tpu.dimension_semantics<arbitrary>], iteration_bounds = array<i64: 1>, scalar_prefetch = 0 : i64, scratch_operands = 0 : i64, tpu.core_type = #tpu.core_type<tc>, window_params = [{pipeline_mode = #tpu.pipeline_mode<synchronous>, transform_indices = @transform_0, window_bounds = array<i64: 32, 1152>}, {pipeline_mode = #tpu.pipeline_mode<synchronous>, transform_indices = @transform_1, window_bounds = array<i64: 1152, 128>}, {pipeline_mode = #tpu.pipeline_mode<synchronous>, transform_indices = @transform_2, window_bounds = array<i64: 1, 128>}, {pipeline_mode = #tpu.pipeline_mode<synchronous>, transform_indices = @transform_3, window_bounds = array<i64: 512, 512>}, {pipeline_mode = #tpu.pipeline_mode<synchronous>, transform_indices = @transform_4, window_bounds = array<i64: 1, 512>}, {pipeline_mode = #tpu.pipeline_mode<synchronous>, transform_indices = @transform_5, window_bounds = array<i64: 512, 128>}, {pipeline_mode = #tpu.pipeline_mode<synchronous>, transform_indices = @transform_6, window_bounds = array<i64: 1, 128>}, {pipeline_mode = #tpu.pipeline_mode<synchronous>, transform_indices = @transform_7, window_bounds = array<i64: 2, 128>}, {pipeline_mode = #tpu.pipeline_mode<synchronous>, transform_indices = @transform_8, window_bounds = array<i64: 2, 512>}]} {
    %c0 = arith.constant 0 : index
    %c0_0 = arith.constant 0 : index
    %0 = vector.load %arg1[%c0, %c0_0] : memref<32x1152xf32, #tpu.memory_space<vmem>>, vector<32x1152xf32>
    %c0_1 = arith.constant 0 : index
    %c0_2 = arith.constant 0 : index
    %1 = vector.load %arg2[%c0_1, %c0_2] : memref<1152x128xf32, #tpu.memory_space<vmem>>, vector<1152x128xf32>
    %cst = arith.constant dense<0.000000e+00> : vector<32x128xf32>
    %2 = tpu.matmul %0, %1, %cst {dimension_numbers = #tpu.dot_dimension_numbers<[1], [0], [0], [1], [0, 0, 1, 1], [], []>} : vector<32x1152xf32>, vector<1152x128xf32>, vector<32x128xf32> -> vector<32x128xf32>
    %c0_3 = arith.constant 0 : index
    %c0_4 = arith.constant 0 : index
    %3 = vector.load %arg3[%c0_3, %c0_4] : memref<1x128xf32, #tpu.memory_space<vmem>>, vector<1x128xf32>
    %4 = vector.broadcast %3 : vector<1x128xf32> to vector<32x128xf32>
    %5 = arith.addf %2, %4 : vector<32x128xf32>
    %cst_5 = arith.constant 0.000000e+00 : f32
    %6 = vector.broadcast %cst_5 : f32 to vector<32x128xf32>
    %7 = arith.maximumf %5, %6 : vector<32x128xf32>
    %8 = vector.extract_strided_slice %7 {offsets = [0, 0], sizes = [8, 128], strides = [1, 1]} : vector<32x128xf32> to vector<8x128xf32>
    %9 = vector.extract_strided_slice %7 {offsets = [8, 0], sizes = [8, 128], strides = [1, 1]} : vector<32x128xf32> to vector<8x128xf32>
    %10 = arith.maximumf %8, %9 : vector<8x128xf32>
    %11 = vector.extract_strided_slice %7 {offsets = [16, 0], sizes = [8, 128], strides = [1, 1]} : vector<32x128xf32> to vector<8x128xf32>
    %12 = vector.extract_strided_slice %7 {offsets = [24, 0], sizes = [8, 128], strides = [1, 1]} : vector<32x128xf32> to vector<8x128xf32>
    %13 = arith.maximumf %11, %12 : vector<8x128xf32>
    %14 = arith.maximumf %10, %13 : vector<8x128xf32>
    %15 = vector.extract_strided_slice %14 {offsets = [0, 0], sizes = [2, 128], strides = [1, 1]} : vector<8x128xf32> to vector<2x128xf32>
    %16 = vector.extract_strided_slice %14 {offsets = [2, 0], sizes = [2, 128], strides = [1, 1]} : vector<8x128xf32> to vector<2x128xf32>
    %17 = vector.extract_strided_slice %14 {offsets = [4, 0], sizes = [2, 128], strides = [1, 1]} : vector<8x128xf32> to vector<2x128xf32>
    %18 = vector.extract_strided_slice %14 {offsets = [6, 0], sizes = [2, 128], strides = [1, 1]} : vector<8x128xf32> to vector<2x128xf32>
    %19 = tpu.concatenate %15, %16, %17, %18 in 1 : vector<2x128xf32>, vector<2x128xf32>, vector<2x128xf32>, vector<2x128xf32> -> vector<2x512xf32>
    %c0_6 = arith.constant 0 : index
    %c0_7 = arith.constant 0 : index
    %20 = vector.load %arg4[%c0_6, %c0_7] : memref<512x512xf32, #tpu.memory_space<vmem>>, vector<512x512xf32>
    %cst_8 = arith.constant dense<0.000000e+00> : vector<2x512xf32>
    %21 = tpu.matmul %19, %20, %cst_8 {dimension_numbers = #tpu.dot_dimension_numbers<[1], [0], [0], [1], [0, 0, 1, 1], [], []>} : vector<2x512xf32>, vector<512x512xf32>, vector<2x512xf32> -> vector<2x512xf32>
    %c0_9 = arith.constant 0 : index
    %c0_10 = arith.constant 0 : index
    %22 = vector.load %arg5[%c0_9, %c0_10] : memref<1x512xf32, #tpu.memory_space<vmem>>, vector<1x512xf32>
    %23 = vector.broadcast %22 : vector<1x512xf32> to vector<2x512xf32>
    %24 = arith.addf %21, %23 : vector<2x512xf32>
    %cst_11 = arith.constant 0.000000e+00 : f32
    %25 = vector.broadcast %cst_11 : f32 to vector<2x512xf32>
    %26 = arith.maximumf %24, %25 : vector<2x512xf32>
    %c0_12 = arith.constant 0 : index
    %c0_13 = arith.constant 0 : index
    %27 = vector.load %arg6[%c0_12, %c0_13] : memref<512x128xf32, #tpu.memory_space<vmem>>, vector<512x128xf32>
    %cst_14 = arith.constant dense<0.000000e+00> : vector<2x128xf32>
    %28 = tpu.matmul %26, %27, %cst_14 {dimension_numbers = #tpu.dot_dimension_numbers<[1], [0], [0], [1], [0, 0, 1, 1], [], []>} : vector<2x512xf32>, vector<512x128xf32>, vector<2x128xf32> -> vector<2x128xf32>
    %c0_15 = arith.constant 0 : index
    %c0_16 = arith.constant 0 : index
    %29 = vector.load %arg7[%c0_15, %c0_16] : memref<1x128xf32, #tpu.memory_space<vmem>>, vector<1x128xf32>
    %30 = vector.broadcast %29 : vector<1x128xf32> to vector<2x128xf32>
    %31 = arith.addf %28, %30 : vector<2x128xf32>
    %c0_17 = arith.constant 0 : index
    %c0_18 = arith.constant 0 : index
    %32 = vector.load %arg9[%c0_17, %c0_18] : memref<2x512xf32, #tpu.memory_space<vmem>>, vector<2x512xf32>
    tpu.vector_store %arg9[%c0_17, %c0_18], %26 {strides = array<i32>} : memref<2x512xf32, #tpu.memory_space<vmem>>, vector<2x512xf32>,
    %c0_19 = arith.constant 0 : index
    %c0_20 = arith.constant 0 : index
    %33 = vector.load %arg8[%c0_19, %c0_20] : memref<2x128xf32, #tpu.memory_space<vmem>>, vector<2x128xf32>
    tpu.vector_store %arg8[%c0_19, %c0_20], %31 {strides = array<i32>} : memref<2x128xf32, #tpu.memory_space<vmem>>, vector<2x128xf32>,
    return
  }
  func.func @transform_0(%arg0: i32) -> (i32, i32) {
    %c0_i32 = arith.constant 0 : i32
    %c0_i32_0 = arith.constant 0 : i32
    %c0_i32_1 = arith.constant 0 : i32
    return %c0_i32, %c0_i32_0 : i32, i32
  }
  func.func @transform_1(%arg0: i32) -> (i32, i32) {
    %c0_i32 = arith.constant 0 : i32
    %c0_i32_0 = arith.constant 0 : i32
    %c0_i32_1 = arith.constant 0 : i32
    return %c0_i32, %c0_i32_0 : i32, i32
  }
  func.func @transform_2(%arg0: i32) -> (i32, i32) {
    %c0_i32 = arith.constant 0 : i32
    %c0_i32_0 = arith.constant 0 : i32
    %c0_i32_1 = arith.constant 0 : i32
    return %c0_i32, %c0_i32_0 : i32, i32
  }
  func.func @transform_3(%arg0: i32) -> (i32, i32) {
    %c0_i32 = arith.constant 0 : i32
    %c0_i32_0 = arith.constant 0 : i32
    %c0_i32_1 = arith.constant 0 : i32
    return %c0_i32, %c0_i32_0 : i32, i32
  }
  func.func @transform_4(%arg0: i32) -> (i32, i32) {
    %c0_i32 = arith.constant 0 : i32
    %c0_i32_0 = arith.constant 0 : i32
    %c0_i32_1 = arith.constant 0 : i32
    return %c0_i32, %c0_i32_0 : i32, i32
  }
  func.func @transform_5(%arg0: i32) -> (i32, i32) {
    %c0_i32 = arith.constant 0 : i32
    %c0_i32_0 = arith.constant 0 : i32
    %c0_i32_1 = arith.constant 0 : i32
    return %c0_i32, %c0_i32_0 : i32, i32
  }
  func.func @transform_6(%arg0: i32) -> (i32, i32) {
    %c0_i32 = arith.constant 0 : i32
    %c0_i32_0 = arith.constant 0 : i32
    %c0_i32_1 = arith.constant 0 : i32
    return %c0_i32, %c0_i32_0 : i32, i32
  }
  func.func @transform_7(%arg0: i32) -> (i32, i32) {
    %c0_i32 = arith.constant 0 : i32
    %c0_i32_0 = arith.constant 0 : i32
    %c0_i32_1 = arith.constant 0 : i32
    return %c0_i32, %c0_i32_0 : i32, i32
  }
  func.func @transform_8(%arg0: i32) -> (i32, i32) {
    %c0_i32 = arith.constant 0 : i32
    %c0_i32_0 = arith.constant 0 : i32
    %c0_i32_1 = arith.constant 0 : i32
    return %c0_i32, %c0_i32_0 : i32, i32
  }
}

</mosaic_0001>

<llo_original>
// kernel: medium_forward.3
$region0: #{medium_forward.3}
  #allocation0 [shape = 'u32[]', space=smem, size = 0x4, offset = 0x4, fixed_abs, tag = 'smem constant byte address 0x4 - core index']
  #allocation1 [shape = 'u32[144,128]{1,0:T(1,128)}', space=vmem, size = 0x12000, scoped, tag = 'internal scratch']
  %s0 = inlined_call_operand.vmem [shape: f32[1152,25], index: 0, kind: input, shape index: {}]
  %s1 = inlined_call_operand.vmem [shape: f32[25,128], index: 1, kind: input, shape index: {}]
  %s2 = inlined_call_operand.vmem [shape: f32[1,128], index: 2, kind: input, shape index: {}]
  %s3 = inlined_call_operand.vmem [shape: f32[288,128], index: 3, kind: output, shape index: {}]
  %s4 = sld [smem:[#allocation0]]
  $region22: #{medium_forward.3} parent=0
    _
  %s6 = ssub.s32 1, %s4
  %s7 = scalar_select 0, %s6, %s4
  // Predicated region
  $region2: #{medium_forward.3} parent=0 // pred_check
    _
  $region3: #{medium_forward.3} parent=0 // pred_check_branch
    %9 = sbr.rel (0) target = $region5
  $region4: #{medium_forward.3} parent=0 // pred_region
    _
  $region5: #{medium_forward.3} parent=0 // pred_fallthru
    _
  // Predicated region
  $region6: #{medium_forward.3} parent=0 // pred_check
    _
  $region7: #{medium_forward.3} parent=0 // pred_check_branch
    %11 = sbr.rel (0) target = $region9
  $region8: #{medium_forward.3} parent=0 // pred_region
    _
  $region9: #{medium_forward.3} parent=0 // pred_fallthru
    _
  // Predicated region
  $region10: #{medium_forward.3} parent=0 // pred_check
    _
  $region11: #{medium_forward.3} parent=0 // pred_check_branch
    %13 = sbr.rel (0) target = $region13
  $region12: #{medium_forward.3} parent=0 // pred_region
    _
  $region13: #{medium_forward.3} parent=0 // pred_fallthru
    _
  %v14 = vld [vmem:[%s0] sm:$0xff]
  %v15 = vld [vmem:[%s0 + $0x8] sm:$0xff]
  %v16 = vld [vmem:[%s0 + $0x10] sm:$0xff]
  %v17 = vld [vmem:[%s0 + $0x18] sm:$0xff]
  %v18 = vld [vmem:[%s0 + $0x20] sm:$0xff]
  %v19 = vld [vmem:[%s0 + $0x28] sm:$0xff]
  %v20 = vld [vmem:[%s0 + $0x30] sm:$0xff]
  %v21 = vld [vmem:[%s0 + $0x38] sm:$0xff]
  %v22 = vld [vmem:[%s0 + $0x40] sm:$0xff]
  %v23 = vld [vmem:[%s0 + $0x48] sm:$0xff]
  %v24 = vld [vmem:[%s0 + $0x50] sm:$0xff]
  %v25 = vld [vmem:[%s0 + $0x58] sm:$0xff]
  %v26 = vld [vmem:[%s0 + $0x60] sm:$0xff]
  %v27 = vld [vmem:[%s0 + $0x68] sm:$0xff]
  %v28 = vld [vmem:[%s0 + $0x70] sm:$0xff]
  %v29 = vld [vmem:[%s0 + $0x78] sm:$0xff]
  %v30 = vld [vmem:[%s0 + $0x80] sm:$0xff]
  %v31 = vld [vmem:[%s0 + $0x88] sm:$0xff]
  %v32 = vld [vmem:[%s0 + $0x90] sm:$0xff]
  %v33 = vld [vmem:[%s0 + $0x98] sm:$0xff]
  %v34 = vld [vmem:[%s0 + $0xa0] sm:$0xff]
  %v35 = vld [vmem:[%s0 + $0xa8] sm:$0xff]
  %v36 = vld [vmem:[%s0 + $0xb0] sm:$0xff]
  %v37 = vld [vmem:[%s0 + $0xb8] sm:$0xff]
  %v38 = vld [vmem:[%s0 + $0xc0] sm:$0xff]
  %v39 = vld [vmem:[%s0 + $0xc8] sm:$0xff]
  %v40 = vld [vmem:[%s0 + $0xd0] sm:$0xff]
  %v41 = vld [vmem:[%s0 + $0xd8] sm:$0xff]
  %v42 = vld [vmem:[%s0 + $0xe0] sm:$0xff]
  %v43 = vld [vmem:[%s0 + $0xe8] sm:$0xff]
  %v44 = vld [vmem:[%s0 + $0xf0] sm:$0xff]
  %v45 = vld [vmem:[%s0 + $0xf8] sm:$0xff]
  %v46 = vld [vmem:[%s0 + $0x100] sm:$0xff]
  %v47 = vld [vmem:[%s0 + $0x108] sm:$0xff]
  %v48 = vld [vmem:[%s0 + $0x110] sm:$0xff]
  %v49 = vld [vmem:[%s0 + $0x118] sm:$0xff]
  %v50 = vld [vmem:[%s0 + $0x120] sm:$0xff]
  %v51 = vld [vmem:[%s0 + $0x128] sm:$0xff]
  %v52 = vld [vmem:[%s0 + $0x130] sm:$0xff]
  %v53 = vld [vmem:[%s0 + $0x138] sm:$0xff]
  %v54 = vld [vmem:[%s0 + $0x140] sm:$0xff]
  %v55 = vld [vmem:[%s0 + $0x148] sm:$0xff]
  %v56 = vld [vmem:[%s0 + $0x150] sm:$0xff]
  %v57 = vld [vmem:[%s0 + $0x158] sm:$0xff]
  %v58 = vld [vmem:[%s0 + $0x160] sm:$0xff]
  %v59 = vld [vmem:[%s0 + $0x168] sm:$0xff]
  %v60 = vld [vmem:[%s0 + $0x170] sm:$0xff]
  %v61 = vld [vmem:[%s0 + $0x178] sm:$0xff]
  %v62 = vld [vmem:[%s0 + $0x180] sm:$0xff]
  %v63 = vld [vmem:[%s0 + $0x188] sm:$0xff]
  %v64 = vld [vmem:[%s0 + $0x190] sm:$0xff]
  %v65 = vld [vmem:[%s0 + $0x198] sm:$0xff]
  %v66 = vld [vmem:[%s0 + $0x1a0] sm:$0xff]
  %v67 = vld [vmem:[%s0 + $0x1a8] sm:$0xff]
  %v68 = vld [vmem:[%s0 + $0x1b0] sm:$0xff]
  %v69 = vld [vmem:[%s0 + $0x1b8] sm:$0xff]
  %v70 = vld [vmem:[%s0 + $0x1c0] sm:$0xff]
  %v71 = vld [vmem:[%s0 + $0x1c8] sm:$0xff]
  %v72 = vld [vmem:[%s0 + $0x1d0] sm:$0xff]
  %v73 = vld [vmem:[%s0 + $0x1d8] sm:$0xff]
  %v74 = vld [vmem:[%s0 + $0x1e0] sm:$0xff]
  %v75 = vld [vmem:[%s0 + $0x1e8] sm:$0xff]
  %v76 = vld [vmem:[%s0 + $0x1f0] sm:$0xff]
  %v77 = vld [vmem:[%s0 + $0x1f8] sm:$0xff]
  %v78 = vld [vmem:[%s0 + $0x200] sm:$0xff]
  %v79 = vld [vmem:[%s0 + $0x208] sm:$0xff]
  %v80 = vld [vmem:[%s0 + $0x210] sm:$0xff]
  %v81 = vld [vmem:[%s0 + $0x218] sm:$0xff]
  %v82 = vld [vmem:[%s0 + $0x220] sm:$0xff]
  %v83 = vld [vmem:[%s0 + $0x228] sm:$0xff]
  %v84 = vld [vmem:[%s0 + $0x230] sm:$0xff]
  %v85 = vld [vmem:[%s0 + $0x238] sm:$0xff]
  %v86 = vld [vmem:[%s0 + $0x240] sm:$0xff]
  %v87 = vld [vmem:[%s0 + $0x248] sm:$0xff]
  %v88 = vld [vmem:[%s0 + $0x250] sm:$0xff]
  %v89 = vld [vmem:[%s0 + $0x258] sm:$0xff]
  %v90 = vld [vmem:[%s0 + $0x260] sm:$0xff]
  %v91 = vld [vmem:[%s0 + $0x268] sm:$0xff]
  %v92 = vld [vmem:[%s0 + $0x270] sm:$0xff]
  %v93 = vld [vmem:[%s0 + $0x278] sm:$0xff]
  %v94 = vld [vmem:[%s0 + $0x280] sm:$0xff]
  %v95 = vld [vmem:[%s0 + $0x288] sm:$0xff]
  %v96 = vld [vmem:[%s0 + $0x290] sm:$0xff]
  %v97 = vld [vmem:[%s0 + $0x298] sm:$0xff]
  %v98 = vld [vmem:[%s0 + $0x2a0] sm:$0xff]
  %v99 = vld [vmem:[%s0 + $0x2a8] sm:$0xff]
  %v100 = vld [vmem:[%s0 + $0x2b0] sm:$0xff]
  %v101 = vld [vmem:[%s0 + $0x2b8] sm:$0xff]
  %v102 = vld [vmem:[%s0 + $0x2c0] sm:$0xff]
  %v103 = vld [vmem:[%s0 + $0x2c8] sm:$0xff]
  %v104 = vld [vmem:[%s0 + $0x2d0] sm:$0xff]
  %v105 = vld [vmem:[%s0 + $0x2d8] sm:$0xff]
  %v106 = vld [vmem:[%s0 + $0x2e0] sm:$0xff]
  %v107 = vld [vmem:[%s0 + $0x2e8] sm:$0xff]
  %v108 = vld [vmem:[%s0 + $0x2f0] sm:$0xff]
  %v109 = vld [vmem:[%s0 + $0x2f8] sm:$0xff]
  %v110 = vld [vmem:[%s0 + $0x300] sm:$0xff]
  %v111 = vld [vmem:[%s0 + $0x308] sm:$0xff]
  %v112 = vld [vmem:[%s0 + $0x310] sm:$0xff]
  %v113 = vld [vmem:[%s0 + $0x318] sm:$0xff]
  %v114 = vld [vmem:[%s0 + $0x320] sm:$0xff]
  %v115 = vld [vmem:[%s0 + $0x328] sm:$0xff]
  %v116 = vld [vmem:[%s0 + $0x330] sm:$0xff]
  %v117 = vld [vmem:[%s0 + $0x338] sm:$0xff]
  %v118 = vld [vmem:[%s0 + $0x340] sm:$0xff]
  %v119 = vld [vmem:[%s0 + $0x348] sm:$0xff]
  %v120 = vld [vmem:[%s0 + $0x350] sm:$0xff]
  %v121 = vld [vmem:[%s0 + $0x358] sm:$0xff]
  %v122 = vld [vmem:[%s0 + $0x360] sm:$0xff]
  %v123 = vld [vmem:[%s0 + $0x368] sm:$0xff]
  %v124 = vld [vmem:[%s0 + $0x370] sm:$0xff]
  %v125 = vld [vmem:[%s0 + $0x378] sm:$0xff]
  %v126 = vld [vmem:[%s0 + $0x380] sm:$0xff]
  %v127 = vld [vmem:[%s0 + $0x388] sm:$0xff]
  %v128 = vld [vmem:[%s0 + $0x390] sm:$0xff]
  %v129 = vld [vmem:[%s0 + $0x398] sm:$0xff]
  %v130 = vld [vmem:[%s0 + $0x3a0] sm:$0xff]
  %v131 = vld [vmem:[%s0 + $0x3a8] sm:$0xff]
  %v132 = vld [vmem:[%s0 + $0x3b0] sm:$0xff]
  %v133 = vld [vmem:[%s0 + $0x3b8] sm:$0xff]
  %v134 = vld [vmem:[%s0 + $0x3c0] sm:$0xff]
  %v135 = vld [vmem:[%s0 + $0x3c8] sm:$0xff]
  %v136 = vld [vmem:[%s0 + $0x3d0] sm:$0xff]
  %v137 = vld [vmem:[%s0 + $0x3d8] sm:$0xff]
  %v138 = vld [vmem:[%s0 + $0x3e0] sm:$0xff]
  %v139 = vld [vmem:[%s0 + $0x3e8] sm:$0xff]
  %v140 = vld [vmem:[%s0 + $0x3f0] sm:$0xff]
  %v141 = vld [vmem:[%s0 + $0x3f8] sm:$0xff]
  %v142 = vld [vmem:[%s0 + $0x400] sm:$0xff]
  %v143 = vld [vmem:[%s0 + $0x408] sm:$0xff]
  %v144 = vld [vmem:[%s0 + $0x410] sm:$0xff]
  %v145 = vld [vmem:[%s0 + $0x418] sm:$0xff]
  %v146 = vld [vmem:[%s0 + $0x420] sm:$0xff]
  %v147 = vld [vmem:[%s0 + $0x428] sm:$0xff]
  %v148 = vld [vmem:[%s0 + $0x430] sm:$0xff]
  %v149 = vld [vmem:[%s0 + $0x438] sm:$0xff]
  %v150 = vld [vmem:[%s0 + $0x440] sm:$0xff]
  %v151 = vld [vmem:[%s0 + $0x448] sm:$0xff]
  %v152 = vld [vmem:[%s0 + $0x450] sm:$0xff]
  %v153 = vld [vmem:[%s0 + $0x458] sm:$0xff]
  %v154 = vld [vmem:[%s0 + $0x460] sm:$0xff]
  %v155 = vld [vmem:[%s0 + $0x468] sm:$0xff]
  %v156 = vld [vmem:[%s0 + $0x470] sm:$0xff]
  %v157 = vld [vmem:[%s0 + $0x478] sm:$0xff]
  %v158 = vld [vmem:[%s1] sm:$0xff]
  %v159 = vld [vmem:[%s1 + $0x8] sm:$0xff]
  %v160 = vld [vmem:[%s1 + $0x10] sm:$0xff]
  %v161 = vld [vmem:[%s1 + $0x18] sm:$0x1]
  %v162 = vld [vmem:[%s2] sm:$0x1]
  %v164 = vlaneseq
  %v165 = vshrl.u32 %v164, 7
  %v166 = vsub.s32 0, %v165
  %v167 = vrot.slane %v162, %v166
  %vm169 = vcmask 203776
  %v171 = vsel %vm169, %v14, 0
  %v174 = vsel %vm169, %v15, 0
  %v177 = vsel %vm169, %v16, 0
  %v180 = vsel %vm169, %v17, 0
  %v183 = vsel %vm169, %v18, 0
  %v186 = vsel %vm169, %v19, 0
  %v189 = vsel %vm169, %v20, 0
  %v192 = vsel %vm169, %v21, 0
  %v195 = vsel %vm169, %v22, 0
  %v198 = vsel %vm169, %v23, 0
  %v201 = vsel %vm169, %v24, 0
  %v204 = vsel %vm169, %v25, 0
  %v207 = vsel %vm169, %v26, 0
  %v210 = vsel %vm169, %v27, 0
  %v213 = vsel %vm169, %v28, 0
  %v216 = vsel %vm169, %v29, 0
  %v219 = vsel %vm169, %v30, 0
  %v222 = vsel %vm169, %v31, 0
  %v225 = vsel %vm169, %v32, 0
  %v228 = vsel %vm169, %v33, 0
  %v231 = vsel %vm169, %v34, 0
  %v234 = vsel %vm169, %v35, 0
  %v237 = vsel %vm169, %v36, 0
  %v240 = vsel %vm169, %v37, 0
  %v243 = vsel %vm169, %v38, 0
  %v246 = vsel %vm169, %v39, 0
  %v249 = vsel %vm169, %v40, 0
  %v252 = vsel %vm169, %v41, 0
  %v255 = vsel %vm169, %v42, 0
  %v258 = vsel %vm169, %v43, 0
  %v261 = vsel %vm169, %v44, 0
  %v264 = vsel %vm169, %v45, 0
  %v267 = vsel %vm169, %v46, 0
  %v270 = vsel %vm169, %v47, 0
  %v273 = vsel %vm169, %v48, 0
  %v276 = vsel %vm169, %v49, 0
  %v279 = vsel %vm169, %v50, 0
  %v282 = vsel %vm169, %v51, 0
  %v285 = vsel %vm169, %v52, 0
  %v288 = vsel %vm169, %v53, 0
  %v291 = vsel %vm169, %v54, 0
  %v294 = vsel %vm169, %v55, 0
  %v297 = vsel %vm169, %v56, 0
  %v300 = vsel %vm169, %v57, 0
  %v303 = vsel %vm169, %v58, 0
  %v306 = vsel %vm169, %v59, 0
  %v309 = vsel %vm169, %v60, 0
  %v312 = vsel %vm169, %v61, 0
  %v315 = vsel %vm169, %v62, 0
  %v318 = vsel %vm169, %v63, 0
  %v321 = vsel %vm169, %v64, 0
  %v324 = vsel %vm169, %v65, 0
  %v327 = vsel %vm169, %v66, 0
  %v330 = vsel %vm169, %v67, 0
  %v333 = vsel %vm169, %v68, 0
  %v336 = vsel %vm169, %v69, 0
  %v339 = vsel %vm169, %v70, 0
  %v342 = vsel %vm169, %v71, 0
  %v345 = vsel %vm169, %v72, 0
  %v348 = vsel %vm169, %v73, 0
  %v351 = vsel %vm169, %v74, 0
  %v354 = vsel %vm169, %v75, 0
  %v357 = vsel %vm169, %v76, 0
  %v360 = vsel %vm169, %v77, 0
  %v363 = vsel %vm169, %v78, 0
  %v366 = vsel %vm169, %v79, 0
  %v369 = vsel %vm169, %v80, 0
  %v372 = vsel %vm169, %v81, 0
  %v375 = vsel %vm169, %v82, 0
  %v378 = vsel %vm169, %v83, 0
  %v381 = vsel %vm169, %v84, 0
  %v384 = vsel %vm169, %v85, 0
  %v387 = vsel %vm169, %v86, 0
  %v390 = vsel %vm169, %v87, 0
  %v393 = vsel %vm169, %v88, 0
  %v396 = vsel %vm169, %v89, 0
  %v399 = vsel %vm169, %v90, 0
  %v402 = vsel %vm169, %v91, 0
  %v405 = vsel %vm169, %v92, 0
  %v408 = vsel %vm169, %v93, 0
  %v411 = vsel %vm169, %v94, 0
  %v414 = vsel %vm169, %v95, 0
  %v417 = vsel %vm169, %v96, 0
  %v420 = vsel %vm169, %v97, 0
  %v423 = vsel %vm169, %v98, 0
  %v426 = vsel %vm169, %v99, 0
  %v429 = vsel %vm169, %v100, 0
  %v432 = vsel %vm169, %v101, 0
  %v435 = vsel %vm169, %v102, 0
  %v438 = vsel %vm169, %v103, 0
  %v441 = vsel %vm169, %v104, 0
  %v444 = vsel %vm169, %v105, 0
  %v447 = vsel %vm169, %v106, 0
  %v450 = vsel %vm169, %v107, 0
  %v453 = vsel %vm169, %v108, 0
  %v456 = vsel %vm169, %v109, 0
  %v459 = vsel %vm169, %v110, 0
  %v462 = vsel %vm169, %v111, 0
  %v465 = vsel %vm169, %v112, 0
  %v468 = vsel %vm169, %v113, 0
  %v471 = vsel %vm169, %v114, 0
  %v474 = vsel %vm169, %v115, 0
  %v477 = vsel %vm169, %v116, 0
  %v480 = vsel %vm169, %v117, 0
  %v483 = vsel %vm169, %v118, 0
  %v486 = vsel %vm169, %v119, 0
  %v489 = vsel %vm169, %v120, 0
  %v492 = vsel %vm169, %v121, 0
  %v495 = vsel %vm169, %v122, 0
  %v498 = vsel %vm169, %v123, 0
  %v501 = vsel %vm169, %v124, 0
  %v504 = vsel %vm169, %v125, 0
  %v507 = vsel %vm169, %v126, 0
  %v510 = vsel %vm169, %v127, 0
  %v513 = vsel %vm169, %v128, 0
  %v516 = vsel %vm169, %v129, 0
  %v519 = vsel %vm169, %v130, 0
  %v522 = vsel %vm169, %v131, 0
  %v525 = vsel %vm169, %v132, 0
  %v528 = vsel %vm169, %v133, 0
  %v531 = vsel %vm169, %v134, 0
  %v534 = vsel %vm169, %v135, 0
  %v537 = vsel %vm169, %v136, 0
  %v540 = vsel %vm169, %v137, 0
  %v543 = vsel %vm169, %v138, 0
  %v546 = vsel %vm169, %v139, 0
  %v549 = vsel %vm169, %v140, 0
  %v552 = vsel %vm169, %v141, 0
  %v555 = vsel %vm169, %v142, 0
  %v558 = vsel %vm169, %v143, 0
  %v561 = vsel %vm169, %v144, 0
  %v564 = vsel %vm169, %v145, 0
  %v567 = vsel %vm169, %v146, 0
  %v570 = vsel %vm169, %v147, 0
  %v573 = vsel %vm169, %v148, 0
  %v576 = vsel %vm169, %v149, 0
  %v579 = vsel %vm169, %v150, 0
  %v582 = vsel %vm169, %v151, 0
  %v585 = vsel %vm169, %v152, 0
  %v588 = vsel %vm169, %v153, 0
  %v591 = vsel %vm169, %v154, 0
  %v594 = vsel %vm169, %v155, 0
  %v597 = vsel %vm169, %v156, 0
  %v600 = vsel %vm169, %v157, 0
  %vm602 = vcmask 1040384
  %v604 = vsel %vm602, %v161, 0
  %606 = vmatprep.subr.mxu0 0.0
  %607 = vmatpush1.msra.mxu0 0.0
  %608 = vmatprep.subr.mxu0 0.0
  %609 = vmatpush1.msra.mxu0 0.0
  %610 = vmatprep.subr.mxu0 0.0
  %611 = vmatpush1.msra.mxu0 0.0
  %612 = vmatprep.subr.mxu0 0.0
  %613 = vmatpush1.msra.mxu0 0.0
  %614 = vmatprep.subr.mxu0 0.0
  %615 = vmatpush1.msra.mxu0 0.0
  %616 = vmatprep.subr.mxu0 0.0
  %617 = vmatpush1.msra.mxu0 0.0
  %618 = vmatprep.subr.mxu0 0.0
  %619 = vmatpush1.msra.mxu0 0.0
  %620 = vmatprep.subr.mxu0 0.0
  %621 = vmatpush1.msra.mxu0 0.0
  %622 = vmatprep.subr.mxu0 0.0
  %623 = vmatpush1.msra.mxu0 0.0
  %624 = vmatprep.subr.mxu0 0.0
  %625 = vmatpush1.msra.mxu0 0.0
  %626 = vmatprep.subr.mxu0 0.0
  %627 = vmatpush1.msra.mxu0 0.0
  %628 = vmatprep.subr.mxu0 0.0
  %629 = vmatpush1.msra.mxu0 0.0
  %630 = vmatprep.subr.mxu0 0.0
  %631 = vmatpush1.msra.mxu0 %v604
  %632 = vmatprep.subr.mxu0 0.0
  %633 = vmatpush1.msra.mxu0 %v160
  %634 = vmatprep.subr.mxu0 0.0
  %635 = vmatpush1.msra.mxu0 %v159
  %636 = vmatprep.subr.mxu0 0.0
  %637 = vmatpush1.msra.mxu0 %v158
  %638 = vmatprep.subr.mxu0 0.0
  %639 = vmatpush2.msra.mxu0 0.0
  %640 = vmatprep.subr.mxu0 0.0
  %641 = vmatpush2.msra.mxu0 0.0
  %642 = vmatprep.subr.mxu0 0.0
  %643 = vmatpush2.msra.mxu0 0.0
  %644 = vmatprep.subr.mxu0 0.0
  %645 = vmatpush2.msra.mxu0 0.0
  %646 = vmatprep.subr.mxu0 0.0
  %647 = vmatpush2.msra.mxu0 0.0
  %648 = vmatprep.subr.mxu0 0.0
  %649 = vmatpush2.msra.mxu0 0.0
  %650 = vmatprep.subr.mxu0 0.0
  %651 = vmatpush2.msra.mxu0 0.0
  %652 = vmatprep.subr.mxu0 0.0
  %653 = vmatpush2.msra.mxu0 0.0
  %654 = vmatprep.subr.mxu0 0.0
  %655 = vmatpush2.msra.mxu0 0.0
  %656 = vmatprep.subr.mxu0 0.0
  %657 = vmatpush2.msra.mxu0 0.0
  %658 = vmatprep.subr.mxu0 0.0
  %659 = vmatpush2.msra.mxu0 0.0
  %660 = vmatprep.subr.mxu0 0.0
  %661 = vmatpush2.msra.mxu0 0.0
  %662 = vmatprep.subr.mxu0 0.0
  %663 = vmatpush2.msra.mxu0 0.0
  %664 = vmatprep.subr.mxu0 0.0
  %665 = vmatpush2.msra.mxu0 0.0
  %666 = vmatprep.subr.mxu0 0.0
  %667 = vmatpush2.msra.mxu0 0.0
  %668 = vmatprep.subr.mxu0 0.0
  %669 = vmatpush2.msra.mxu0 0.0
  %670 = vmatprep.mubr.f32.mxu0 0.0
  %671 = vmatmul.mubr.f32.gmra.mxu0 %v171
  %v672 = vpop.f32.mrf.mxu0
  %v673 = vadd.f32 %v167, %v672
  %v674 = vpop.f32.mrf.mxu0
  %675 = vmatprep.mubr.f32.mxu0 0.0
  %676 = vmatmul.mubr.f32.gmra.mxu0 %v174
  %v677 = vpop.f32.mrf.mxu0
  %v678 = vadd.f32 %v167, %v677
  %v679 = vpop.f32.mrf.mxu0
  %680 = vmatprep.mubr.f32.mxu0 0.0
  %681 = vmatmul.mubr.f32.gmra.mxu0 %v177
  %v682 = vpop.f32.mrf.mxu0
  %v683 = vadd.f32 %v167, %v682
  %v684 = vpop.f32.mrf.mxu0
  %685 = vmatprep.mubr.f32.mxu0 0.0
  %686 = vmatmul.mubr.f32.gmra.mxu0 %v180
  %v687 = vpop.f32.mrf.mxu0
  %v688 = vadd.f32 %v167, %v687
  %v689 = vpop.f32.mrf.mxu0
  %690 = vmatprep.mubr.f32.mxu0 0.0
  %691 = vmatmul.mubr.f32.gmra.mxu0 %v183
  %v692 = vpop.f32.mrf.mxu0
  %v693 = vadd.f32 %v167, %v692
  %v694 = vpop.f32.mrf.mxu0
  %695 = vmatprep.mubr.f32.mxu0 0.0
  %696 = vmatmul.mubr.f32.gmra.mxu0 %v186
  %v697 = vpop.f32.mrf.mxu0
  %v698 = vadd.f32 %v167, %v697
  %v699 = vpop.f32.mrf.mxu0
  %700 = vmatprep.mubr.f32.mxu0 0.0
  %701 = vmatmul.mubr.f32.gmra.mxu0 %v189
  %v702 = vpop.f32.mrf.mxu0
  %v703 = vadd.f32 %v167, %v702
  %v704 = vpop.f32.mrf.mxu0
  %705 = vmatprep.mubr.f32.mxu0 0.0
  %706 = vmatmul.mubr.f32.gmra.mxu0 %v192
  %v707 = vpop.f32.mrf.mxu0
  %v708 = vadd.f32 %v167, %v707
  %v709 = vpop.f32.mrf.mxu0
  %710 = vmatprep.mubr.f32.mxu0 0.0
  %711 = vmatmul.mubr.f32.gmra.mxu0 %v195
  %v712 = vpop.f32.mrf.mxu0
  %v713 = vadd.f32 %v167, %v712
  %v714 = vpop.f32.mrf.mxu0
  %715 = vmatprep.mubr.f32.mxu0 0.0
  %716 = vmatmul.mubr.f32.gmra.mxu0 %v198
  %v717 = vpop.f32.mrf.mxu0
  %v718 = vadd.f32 %v167, %v717
  %v719 = vpop.f32.mrf.mxu0
  %720 = vmatprep.mubr.f32.mxu0 0.0
  %721 = vmatmul.mubr.f32.gmra.mxu0 %v201
  %v722 = vpop.f32.mrf.mxu0
  %v723 = vadd.f32 %v167, %v722
  %v724 = vpop.f32.mrf.mxu0
  %725 = vmatprep.mubr.f32.mxu0 0.0
  %726 = vmatmul.mubr.f32.gmra.mxu0 %v204
  %v727 = vpop.f32.mrf.mxu0
  %v728 = vadd.f32 %v167, %v727
  %v729 = vpop.f32.mrf.mxu0
  %730 = vmatprep.mubr.f32.mxu0 0.0
  %731 = vmatmul.mubr.f32.gmra.mxu0 %v207
  %v732 = vpop.f32.mrf.mxu0
  %v733 = vadd.f32 %v167, %v732
  %v734 = vpop.f32.mrf.mxu0
  %735 = vmatprep.mubr.f32.mxu0 0.0
  %736 = vmatmul.mubr.f32.gmra.mxu0 %v210
  %v737 = vpop.f32.mrf.mxu0
  %v738 = vadd.f32 %v167, %v737
  %v739 = vpop.f32.mrf.mxu0
  %740 = vmatprep.mubr.f32.mxu0 0.0
  %741 = vmatmul.mubr.f32.gmra.mxu0 %v213
  %v742 = vpop.f32.mrf.mxu0
  %v743 = vadd.f32 %v167, %v742
  %v744 = vpop.f32.mrf.mxu0
  %745 = vmatprep.mubr.f32.mxu0 0.0
  %746 = vmatmul.mubr.f32.gmra.mxu0 %v216
  %v747 = vpop.f32.mrf.mxu0
  %v748 = vadd.f32 %v167, %v747
  %v749 = vpop.f32.mrf.mxu0
  %750 = vmatprep.mubr.f32.mxu0 0.0
  %751 = vmatmul.mubr.f32.gmra.mxu0 %v219
  %v752 = vpop.f32.mrf.mxu0
  %v753 = vadd.f32 %v167, %v752
  %v754 = vpop.f32.mrf.mxu0
  %755 = vmatprep.mubr.f32.mxu0 0.0
  %756 = vmatmul.mubr.f32.gmra.mxu0 %v222
  %v757 = vpop.f32.mrf.mxu0
  %v758 = vadd.f32 %v167, %v757
  %v759 = vpop.f32.mrf.mxu0
  %760 = vmatprep.mubr.f32.mxu0 0.0
  %761 = vmatmul.mubr.f32.gmra.mxu0 %v225
  %v762 = vpop.f32.mrf.mxu0
  %v763 = vadd.f32 %v167, %v762
  %v764 = vpop.f32.mrf.mxu0
  %765 = vmatprep.mubr.f32.mxu0 0.0
  %766 = vmatmul.mubr.f32.gmra.mxu0 %v228
  %v767 = vpop.f32.mrf.mxu0
  %v768 = vadd.f32 %v167, %v767
  %v769 = vpop.f32.mrf.mxu0
  %770 = vmatprep.mubr.f32.mxu0 0.0
  %771 = vmatmul.mubr.f32.gmra.mxu0 %v231
  %v772 = vpop.f32.mrf.mxu0
  %v773 = vadd.f32 %v167, %v772
  %v774 = vpop.f32.mrf.mxu0
  %775 = vmatprep.mubr.f32.mxu0 0.0
  %776 = vmatmul.mubr.f32.gmra.mxu0 %v234
  %v777 = vpop.f32.mrf.mxu0
  %v778 = vadd.f32 %v167, %v777
  %v779 = vpop.f32.mrf.mxu0
  %780 = vmatprep.mubr.f32.mxu0 0.0
  %781 = vmatmul.mubr.f32.gmra.mxu0 %v237
  %v782 = vpop.f32.mrf.mxu0
  %v783 = vadd.f32 %v167, %v782
  %v784 = vpop.f32.mrf.mxu0
  %785 = vmatprep.mubr.f32.mxu0 0.0
  %786 = vmatmul.mubr.f32.gmra.mxu0 %v240
  %v787 = vpop.f32.mrf.mxu0
  %v788 = vadd.f32 %v167, %v787
  %v789 = vpop.f32.mrf.mxu0
  %790 = vmatprep.mubr.f32.mxu0 0.0
  %791 = vmatmul.mubr.f32.gmra.mxu0 %v243
  %v792 = vpop.f32.mrf.mxu0
  %v793 = vadd.f32 %v167, %v792
  %v794 = vpop.f32.mrf.mxu0
  %795 = vmatprep.mubr.f32.mxu0 0.0
  %796 = vmatmul.mubr.f32.gmra.mxu0 %v246
  %v797 = vpop.f32.mrf.mxu0
  %v798 = vadd.f32 %v167, %v797
  %v799 = vpop.f32.mrf.mxu0
  %800 = vmatprep.mubr.f32.mxu0 0.0
  %801 = vmatmul.mubr.f32.gmra.mxu0 %v249
  %v802 = vpop.f32.mrf.mxu0
  %v803 = vadd.f32 %v167, %v802
  %v804 = vpop.f32.mrf.mxu0
  %805 = vmatprep.mubr.f32.mxu0 0.0
  %806 = vmatmul.mubr.f32.gmra.mxu0 %v252
  %v807 = vpop.f32.mrf.mxu0
  %v808 = vadd.f32 %v167, %v807
  %v809 = vpop.f32.mrf.mxu0
  %810 = vmatprep.mubr.f32.mxu0 0.0
  %811 = vmatmul.mubr.f32.gmra.mxu0 %v255
  %v812 = vpop.f32.mrf.mxu0
  %v813 = vadd.f32 %v167, %v812
  %v814 = vpop.f32.mrf.mxu0
  %815 = vmatprep.mubr.f32.mxu0 0.0
  %816 = vmatmul.mubr.f32.gmra.mxu0 %v258
  %v817 = vpop.f32.mrf.mxu0
  %v818 = vadd.f32 %v167, %v817
  %v819 = vpop.f32.mrf.mxu0
  %820 = vmatprep.mubr.f32.mxu0 0.0
  %821 = vmatmul.mubr.f32.gmra.mxu0 %v261
  %v822 = vpop.f32.mrf.mxu0
  %v823 = vadd.f32 %v167, %v822
  %v824 = vpop.f32.mrf.mxu0
  %825 = vmatprep.mubr.f32.mxu0 0.0
  %826 = vmatmul.mubr.f32.gmra.mxu0 %v264
  %v827 = vpop.f32.mrf.mxu0
  %v828 = vadd.f32 %v167, %v827
  %v829 = vpop.f32.mrf.mxu0
  %830 = vmatprep.mubr.f32.mxu0 0.0
  %831 = vmatmul.mubr.f32.gmra.mxu0 %v267
  %v832 = vpop.f32.mrf.mxu0
  %v833 = vadd.f32 %v167, %v832
  %v834 = vpop.f32.mrf.mxu0
  %835 = vmatprep.mubr.f32.mxu0 0.0
  %836 = vmatmul.mubr.f32.gmra.mxu0 %v270
  %v837 = vpop.f32.mrf.mxu0
  %v838 = vadd.f32 %v167, %v837
  %v839 = vpop.f32.mrf.mxu0
  %840 = vmatprep.mubr.f32.mxu0 0.0
  %841 = vmatmul.mubr.f32.gmra.mxu0 %v273
  %v842 = vpop.f32.mrf.mxu0
  %v843 = vadd.f32 %v167, %v842
  %v844 = vpop.f32.mrf.mxu0
  %845 = vmatprep.mubr.f32.mxu0 0.0
  %846 = vmatmul.mubr.f32.gmra.mxu0 %v276
  %v847 = vpop.f32.mrf.mxu0
  %v848 = vadd.f32 %v167, %v847
  %v849 = vpop.f32.mrf.mxu0
  %850 = vmatprep.mubr.f32.mxu0 0.0
  %851 = vmatmul.mubr.f32.gmra.mxu0 %v279
  %v852 = vpop.f32.mrf.mxu0
  %v853 = vadd.f32 %v167, %v852
  %v854 = vpop.f32.mrf.mxu0
  %855 = vmatprep.mubr.f32.mxu0 0.0
  %856 = vmatmul.mubr.f32.gmra.mxu0 %v282
  %v857 = vpop.f32.mrf.mxu0
  %v858 = vadd.f32 %v167, %v857
  %v859 = vpop.f32.mrf.mxu0
  %860 = vmatprep.mubr.f32.mxu0 0.0
  %861 = vmatmul.mubr.f32.gmra.mxu0 %v285
  %v862 = vpop.f32.mrf.mxu0
  %v863 = vadd.f32 %v167, %v862
  %v864 = vpop.f32.mrf.mxu0
  %865 = vmatprep.mubr.f32.mxu0 0.0
  %866 = vmatmul.mubr.f32.gmra.mxu0 %v288
  %v867 = vpop.f32.mrf.mxu0
  %v868 = vadd.f32 %v167, %v867
  %v869 = vpop.f32.mrf.mxu0
  %870 = vmatprep.mubr.f32.mxu0 0.0
  %871 = vmatmul.mubr.f32.gmra.mxu0 %v291
  %v872 = vpop.f32.mrf.mxu0
  %v873 = vadd.f32 %v167, %v872
  %v874 = vpop.f32.mrf.mxu0
  %875 = vmatprep.mubr.f32.mxu0 0.0
  %876 = vmatmul.mubr.f32.gmra.mxu0 %v294
  %v877 = vpop.f32.mrf.mxu0
  %v878 = vadd.f32 %v167, %v877
  %v879 = vpop.f32.mrf.mxu0
  %880 = vmatprep.mubr.f32.mxu0 0.0
  %881 = vmatmul.mubr.f32.gmra.mxu0 %v297
  %v882 = vpop.f32.mrf.mxu0
  %v883 = vadd.f32 %v167, %v882
  %v884 = vpop.f32.mrf.mxu0
  %885 = vmatprep.mubr.f32.mxu0 0.0
  %886 = vmatmul.mubr.f32.gmra.mxu0 %v300
  %v887 = vpop.f32.mrf.mxu0
  %v888 = vadd.f32 %v167, %v887
  %v889 = vpop.f32.mrf.mxu0
  %890 = vmatprep.mubr.f32.mxu0 0.0
  %891 = vmatmul.mubr.f32.gmra.mxu0 %v303
  %v892 = vpop.f32.mrf.mxu0
  %v893 = vadd.f32 %v167, %v892
  %v894 = vpop.f32.mrf.mxu0
  %895 = vmatprep.mubr.f32.mxu0 0.0
  %896 = vmatmul.mubr.f32.gmra.mxu0 %v306
  %v897 = vpop.f32.mrf.mxu0
  %v898 = vadd.f32 %v167, %v897
  %v899 = vpop.f32.mrf.mxu0
  %900 = vmatprep.mubr.f32.mxu0 0.0
  %901 = vmatmul.mubr.f32.gmra.mxu0 %v309
  %v902 = vpop.f32.mrf.mxu0
  %v903 = vadd.f32 %v167, %v902
  %v904 = vpop.f32.mrf.mxu0
  %905 = vmatprep.mubr.f32.mxu0 0.0
  %906 = vmatmul.mubr.f32.gmra.mxu0 %v312
  %v907 = vpop.f32.mrf.mxu0
  %v908 = vadd.f32 %v167, %v907
  %v909 = vpop.f32.mrf.mxu0
  %910 = vmatprep.mubr.f32.mxu0 0.0
  %911 = vmatmul.mubr.f32.gmra.mxu0 %v315
  %v912 = vpop.f32.mrf.mxu0
  %v913 = vadd.f32 %v167, %v912
  %v914 = vpop.f32.mrf.mxu0
  %915 = vmatprep.mubr.f32.mxu0 0.0
  %916 = vmatmul.mubr.f32.gmra.mxu0 %v318
  %v917 = vpop.f32.mrf.mxu0
  %v918 = vadd.f32 %v167, %v917
  %v919 = vpop.f32.mrf.mxu0
  %920 = vmatprep.mubr.f32.mxu0 0.0
  %921 = vmatmul.mubr.f32.gmra.mxu0 %v321
  %v922 = vpop.f32.mrf.mxu0
  %v923 = vadd.f32 %v167, %v922
  %v924 = vpop.f32.mrf.mxu0
  %925 = vmatprep.mubr.f32.mxu0 0.0
  %926 = vmatmul.mubr.f32.gmra.mxu0 %v324
  %v927 = vpop.f32.mrf.mxu0
  %v928 = vadd.f32 %v167, %v927
  %v929 = vpop.f32.mrf.mxu0
  %930 = vmatprep.mubr.f32.mxu0 0.0
  %931 = vmatmul.mubr.f32.gmra.mxu0 %v327
  %v932 = vpop.f32.mrf.mxu0
  %v933 = vadd.f32 %v167, %v932
  %v934 = vpop.f32.mrf.mxu0
  %935 = vmatprep.mubr.f32.mxu0 0.0
  %936 = vmatmul.mubr.f32.gmra.mxu0 %v330
  %v937 = vpop.f32.mrf.mxu0
  %v938 = vadd.f32 %v167, %v937
  %v939 = vpop.f32.mrf.mxu0
  %940 = vmatprep.mubr.f32.mxu0 0.0
  %941 = vmatmul.mubr.f32.gmra.mxu0 %v333
  %v942 = vpop.f32.mrf.mxu0
  %v943 = vadd.f32 %v167, %v942
  %v944 = vpop.f32.mrf.mxu0
  %945 = vmatprep.mubr.f32.mxu0 0.0
  %946 = vmatmul.mubr.f32.gmra.mxu0 %v336
  %v947 = vpop.f32.mrf.mxu0
  %v948 = vadd.f32 %v167, %v947
  %v949 = vpop.f32.mrf.mxu0
  %950 = vmatprep.mubr.f32.mxu0 0.0
  %951 = vmatmul.mubr.f32.gmra.mxu0 %v339
  %v952 = vpop.f32.mrf.mxu0
  %v953 = vadd.f32 %v167, %v952
  %v954 = vpop.f32.mrf.mxu0
  %955 = vmatprep.mubr.f32.mxu0 0.0
  %956 = vmatmul.mubr.f32.gmra.mxu0 %v342
  %v957 = vpop.f32.mrf.mxu0
  %v958 = vadd.f32 %v167, %v957
  %v959 = vpop.f32.mrf.mxu0
  %960 = vmatprep.mubr.f32.mxu0 0.0
  %961 = vmatmul.mubr.f32.gmra.mxu0 %v345
  %v962 = vpop.f32.mrf.mxu0
  %v963 = vadd.f32 %v167, %v962
  %v964 = vpop.f32.mrf.mxu0
  %965 = vmatprep.mubr.f32.mxu0 0.0
  %966 = vmatmul.mubr.f32.gmra.mxu0 %v348
  %v967 = vpop.f32.mrf.mxu0
  %v968 = vadd.f32 %v167, %v967
  %v969 = vpop.f32.mrf.mxu0
  %970 = vmatprep.mubr.f32.mxu0 0.0
  %971 = vmatmul.mubr.f32.gmra.mxu0 %v351
  %v972 = vpop.f32.mrf.mxu0
  %v973 = vadd.f32 %v167, %v972
  %v974 = vpop.f32.mrf.mxu0
  %975 = vmatprep.mubr.f32.mxu0 0.0
  %976 = vmatmul.mubr.f32.gmra.mxu0 %v354
  %v977 = vpop.f32.mrf.mxu0
  %v978 = vadd.f32 %v167, %v977
  %v979 = vpop.f32.mrf.mxu0
  %980 = vmatprep.mubr.f32.mxu0 0.0
  %981 = vmatmul.mubr.f32.gmra.mxu0 %v357
  %v982 = vpop.f32.mrf.mxu0
  %v983 = vadd.f32 %v167, %v982
  %v984 = vpop.f32.mrf.mxu0
  %985 = vmatprep.mubr.f32.mxu0 0.0
  %986 = vmatmul.mubr.f32.gmra.mxu0 %v360
  %v987 = vpop.f32.mrf.mxu0
  %v988 = vadd.f32 %v167, %v987
  %v989 = vpop.f32.mrf.mxu0
  %990 = vmatprep.mubr.f32.mxu0 0.0
  %991 = vmatmul.mubr.f32.gmra.mxu0 %v363
  %v992 = vpop.f32.mrf.mxu0
  %v993 = vadd.f32 %v167, %v992
  %v994 = vpop.f32.mrf.mxu0
  %995 = vmatprep.mubr.f32.mxu0 0.0
  %996 = vmatmul.mubr.f32.gmra.mxu0 %v366
  %v997 = vpop.f32.mrf.mxu0
  %v998 = vadd.f32 %v167, %v997
  %v999 = vpop.f32.mrf.mxu0
  %1000 = vmatprep.mubr.f32.mxu0 0.0
  %1001 = vmatmul.mubr.f32.gmra.mxu0 %v369
  %v1002 = vpop.f32.mrf.mxu0
  %v1003 = vadd.f32 %v167, %v1002
  %v1004 = vpop.f32.mrf.mxu0
  %1005 = vmatprep.mubr.f32.mxu0 0.0
  %1006 = vmatmul.mubr.f32.gmra.mxu0 %v372
  %v1007 = vpop.f32.mrf.mxu0
  %v1008 = vadd.f32 %v167, %v1007
  %v1009 = vpop.f32.mrf.mxu0
  %1010 = vmatprep.mubr.f32.mxu0 0.0
  %1011 = vmatmul.mubr.f32.gmra.mxu0 %v375
  %v1012 = vpop.f32.mrf.mxu0
  %v1013 = vadd.f32 %v167, %v1012
  %v1014 = vpop.f32.mrf.mxu0
  %1015 = vmatprep.mubr.f32.mxu0 0.0
  %1016 = vmatmul.mubr.f32.gmra.mxu0 %v378
  %v1017 = vpop.f32.mrf.mxu0
  %v1018 = vadd.f32 %v167, %v1017
  %v1019 = vpop.f32.mrf.mxu0
  %1020 = vmatprep.mubr.f32.mxu0 0.0
  %1021 = vmatmul.mubr.f32.gmra.mxu0 %v381
  %v1022 = vpop.f32.mrf.mxu0
  %v1023 = vadd.f32 %v167, %v1022
  %v1024 = vpop.f32.mrf.mxu0
  %1025 = vmatprep.mubr.f32.mxu0 0.0
  %1026 = vmatmul.mubr.f32.gmra.mxu0 %v384
  %v1027 = vpop.f32.mrf.mxu0
  %v1028 = vadd.f32 %v167, %v1027
  %v1029 = vpop.f32.mrf.mxu0
  %1030 = vmatprep.mubr.f32.mxu0 0.0
  %1031 = vmatmul.mubr.f32.gmra.mxu0 %v387
  %v1032 = vpop.f32.mrf.mxu0
  %v1033 = vadd.f32 %v167, %v1032
  %v1034 = vpop.f32.mrf.mxu0
  %1035 = vmatprep.mubr.f32.mxu0 0.0
  %1036 = vmatmul.mubr.f32.gmra.mxu0 %v390
  %v1037 = vpop.f32.mrf.mxu0
  %v1038 = vadd.f32 %v167, %v1037
  %v1039 = vpop.f32.mrf.mxu0
  %1040 = vmatprep.mubr.f32.mxu0 0.0
  %1041 = vmatmul.mubr.f32.gmra.mxu0 %v393
  %v1042 = vpop.f32.mrf.mxu0
  %v1043 = vadd.f32 %v167, %v1042
  %v1044 = vpop.f32.mrf.mxu0
  %1045 = vmatprep.mubr.f32.mxu0 0.0
  %1046 = vmatmul.mubr.f32.gmra.mxu0 %v396
  %v1047 = vpop.f32.mrf.mxu0
  %v1048 = vadd.f32 %v167, %v1047
  %v1049 = vpop.f32.mrf.mxu0
  %1050 = vmatprep.mubr.f32.mxu0 0.0
  %1051 = vmatmul.mubr.f32.gmra.mxu0 %v399
  %v1052 = vpop.f32.mrf.mxu0
  %v1053 = vadd.f32 %v167, %v1052
  %v1054 = vpop.f32.mrf.mxu0
  %1055 = vmatprep.mubr.f32.mxu0 0.0
  %1056 = vmatmul.mubr.f32.gmra.mxu0 %v402
  %v1057 = vpop.f32.mrf.mxu0
  %v1058 = vadd.f32 %v167, %v1057
  %v1059 = vpop.f32.mrf.mxu0
  %1060 = vmatprep.mubr.f32.mxu0 0.0
  %1061 = vmatmul.mubr.f32.gmra.mxu0 %v405
  %v1062 = vpop.f32.mrf.mxu0
  %v1063 = vadd.f32 %v167, %v1062
  %v1064 = vpop.f32.mrf.mxu0
  %1065 = vmatprep.mubr.f32.mxu0 0.0
  %1066 = vmatmul.mubr.f32.gmra.mxu0 %v408
  %v1067 = vpop.f32.mrf.mxu0
  %v1068 = vadd.f32 %v167, %v1067
  %v1069 = vpop.f32.mrf.mxu0
  %1070 = vmatprep.mubr.f32.mxu0 0.0
  %1071 = vmatmul.mubr.f32.gmra.mxu0 %v411
  %v1072 = vpop.f32.mrf.mxu0
  %v1073 = vadd.f32 %v167, %v1072
  %v1074 = vpop.f32.mrf.mxu0
  %1075 = vmatprep.mubr.f32.mxu0 0.0
  %1076 = vmatmul.mubr.f32.gmra.mxu0 %v414
  %v1077 = vpop.f32.mrf.mxu0
  %v1078 = vadd.f32 %v167, %v1077
  %v1079 = vpop.f32.mrf.mxu0
  %1080 = vmatprep.mubr.f32.mxu0 0.0
  %1081 = vmatmul.mubr.f32.gmra.mxu0 %v417
  %v1082 = vpop.f32.mrf.mxu0
  %v1083 = vadd.f32 %v167, %v1082
  %v1084 = vpop.f32.mrf.mxu0
  %1085 = vmatprep.mubr.f32.mxu0 0.0
  %1086 = vmatmul.mubr.f32.gmra.mxu0 %v420
  %v1087 = vpop.f32.mrf.mxu0
  %v1088 = vadd.f32 %v167, %v1087
  %v1089 = vpop.f32.mrf.mxu0
  %1090 = vmatprep.mubr.f32.mxu0 0.0
  %1091 = vmatmul.mubr.f32.gmra.mxu0 %v423
  %v1092 = vpop.f32.mrf.mxu0
  %v1093 = vadd.f32 %v167, %v1092
  %v1094 = vpop.f32.mrf.mxu0
  %1095 = vmatprep.mubr.f32.mxu0 0.0
  %1096 = vmatmul.mubr.f32.gmra.mxu0 %v426
  %v1097 = vpop.f32.mrf.mxu0
  %v1098 = vadd.f32 %v167, %v1097
  %v1099 = vpop.f32.mrf.mxu0
  %1100 = vmatprep.mubr.f32.mxu0 0.0
  %1101 = vmatmul.mubr.f32.gmra.mxu0 %v429
  %v1102 = vpop.f32.mrf.mxu0
  %v1103 = vadd.f32 %v167, %v1102
  %v1104 = vpop.f32.mrf.mxu0
  %1105 = vmatprep.mubr.f32.mxu0 0.0
  %1106 = vmatmul.mubr.f32.gmra.mxu0 %v432
  %v1107 = vpop.f32.mrf.mxu0
  %v1108 = vadd.f32 %v167, %v1107
  %v1109 = vpop.f32.mrf.mxu0
  %1110 = vmatprep.mubr.f32.mxu0 0.0
  %1111 = vmatmul.mubr.f32.gmra.mxu0 %v435
  %v1112 = vpop.f32.mrf.mxu0
  %v1113 = vadd.f32 %v167, %v1112
  %v1114 = vpop.f32.mrf.mxu0
  %1115 = vmatprep.mubr.f32.mxu0 0.0
  %1116 = vmatmul.mubr.f32.gmra.mxu0 %v438
  %v1117 = vpop.f32.mrf.mxu0
  %v1118 = vadd.f32 %v167, %v1117
  %v1119 = vpop.f32.mrf.mxu0
  %1120 = vmatprep.mubr.f32.mxu0 0.0
  %1121 = vmatmul.mubr.f32.gmra.mxu0 %v441
  %v1122 = vpop.f32.mrf.mxu0
  %v1123 = vadd.f32 %v167, %v1122
  %v1124 = vpop.f32.mrf.mxu0
  %1125 = vmatprep.mubr.f32.mxu0 0.0
  %1126 = vmatmul.mubr.f32.gmra.mxu0 %v444
  %v1127 = vpop.f32.mrf.mxu0
  %v1128 = vadd.f32 %v167, %v1127
  %v1129 = vpop.f32.mrf.mxu0
  %1130 = vmatprep.mubr.f32.mxu0 0.0
  %1131 = vmatmul.mubr.f32.gmra.mxu0 %v447
  %v1132 = vpop.f32.mrf.mxu0
  %v1133 = vadd.f32 %v167, %v1132
  %v1134 = vpop.f32.mrf.mxu0
  %1135 = vmatprep.mubr.f32.mxu0 0.0
  %1136 = vmatmul.mubr.f32.gmra.mxu0 %v450
  %v1137 = vpop.f32.mrf.mxu0
  %v1138 = vadd.f32 %v167, %v1137
  %v1139 = vpop.f32.mrf.mxu0
  %1140 = vmatprep.mubr.f32.mxu0 0.0
  %1141 = vmatmul.mubr.f32.gmra.mxu0 %v453
  %v1142 = vpop.f32.mrf.mxu0
  %v1143 = vadd.f32 %v167, %v1142
  %v1144 = vpop.f32.mrf.mxu0
  %1145 = vmatprep.mubr.f32.mxu0 0.0
  %1146 = vmatmul.mubr.f32.gmra.mxu0 %v456
  %v1147 = vpop.f32.mrf.mxu0
  %v1148 = vadd.f32 %v167, %v1147
  %v1149 = vpop.f32.mrf.mxu0
  %1150 = vmatprep.mubr.f32.mxu0 0.0
  %1151 = vmatmul.mubr.f32.gmra.mxu0 %v459
  %v1152 = vpop.f32.mrf.mxu0
  %v1153 = vadd.f32 %v167, %v1152
  %v1154 = vpop.f32.mrf.mxu0
  %1155 = vmatprep.mubr.f32.mxu0 0.0
  %1156 = vmatmul.mubr.f32.gmra.mxu0 %v462
  %v1157 = vpop.f32.mrf.mxu0
  %v1158 = vadd.f32 %v167, %v1157
  %v1159 = vpop.f32.mrf.mxu0
  %1160 = vmatprep.mubr.f32.mxu0 0.0
  %1161 = vmatmul.mubr.f32.gmra.mxu0 %v465
  %v1162 = vpop.f32.mrf.mxu0
  %v1163 = vadd.f32 %v167, %v1162
  %v1164 = vpop.f32.mrf.mxu0
  %1165 = vmatprep.mubr.f32.mxu0 0.0
  %1166 = vmatmul.mubr.f32.gmra.mxu0 %v468
  %v1167 = vpop.f32.mrf.mxu0
  %v1168 = vadd.f32 %v167, %v1167
  %v1169 = vpop.f32.mrf.mxu0
  %1170 = vmatprep.mubr.f32.mxu0 0.0
  %1171 = vmatmul.mubr.f32.gmra.mxu0 %v471
  %v1172 = vpop.f32.mrf.mxu0
  %v1173 = vadd.f32 %v167, %v1172
  %v1174 = vpop.f32.mrf.mxu0
  %1175 = vmatprep.mubr.f32.mxu0 0.0
  %1176 = vmatmul.mubr.f32.gmra.mxu0 %v474
  %v1177 = vpop.f32.mrf.mxu0
  %v1178 = vadd.f32 %v167, %v1177
  %v1179 = vpop.f32.mrf.mxu0
  %1180 = vmatprep.mubr.f32.mxu0 0.0
  %1181 = vmatmul.mubr.f32.gmra.mxu0 %v477
  %v1182 = vpop.f32.mrf.mxu0
  %v1183 = vadd.f32 %v167, %v1182
  %v1184 = vpop.f32.mrf.mxu0
  %1185 = vmatprep.mubr.f32.mxu0 0.0
  %1186 = vmatmul.mubr.f32.gmra.mxu0 %v480
  %v1187 = vpop.f32.mrf.mxu0
  %v1188 = vadd.f32 %v167, %v1187
  %v1189 = vpop.f32.mrf.mxu0
  %1190 = vmatprep.mubr.f32.mxu0 0.0
  %1191 = vmatmul.mubr.f32.gmra.mxu0 %v483
  %v1192 = vpop.f32.mrf.mxu0
  %v1193 = vadd.f32 %v167, %v1192
  %v1194 = vpop.f32.mrf.mxu0
  %1195 = vmatprep.mubr.f32.mxu0 0.0
  %1196 = vmatmul.mubr.f32.gmra.mxu0 %v486
  %v1197 = vpop.f32.mrf.mxu0
  %v1198 = vadd.f32 %v167, %v1197
  %v1199 = vpop.f32.mrf.mxu0
  %1200 = vmatprep.mubr.f32.mxu0 0.0
  %1201 = vmatmul.mubr.f32.gmra.mxu0 %v489
  %v1202 = vpop.f32.mrf.mxu0
  %v1203 = vadd.f32 %v167, %v1202
  %v1204 = vpop.f32.mrf.mxu0
  %1205 = vmatprep.mubr.f32.mxu0 0.0
  %1206 = vmatmul.mubr.f32.gmra.mxu0 %v492
  %v1207 = vpop.f32.mrf.mxu0
  %v1208 = vadd.f32 %v167, %v1207
  %v1209 = vpop.f32.mrf.mxu0
  %1210 = vmatprep.mubr.f32.mxu0 0.0
  %1211 = vmatmul.mubr.f32.gmra.mxu0 %v495
  %v1212 = vpop.f32.mrf.mxu0
  %v1213 = vadd.f32 %v167, %v1212
  %v1214 = vpop.f32.mrf.mxu0
  %1215 = vmatprep.mubr.f32.mxu0 0.0
  %1216 = vmatmul.mubr.f32.gmra.mxu0 %v498
  %v1217 = vpop.f32.mrf.mxu0
  %v1218 = vadd.f32 %v167, %v1217
  %v1219 = vpop.f32.mrf.mxu0
  %1220 = vmatprep.mubr.f32.mxu0 0.0
  %1221 = vmatmul.mubr.f32.gmra.mxu0 %v501
  %v1222 = vpop.f32.mrf.mxu0
  %v1223 = vadd.f32 %v167, %v1222
  %v1224 = vpop.f32.mrf.mxu0
  %1225 = vmatprep.mubr.f32.mxu0 0.0
  %1226 = vmatmul.mubr.f32.gmra.mxu0 %v504
  %v1227 = vpop.f32.mrf.mxu0
  %v1228 = vadd.f32 %v167, %v1227
  %v1229 = vpop.f32.mrf.mxu0
  %1230 = vmatprep.mubr.f32.mxu0 0.0
  %1231 = vmatmul.mubr.f32.gmra.mxu0 %v507
  %v1232 = vpop.f32.mrf.mxu0
  %v1233 = vadd.f32 %v167, %v1232
  %v1234 = vpop.f32.mrf.mxu0
  %1235 = vmatprep.mubr.f32.mxu0 0.0
  %1236 = vmatmul.mubr.f32.gmra.mxu0 %v510
  %v1237 = vpop.f32.mrf.mxu0
  %v1238 = vadd.f32 %v167, %v1237
  %v1239 = vpop.f32.mrf.mxu0
  %1240 = vmatprep.mubr.f32.mxu0 0.0
  %1241 = vmatmul.mubr.f32.gmra.mxu0 %v513
  %v1242 = vpop.f32.mrf.mxu0
  %v1243 = vadd.f32 %v167, %v1242
  %v1244 = vpop.f32.mrf.mxu0
  %1245 = vmatprep.mubr.f32.mxu0 0.0
  %1246 = vmatmul.mubr.f32.gmra.mxu0 %v516
  %v1247 = vpop.f32.mrf.mxu0
  %v1248 = vadd.f32 %v167, %v1247
  %v1249 = vpop.f32.mrf.mxu0
  %1250 = vmatprep.mubr.f32.mxu0 0.0
  %1251 = vmatmul.mubr.f32.gmra.mxu0 %v519
  %v1252 = vpop.f32.mrf.mxu0
  %v1253 = vadd.f32 %v167, %v1252
  %v1254 = vpop.f32.mrf.mxu0
  %1255 = vmatprep.mubr.f32.mxu0 0.0
  %1256 = vmatmul.mubr.f32.gmra.mxu0 %v522
  %v1257 = vpop.f32.mrf.mxu0
  %v1258 = vadd.f32 %v167, %v1257
  %v1259 = vpop.f32.mrf.mxu0
  %1260 = vmatprep.mubr.f32.mxu0 0.0
  %1261 = vmatmul.mubr.f32.gmra.mxu0 %v525
  %v1262 = vpop.f32.mrf.mxu0
  %v1263 = vadd.f32 %v167, %v1262
  %v1264 = vpop.f32.mrf.mxu0
  %1265 = vmatprep.mubr.f32.mxu0 0.0
  %1266 = vmatmul.mubr.f32.gmra.mxu0 %v528
  %v1267 = vpop.f32.mrf.mxu0
  %v1268 = vadd.f32 %v167, %v1267
  %v1269 = vpop.f32.mrf.mxu0
  %1270 = vmatprep.mubr.f32.mxu0 0.0
  %1271 = vmatmul.mubr.f32.gmra.mxu0 %v531
  %v1272 = vpop.f32.mrf.mxu0
  %v1273 = vadd.f32 %v167, %v1272
  %v1274 = vpop.f32.mrf.mxu0
  %1275 = vmatprep.mubr.f32.mxu0 0.0
  %1276 = vmatmul.mubr.f32.gmra.mxu0 %v534
  %v1277 = vpop.f32.mrf.mxu0
  %v1278 = vadd.f32 %v167, %v1277
  %v1279 = vpop.f32.mrf.mxu0
  %1280 = vmatprep.mubr.f32.mxu0 0.0
  %1281 = vmatmul.mubr.f32.gmra.mxu0 %v537
  %v1282 = vpop.f32.mrf.mxu0
  %v1283 = vadd.f32 %v167, %v1282
  %v1284 = vpop.f32.mrf.mxu0
  %1285 = vmatprep.mubr.f32.mxu0 0.0
  %1286 = vmatmul.mubr.f32.gmra.mxu0 %v540
  %v1287 = vpop.f32.mrf.mxu0
  %v1288 = vadd.f32 %v167, %v1287
  %v1289 = vpop.f32.mrf.mxu0
  %1290 = vmatprep.mubr.f32.mxu0 0.0
  %1291 = vmatmul.mubr.f32.gmra.mxu0 %v543
  %v1292 = vpop.f32.mrf.mxu0
  %v1293 = vadd.f32 %v167, %v1292
  %v1294 = vpop.f32.mrf.mxu0
  %1295 = vmatprep.mubr.f32.mxu0 0.0
  %1296 = vmatmul.mubr.f32.gmra.mxu0 %v546
  %v1297 = vpop.f32.mrf.mxu0
  %v1298 = vadd.f32 %v167, %v1297
  %v1299 = vpop.f32.mrf.mxu0
  %1300 = vmatprep.mubr.f32.mxu0 0.0
  %1301 = vmatmul.mubr.f32.gmra.mxu0 %v549
  %v1302 = vpop.f32.mrf.mxu0
  %v1303 = vadd.f32 %v167, %v1302
  %v1304 = vpop.f32.mrf.mxu0
  %1305 = vmatprep.mubr.f32.mxu0 0.0
  %1306 = vmatmul.mubr.f32.gmra.mxu0 %v552
  %v1307 = vpop.f32.mrf.mxu0
  %v1308 = vadd.f32 %v167, %v1307
  %v1309 = vpop.f32.mrf.mxu0
  %1310 = vmatprep.mubr.f32.mxu0 0.0
  %1311 = vmatmul.mubr.f32.gmra.mxu0 %v555
  %v1312 = vpop.f32.mrf.mxu0
  %v1313 = vadd.f32 %v167, %v1312
  %v1314 = vpop.f32.mrf.mxu0
  %1315 = vmatprep.mubr.f32.mxu0 0.0
  %1316 = vmatmul.mubr.f32.gmra.mxu0 %v558
  %v1317 = vpop.f32.mrf.mxu0
  %v1318 = vadd.f32 %v167, %v1317
  %v1319 = vpop.f32.mrf.mxu0
  %1320 = vmatprep.mubr.f32.mxu0 0.0
  %1321 = vmatmul.mubr.f32.gmra.mxu0 %v561
  %v1322 = vpop.f32.mrf.mxu0
  %v1323 = vadd.f32 %v167, %v1322
  %v1324 = vpop.f32.mrf.mxu0
  %1325 = vmatprep.mubr.f32.mxu0 0.0
  %1326 = vmatmul.mubr.f32.gmra.mxu0 %v564
  %v1327 = vpop.f32.mrf.mxu0
  %v1328 = vadd.f32 %v167, %v1327
  %v1329 = vpop.f32.mrf.mxu0
  %1330 = vmatprep.mubr.f32.mxu0 0.0
  %1331 = vmatmul.mubr.f32.gmra.mxu0 %v567
  %v1332 = vpop.f32.mrf.mxu0
  %v1333 = vadd.f32 %v167, %v1332
  %v1334 = vpop.f32.mrf.mxu0
  %1335 = vmatprep.mubr.f32.mxu0 0.0
  %1336 = vmatmul.mubr.f32.gmra.mxu0 %v570
  %v1337 = vpop.f32.mrf.mxu0
  %v1338 = vadd.f32 %v167, %v1337
  %v1339 = vpop.f32.mrf.mxu0
  %1340 = vmatprep.mubr.f32.mxu0 0.0
  %1341 = vmatmul.mubr.f32.gmra.mxu0 %v573
  %v1342 = vpop.f32.mrf.mxu0
  %v1343 = vadd.f32 %v167, %v1342
  %v1344 = vpop.f32.mrf.mxu0
  %1345 = vmatprep.mubr.f32.mxu0 0.0
  %1346 = vmatmul.mubr.f32.gmra.mxu0 %v576
  %v1347 = vpop.f32.mrf.mxu0
  %v1348 = vadd.f32 %v167, %v1347
  %v1349 = vpop.f32.mrf.mxu0
  %1350 = vmatprep.mubr.f32.mxu0 0.0
  %1351 = vmatmul.mubr.f32.gmra.mxu0 %v579
  %v1352 = vpop.f32.mrf.mxu0
  %v1353 = vadd.f32 %v167, %v1352
  %v1354 = vpop.f32.mrf.mxu0
  %1355 = vmatprep.mubr.f32.mxu0 0.0
  %1356 = vmatmul.mubr.f32.gmra.mxu0 %v582
  %v1357 = vpop.f32.mrf.mxu0
  %v1358 = vadd.f32 %v167, %v1357
  %v1359 = vpop.f32.mrf.mxu0
  %1360 = vmatprep.mubr.f32.mxu0 0.0
  %1361 = vmatmul.mubr.f32.gmra.mxu0 %v585
  %v1362 = vpop.f32.mrf.mxu0
  %v1363 = vadd.f32 %v167, %v1362
  %v1364 = vpop.f32.mrf.mxu0
  %1365 = vmatprep.mubr.f32.mxu0 0.0
  %1366 = vmatmul.mubr.f32.gmra.mxu0 %v588
  %v1367 = vpop.f32.mrf.mxu0
  %v1368 = vadd.f32 %v167, %v1367
  %v1369 = vpop.f32.mrf.mxu0
  %1370 = vmatprep.mubr.f32.mxu0 0.0
  %1371 = vmatmul.mubr.f32.gmra.mxu0 %v591
  %v1372 = vpop.f32.mrf.mxu0
  %v1373 = vadd.f32 %v167, %v1372
  %v1374 = vpop.f32.mrf.mxu0
  %1375 = vmatprep.mubr.f32.mxu0 0.0
  %1376 = vmatmul.mubr.f32.gmra.mxu0 %v594
  %v1377 = vpop.f32.mrf.mxu0
  %v1378 = vadd.f32 %v167, %v1377
  %v1379 = vpop.f32.mrf.mxu0
  %1380 = vmatprep.mubr.f32.mxu0 0.0
  %1381 = vmatmul.mubr.f32.gmra.mxu0 %v597
  %v1382 = vpop.f32.mrf.mxu0
  %v1383 = vadd.f32 %v167, %v1382
  %v1384 = vpop.f32.mrf.mxu0
  %1385 = vmatprep.mubr.f32.mxu0 0.0
  %1386 = vmatmul.mubr.f32.gmra.mxu0 %v600
  %v1387 = vpop.f32.mrf.mxu0
  %v1388 = vadd.f32 %v167, %v1387
  %v1389 = vpop.f32.mrf.mxu0
  %1390 = vdwg.mxu0
  %v1391 = vmax.f32 %v673, 0.0
  %v1392 = vmax.f32 %v678, 0.0
  %v1393 = vmax.f32 %v683, 0.0
  %v1394 = vmax.f32 %v688, 0.0
  %v1395 = vmax.f32 %v693, 0.0
  %v1396 = vmax.f32 %v698, 0.0
  %v1397 = vmax.f32 %v703, 0.0
  %v1398 = vmax.f32 %v708, 0.0
  %v1399 = vmax.f32 %v713, 0.0
  %v1400 = vmax.f32 %v718, 0.0
  %v1401 = vmax.f32 %v723, 0.0
  %v1402 = vmax.f32 %v728, 0.0
  %v1403 = vmax.f32 %v733, 0.0
  %v1404 = vmax.f32 %v738, 0.0
  %v1405 = vmax.f32 %v743, 0.0
  %v1406 = vmax.f32 %v748, 0.0
  %v1407 = vmax.f32 %v753, 0.0
  %v1408 = vmax.f32 %v758, 0.0
  %v1409 = vmax.f32 %v763, 0.0
  %v1410 = vmax.f32 %v768, 0.0
  %v1411 = vmax.f32 %v773, 0.0
  %v1412 = vmax.f32 %v778, 0.0
  %v1413 = vmax.f32 %v783, 0.0
  %v1414 = vmax.f32 %v788, 0.0
  %v1415 = vmax.f32 %v793, 0.0
  %v1416 = vmax.f32 %v798, 0.0
  %v1417 = vmax.f32 %v803, 0.0
  %v1418 = vmax.f32 %v808, 0.0
  %v1419 = vmax.f32 %v813, 0.0
  %v1420 = vmax.f32 %v818, 0.0
  %v1421 = vmax.f32 %v823, 0.0
  %v1422 = vmax.f32 %v828, 0.0
  %v1423 = vmax.f32 %v833, 0.0
  %v1424 = vmax.f32 %v838, 0.0
  %v1425 = vmax.f32 %v843, 0.0
  %v1426 = vmax.f32 %v848, 0.0
  %v1427 = vmax.f32 %v853, 0.0
  %v1428 = vmax.f32 %v858, 0.0
  %v1429 = vmax.f32 %v863, 0.0
  %v1430 = vmax.f32 %v868, 0.0
  %v1431 = vmax.f32 %v873, 0.0
  %v1432 = vmax.f32 %v878, 0.0
  %v1433 = vmax.f32 %v883, 0.0
  %v1434 = vmax.f32 %v888, 0.0
  %v1435 = vmax.f32 %v893, 0.0
  %v1436 = vmax.f32 %v898, 0.0
  %v1437 = vmax.f32 %v903, 0.0
  %v1438 = vmax.f32 %v908, 0.0
  %v1439 = vmax.f32 %v913, 0.0
  %v1440 = vmax.f32 %v918, 0.0
  %v1441 = vmax.f32 %v923, 0.0
  %v1442 = vmax.f32 %v928, 0.0
  %v1443 = vmax.f32 %v933, 0.0
  %v1444 = vmax.f32 %v938, 0.0
  %v1445 = vmax.f32 %v943, 0.0
  %v1446 = vmax.f32 %v948, 0.0
  %v1447 = vmax.f32 %v953, 0.0
  %v1448 = vmax.f32 %v958, 0.0
  %v1449 = vmax.f32 %v963, 0.0
  %v1450 = vmax.f32 %v968, 0.0
  %v1451 = vmax.f32 %v973, 0.0
  %v1452 = vmax.f32 %v978, 0.0
  %v1453 = vmax.f32 %v983, 0.0
  %v1454 = vmax.f32 %v988, 0.0
  %v1455 = vmax.f32 %v993, 0.0
  %v1456 = vmax.f32 %v998, 0.0
  %v1457 = vmax.f32 %v1003, 0.0
  %v1458 = vmax.f32 %v1008, 0.0
  %v1459 = vmax.f32 %v1013, 0.0
  %v1460 = vmax.f32 %v1018, 0.0
  %v1461 = vmax.f32 %v1023, 0.0
  %v1462 = vmax.f32 %v1028, 0.0
  %v1463 = vmax.f32 %v1033, 0.0
  %v1464 = vmax.f32 %v1038, 0.0
  %v1465 = vmax.f32 %v1043, 0.0
  %v1466 = vmax.f32 %v1048, 0.0
  %v1467 = vmax.f32 %v1053, 0.0
  %v1468 = vmax.f32 %v1058, 0.0
  %v1469 = vmax.f32 %v1063, 0.0
  %v1470 = vmax.f32 %v1068, 0.0
  %v1471 = vmax.f32 %v1073, 0.0
  %v1472 = vmax.f32 %v1078, 0.0
  %v1473 = vmax.f32 %v1083, 0.0
  %v1474 = vmax.f32 %v1088, 0.0
  %v1475 = vmax.f32 %v1093, 0.0
  %v1476 = vmax.f32 %v1098, 0.0
  %v1477 = vmax.f32 %v1103, 0.0
  %v1478 = vmax.f32 %v1108, 0.0
  %v1479 = vmax.f32 %v1113, 0.0
  %v1480 = vmax.f32 %v1118, 0.0
  %v1481 = vmax.f32 %v1123, 0.0
  %v1482 = vmax.f32 %v1128, 0.0
  %v1483 = vmax.f32 %v1133, 0.0
  %v1484 = vmax.f32 %v1138, 0.0
  %v1485 = vmax.f32 %v1143, 0.0
  %v1486 = vmax.f32 %v1148, 0.0
  %v1487 = vmax.f32 %v1153, 0.0
  %v1488 = vmax.f32 %v1158, 0.0
  %v1489 = vmax.f32 %v1163, 0.0
  %v1490 = vmax.f32 %v1168, 0.0
  %v1491 = vmax.f32 %v1173, 0.0
  %v1492 = vmax.f32 %v1178, 0.0
  %v1493 = vmax.f32 %v1183, 0.0
  %v1494 = vmax.f32 %v1188, 0.0
  %v1495 = vmax.f32 %v1193, 0.0
  %v1496 = vmax.f32 %v1198, 0.0
  %v1497 = vmax.f32 %v1203, 0.0
  %v1498 = vmax.f32 %v1208, 0.0
  %v1499 = vmax.f32 %v1213, 0.0
  %v1500 = vmax.f32 %v1218, 0.0
  %v1501 = vmax.f32 %v1223, 0.0
  %v1502 = vmax.f32 %v1228, 0.0
  %v1503 = vmax.f32 %v1233, 0.0
  %v1504 = vmax.f32 %v1238, 0.0
  %v1505 = vmax.f32 %v1243, 0.0
  %v1506 = vmax.f32 %v1248, 0.0
  %v1507 = vmax.f32 %v1253, 0.0
  %v1508 = vmax.f32 %v1258, 0.0
  %v1509 = vmax.f32 %v1263, 0.0
  %v1510 = vmax.f32 %v1268, 0.0
  %v1511 = vmax.f32 %v1273, 0.0
  %v1512 = vmax.f32 %v1278, 0.0
  %v1513 = vmax.f32 %v1283, 0.0
  %v1514 = vmax.f32 %v1288, 0.0
  %v1515 = vmax.f32 %v1293, 0.0
  %v1516 = vmax.f32 %v1298, 0.0
  %v1517 = vmax.f32 %v1303, 0.0
  %v1518 = vmax.f32 %v1308, 0.0
  %v1519 = vmax.f32 %v1313, 0.0
  %v1520 = vmax.f32 %v1318, 0.0
  %v1521 = vmax.f32 %v1323, 0.0
  %v1522 = vmax.f32 %v1328, 0.0
  %v1523 = vmax.f32 %v1333, 0.0
  %v1524 = vmax.f32 %v1338, 0.0
  %v1525 = vmax.f32 %v1343, 0.0
  %v1526 = vmax.f32 %v1348, 0.0
  %v1527 = vmax.f32 %v1353, 0.0
  %v1528 = vmax.f32 %v1358, 0.0
  %v1529 = vmax.f32 %v1363, 0.0
  %v1530 = vmax.f32 %v1368, 0.0
  %v1531 = vmax.f32 %v1373, 0.0
  %v1532 = vmax.f32 %v1378, 0.0
  %v1533 = vmax.f32 %v1383, 0.0
  %v1534 = vmax.f32 %v1388, 0.0
  %v1535 = vmax.f32 %v1391, %v1427
  %v1536 = vmax.f32 %v1392, %v1428
  %v1537 = vmax.f32 %v1393, %v1429
  %v1538 = vmax.f32 %v1394, %v1430
  %v1539 = vmax.f32 %v1395, %v1431
  %v1540 = vmax.f32 %v1396, %v1432
  %v1541 = vmax.f32 %v1397, %v1433
  %v1542 = vmax.f32 %v1398, %v1434
  %v1543 = vmax.f32 %v1399, %v1435
  %v1544 = vmax.f32 %v1400, %v1436
  %v1545 = vmax.f32 %v1401, %v1437
  %v1546 = vmax.f32 %v1402, %v1438
  %v1547 = vmax.f32 %v1403, %v1439
  %v1548 = vmax.f32 %v1404, %v1440
  %v1549 = vmax.f32 %v1405, %v1441
  %v1550 = vmax.f32 %v1406, %v1442
  %v1551 = vmax.f32 %v1407, %v1443
  %v1552 = vmax.f32 %v1408, %v1444
  %v1553 = vmax.f32 %v1409, %v1445
  %v1554 = vmax.f32 %v1410, %v1446
  %v1555 = vmax.f32 %v1411, %v1447
  %v1556 = vmax.f32 %v1412, %v1448
  %v1557 = vmax.f32 %v1413, %v1449
  %v1558 = vmax.f32 %v1414, %v1450
  %v1559 = vmax.f32 %v1415, %v1451
  %v1560 = vmax.f32 %v1416, %v1452
  %v1561 = vmax.f32 %v1417, %v1453
  %v1562 = vmax.f32 %v1418, %v1454
  %v1563 = vmax.f32 %v1419, %v1455
  %v1564 = vmax.f32 %v1420, %v1456
  %v1565 = vmax.f32 %v1421, %v1457
  %v1566 = vmax.f32 %v1422, %v1458
  %v1567 = vmax.f32 %v1423, %v1459
  %v1568 = vmax.f32 %v1424, %v1460
  %v1569 = vmax.f32 %v1425, %v1461
  %v1570 = vmax.f32 %v1426, %v1462
  %v1571 = vmax.f32 %v1463, %v1499
  %v1572 = vmax.f32 %v1464, %v1500
  %v1573 = vmax.f32 %v1465, %v1501
  %v1574 = vmax.f32 %v1466, %v1502
  %v1575 = vmax.f32 %v1467, %v1503
  %v1576 = vmax.f32 %v1468, %v1504
  %v1577 = vmax.f32 %v1469, %v1505
  %v1578 = vmax.f32 %v1470, %v1506
  %v1579 = vmax.f32 %v1471, %v1507
  %v1580 = vmax.f32 %v1472, %v1508
  %v1581 = vmax.f32 %v1473, %v1509
  %v1582 = vmax.f32 %v1474, %v1510
  %v1583 = vmax.f32 %v1475, %v1511
  %v1584 = vmax.f32 %v1476, %v1512
  %v1585 = vmax.f32 %v1477, %v1513
  %v1586 = vmax.f32 %v1478, %v1514
  %v1587 = vmax.f32 %v1479, %v1515
  %v1588 = vmax.f32 %v1480, %v1516
  %v1589 = vmax.f32 %v1481, %v1517
  %v1590 = vmax.f32 %v1482, %v1518
  %v1591 = vmax.f32 %v1483, %v1519
  %v1592 = vmax.f32 %v1484, %v1520
  %v1593 = vmax.f32 %v1485, %v1521
  %v1594 = vmax.f32 %v1486, %v1522
  %v1595 = vmax.f32 %v1487, %v1523
  %v1596 = vmax.f32 %v1488, %v1524
  %v1597 = vmax.f32 %v1489, %v1525
  %v1598 = vmax.f32 %v1490, %v1526
  %v1599 = vmax.f32 %v1491, %v1527
  %v1600 = vmax.f32 %v1492, %v1528
  %v1601 = vmax.f32 %v1493, %v1529
  %v1602 = vmax.f32 %v1494, %v1530
  %v1603 = vmax.f32 %v1495, %v1531
  %v1604 = vmax.f32 %v1496, %v1532
  %v1605 = vmax.f32 %v1497, %v1533
  %v1606 = vmax.f32 %v1498, %v1534
  %v1607 = vmax.f32 %v1535, %v1571
  %v1608 = vmax.f32 %v1536, %v1572
  %v1609 = vmax.f32 %v1537, %v1573
  %v1610 = vmax.f32 %v1538, %v1574
  %v1611 = vmax.f32 %v1539, %v1575
  %v1612 = vmax.f32 %v1540, %v1576
  %v1613 = vmax.f32 %v1541, %v1577
  %v1614 = vmax.f32 %v1542, %v1578
  %v1615 = vmax.f32 %v1543, %v1579
  %v1616 = vmax.f32 %v1544, %v1580
  %v1617 = vmax.f32 %v1545, %v1581
  %v1618 = vmax.f32 %v1546, %v1582
  %v1619 = vmax.f32 %v1547, %v1583
  %v1620 = vmax.f32 %v1548, %v1584
  %v1621 = vmax.f32 %v1549, %v1585
  %v1622 = vmax.f32 %v1550, %v1586
  %v1623 = vmax.f32 %v1551, %v1587
  %v1624 = vmax.f32 %v1552, %v1588
  %v1625 = vmax.f32 %v1553, %v1589
  %v1626 = vmax.f32 %v1554, %v1590
  %v1627 = vmax.f32 %v1555, %v1591
  %v1628 = vmax.f32 %v1556, %v1592
  %v1629 = vmax.f32 %v1557, %v1593
  %v1630 = vmax.f32 %v1558, %v1594
  %v1631 = vmax.f32 %v1559, %v1595
  %v1632 = vmax.f32 %v1560, %v1596
  %v1633 = vmax.f32 %v1561, %v1597
  %v1634 = vmax.f32 %v1562, %v1598
  %v1635 = vmax.f32 %v1563, %v1599
  %v1636 = vmax.f32 %v1564, %v1600
  %v1637 = vmax.f32 %v1565, %v1601
  %v1638 = vmax.f32 %v1566, %v1602
  %v1639 = vmax.f32 %v1567, %v1603
  %v1640 = vmax.f32 %v1568, %v1604
  %v1641 = vmax.f32 %v1569, %v1605
  %v1642 = vmax.f32 %v1570, %v1606
  %1643 = vst [vmem:[%s3] sm:$0xff] %v1607
  %1644 = vst [vmem:[%s3 + $0x8] sm:$0xff] %v1608
  %1645 = vst [vmem:[%s3 + $0x10] sm:$0xff] %v1609
  %1646 = vst [vmem:[%s3 + $0x18] sm:$0xff] %v1610
  %1647 = vst [vmem:[%s3 + $0x20] sm:$0xff] %v1611
  %1648 = vst [vmem:[%s3 + $0x28] sm:$0xff] %v1612
  %1649 = vst [vmem:[%s3 + $0x30] sm:$0xff] %v1613
  %1650 = vst [vmem:[%s3 + $0x38] sm:$0xff] %v1614
  %1651 = vst [vmem:[%s3 + $0x40] sm:$0xff] %v1615
  %1652 = vst [vmem:[%s3 + $0x48] sm:$0xff] %v1616
  %1653 = vst [vmem:[%s3 + $0x50] sm:$0xff] %v1617
  %1654 = vst [vmem:[%s3 + $0x58] sm:$0xff] %v1618
  %1655 = vst [vmem:[%s3 + $0x60] sm:$0xff] %v1619
  %1656 = vst [vmem:[%s3 + $0x68] sm:$0xff] %v1620
  %1657 = vst [vmem:[%s3 + $0x70] sm:$0xff] %v1621
  %1658 = vst [vmem:[%s3 + $0x78] sm:$0xff] %v1622
  %1659 = vst [vmem:[%s3 + $0x80] sm:$0xff] %v1623
  %1660 = vst [vmem:[%s3 + $0x88] sm:$0xff] %v1624
  %1661 = vst [vmem:[%s3 + $0x90] sm:$0xff] %v1625
  %1662 = vst [vmem:[%s3 + $0x98] sm:$0xff] %v1626
  %1663 = vst [vmem:[%s3 + $0xa0] sm:$0xff] %v1627
  %1664 = vst [vmem:[%s3 + $0xa8] sm:$0xff] %v1628
  %1665 = vst [vmem:[%s3 + $0xb0] sm:$0xff] %v1629
  %1666 = vst [vmem:[%s3 + $0xb8] sm:$0xff] %v1630
  %1667 = vst [vmem:[%s3 + $0xc0] sm:$0xff] %v1631
  %1668 = vst [vmem:[%s3 + $0xc8] sm:$0xff] %v1632
  %1669 = vst [vmem:[%s3 + $0xd0] sm:$0xff] %v1633
  %1670 = vst [vmem:[%s3 + $0xd8] sm:$0xff] %v1634
  %1671 = vst [vmem:[%s3 + $0xe0] sm:$0xff] %v1635
  %1672 = vst [vmem:[%s3 + $0xe8] sm:$0xff] %v1636
  %1673 = vst [vmem:[%s3 + $0xf0] sm:$0xff] %v1637
  %1674 = vst [vmem:[%s3 + $0xf8] sm:$0xff] %v1638
  %1675 = vst [vmem:[%s3 + $0x100] sm:$0xff] %v1639
  %1676 = vst [vmem:[%s3 + $0x108] sm:$0xff] %v1640
  %1677 = vst [vmem:[%s3 + $0x110] sm:$0xff] %v1641
  %1678 = vst [vmem:[%s3 + $0x118] sm:$0xff] %v1642
  // Predicated region
  $region14: #{medium_forward.3} parent=0 // pred_check
    _
  $region15: #{medium_forward.3} parent=0 // pred_check_branch
    %1680 = sbr.rel (0) target = $region17
  $region16: #{medium_forward.3} parent=0 // pred_region
    _
  $region17: #{medium_forward.3} parent=0 // pred_fallthru
    _
  // Predicated region
  $region18: #{medium_forward.3} parent=0 // pred_check
    _
  $region19: #{medium_forward.3} parent=0 // pred_check_branch
    %1682 = sbr.rel (0) target = $region21
  $region20: #{medium_forward.3} parent=0 // pred_region
    _
  $region21: #{medium_forward.3} parent=0 // pred_fallthru
    _

// kernel: medium_forward.4
$region0: #{medium_forward.4}
  #allocation0 [shape = 'u32[]', space=smem, size = 0x4, offset = 0x4, fixed_abs, tag = 'smem constant byte address 0x4 - core index']
  #allocation1 [shape = 'u32[144,128]{1,0:T(1,128)}', space=vmem, size = 0x12000, scoped, tag = 'internal scratch']
  %s0 = inlined_call_operand.vmem [shape: f32[128,3200], index: 0, kind: input, shape index: {}]
  %s1 = inlined_call_operand.vmem [shape: f32[3200,128], index: 1, kind: input, shape index: {}]
  %s2 = inlined_call_operand.vmem [shape: f32[1,128], index: 2, kind: input, shape index: {}]
  %s3 = inlined_call_operand.vmem [shape: f32[32,128], index: 3, kind: output, shape index: {}]
  %s4 = sld [smem:[#allocation0]]
  $region22: #{medium_forward.4} parent=0
    _
  %s6 = ssub.s32 1, %s4
  %s7 = scalar_select 0, %s6, %s4
  // Predicated region
  $region2: #{medium_forward.4} parent=0 // pred_check
    _
  $region3: #{medium_forward.4} parent=0 // pred_check_branch
    %9 = sbr.rel (0) target = $region5
  $region4: #{medium_forward.4} parent=0 // pred_region
    _
  $region5: #{medium_forward.4} parent=0 // pred_fallthru
    _
  // Predicated region
  $region6: #{medium_forward.4} parent=0 // pred_check
    _
  $region7: #{medium_forward.4} parent=0 // pred_check_branch
    %11 = sbr.rel (0) target = $region9
  $region8: #{medium_forward.4} parent=0 // pred_region
    _
  $region9: #{medium_forward.4} parent=0 // pred_fallthru
    _
  // Predicated region
  $region10: #{medium_forward.4} parent=0 // pred_check
    _
  $region11: #{medium_forward.4} parent=0 // pred_check_branch
    %13 = sbr.rel (0) target = $region13
  $region12: #{medium_forward.4} parent=0 // pred_region
    _
  $region13: #{medium_forward.4} parent=0 // pred_fallthru
    _
  %v14 = vld [vmem:[%s0] sm:$0xff]
  %v15 = vld [vmem:[%s0 + $0x8] sm:$0xff]
  %v16 = vld [vmem:[%s0 + $0x10] sm:$0xff]
  %v17 = vld [vmem:[%s0 + $0x18] sm:$0xff]
  %v18 = vld [vmem:[%s0 + $0x20] sm:$0xff]
  %v19 = vld [vmem:[%s0 + $0x28] sm:$0xff]
  %v20 = vld [vmem:[%s0 + $0x30] sm:$0xff]
  %v21 = vld [vmem:[%s0 + $0x38] sm:$0xff]
  %v22 = vld [vmem:[%s0 + $0x40] sm:$0xff]
  %v23 = vld [vmem:[%s0 + $0x48] sm:$0xff]
  %v24 = vld [vmem:[%s0 + $0x50] sm:$0xff]
  %v25 = vld [vmem:[%s0 + $0x58] sm:$0xff]
  %v26 = vld [vmem:[%s0 + $0x60] sm:$0xff]
  %v27 = vld [vmem:[%s0 + $0x68] sm:$0xff]
  %v28 = vld [vmem:[%s0 + $0x70] sm:$0xff]
  %v29 = vld [vmem:[%s0 + $0x78] sm:$0xff]
  %v30 = vld [vmem:[%s0 + $0x80] sm:$0xff]
  %v31 = vld [vmem:[%s0 + $0x88] sm:$0xff]
  %v32 = vld [vmem:[%s0 + $0x90] sm:$0xff]
  %v33 = vld [vmem:[%s0 + $0x98] sm:$0xff]
  %v34 = vld [vmem:[%s0 + $0xa0] sm:$0xff]
  %v35 = vld [vmem:[%s0 + $0xa8] sm:$0xff]
  %v36 = vld [vmem:[%s0 + $0xb0] sm:$0xff]
  %v37 = vld [vmem:[%s0 + $0xb8] sm:$0xff]
  %v38 = vld [vmem:[%s0 + $0xc0] sm:$0xff]
  %v39 = vld [vmem:[%s0 + $0xc8] sm:$0xff]
  %v40 = vld [vmem:[%s0 + $0xd0] sm:$0xff]
  %v41 = vld [vmem:[%s0 + $0xd8] sm:$0xff]
  %v42 = vld [vmem:[%s0 + $0xe0] sm:$0xff]
  %v43 = vld [vmem:[%s0 + $0xe8] sm:$0xff]
  %v44 = vld [vmem:[%s0 + $0xf0] sm:$0xff]
  %v45 = vld [vmem:[%s0 + $0xf8] sm:$0xff]
  %v46 = vld [vmem:[%s0 + $0x100] sm:$0xff]
  %v47 = vld [vmem:[%s0 + $0x108] sm:$0xff]
  %v48 = vld [vmem:[%s0 + $0x110] sm:$0xff]
  %v49 = vld [vmem:[%s0 + $0x118] sm:$0xff]
  %v50 = vld [vmem:[%s0 + $0x120] sm:$0xff]
  %v51 = vld [vmem:[%s0 + $0x128] sm:$0xff]
  %v52 = vld [vmem:[%s0 + $0x130] sm:$0xff]
  %v53 = vld [vmem:[%s0 + $0x138] sm:$0xff]
  %v54 = vld [vmem:[%s0 + $0x140] sm:$0xff]
  %v55 = vld [vmem:[%s0 + $0x148] sm:$0xff]
  %v56 = vld [vmem:[%s0 + $0x150] sm:$0xff]
  %v57 = vld [vmem:[%s0 + $0x158] sm:$0xff]
  %v58 = vld [vmem:[%s0 + $0x160] sm:$0xff]
  %v59 = vld [vmem:[%s0 + $0x168] sm:$0xff]
  %v60 = vld [vmem:[%s0 + $0x170] sm:$0xff]
  %v61 = vld [vmem:[%s0 + $0x178] sm:$0xff]
  %v62 = vld [vmem:[%s0 + $0x180] sm:$0xff]
  %v63 = vld [vmem:[%s0 + $0x188] sm:$0xff]
  %v64 = vld [vmem:[%s0 + $0x190] sm:$0xff]
  %v65 = vld [vmem:[%s0 + $0x198] sm:$0xff]
  %v66 = vld [vmem:[%s0 + $0x1a0] sm:$0xff]
  %v67 = vld [vmem:[%s0 + $0x1a8] sm:$0xff]
  %v68 = vld [vmem:[%s0 + $0x1b0] sm:$0xff]
  %v69 = vld [vmem:[%s0 + $0x1b8] sm:$0xff]
  %v70 = vld [vmem:[%s0 + $0x1c0] sm:$0xff]
  %v71 = vld [vmem:[%s0 + $0x1c8] sm:$0xff]
  %v72 = vld [vmem:[%s0 + $0x1d0] sm:$0xff]
  %v73 = vld [vmem:[%s0 + $0x1d8] sm:$0xff]
  %v74 = vld [vmem:[%s0 + $0x1e0] sm:$0xff]
  %v75 = vld [vmem:[%s0 + $0x1e8] sm:$0xff]
  %v76 = vld [vmem:[%s0 + $0x1f0] sm:$0xff]
  %v77 = vld [vmem:[%s0 + $0x1f8] sm:$0xff]
  %v78 = vld [vmem:[%s0 + $0x200] sm:$0xff]
  %v79 = vld [vmem:[%s0 + $0x208] sm:$0xff]
  %v80 = vld [vmem:[%s0 + $0x210] sm:$0xff]
  %v81 = vld [vmem:[%s0 + $0x218] sm:$0xff]
  %v82 = vld [vmem:[%s0 + $0x220] sm:$0xff]
  %v83 = vld [vmem:[%s0 + $0x228] sm:$0xff]
  %v84 = vld [vmem:[%s0 + $0x230] sm:$0xff]
  %v85 = vld [vmem:[%s0 + $0x238] sm:$0xff]
  %v86 = vld [vmem:[%s0 + $0x240] sm:$0xff]
  %v87 = vld [vmem:[%s0 + $0x248] sm:$0xff]
  %v88 = vld [vmem:[%s0 + $0x250] sm:$0xff]
  %v89 = vld [vmem:[%s0 + $0x258] sm:$0xff]
  %v90 = vld [vmem:[%s0 + $0x260] sm:$0xff]
  %v91 = vld [vmem:[%s0 + $0x268] sm:$0xff]
  %v92 = vld [vmem:[%s0 + $0x270] sm:$0xff]
  %v93 = vld [vmem:[%s0 + $0x278] sm:$0xff]
  %v94 = vld [vmem:[%s0 + $0x280] sm:$0xff]
  %v95 = vld [vmem:[%s0 + $0x288] sm:$0xff]
  %v96 = vld [vmem:[%s0 + $0x290] sm:$0xff]
  %v97 = vld [vmem:[%s0 + $0x298] sm:$0xff]
  %v98 = vld [vmem:[%s0 + $0x2a0] sm:$0xff]
  %v99 = vld [vmem:[%s0 + $0x2a8] sm:$0xff]
  %v100 = vld [vmem:[%s0 + $0x2b0] sm:$0xff]
  %v101 = vld [vmem:[%s0 + $0x2b8] sm:$0xff]
  %v102 = vld [vmem:[%s0 + $0x2c0] sm:$0xff]
  %v103 = vld [vmem:[%s0 + $0x2c8] sm:$0xff]
  %v104 = vld [vmem:[%s0 + $0x2d0] sm:$0xff]
  %v105 = vld [vmem:[%s0 + $0x2d8] sm:$0xff]
  %v106 = vld [vmem:[%s0 + $0x2e0] sm:$0xff]
  %v107 = vld [vmem:[%s0 + $0x2e8] sm:$0xff]
  %v108 = vld [vmem:[%s0 + $0x2f0] sm:$0xff]
  %v109 = vld [vmem:[%s0 + $0x2f8] sm:$0xff]
  %v110 = vld [vmem:[%s0 + $0x300] sm:$0xff]
  %v111 = vld [vmem:[%s0 + $0x308] sm:$0xff]
  %v112 = vld [vmem:[%s0 + $0x310] sm:$0xff]
  %v113 = vld [vmem:[%s0 + $0x318] sm:$0xff]
  %v114 = vld [vmem:[%s0 + $0x320] sm:$0xff]
  %v115 = vld [vmem:[%s0 + $0x328] sm:$0xff]
  %v116 = vld [vmem:[%s0 + $0x330] sm:$0xff]
  %v117 = vld [vmem:[%s0 + $0x338] sm:$0xff]
  %v118 = vld [vmem:[%s0 + $0x340] sm:$0xff]
  %v119 = vld [vmem:[%s0 + $0x348] sm:$0xff]
  %v120 = vld [vmem:[%s0 + $0x350] sm:$0xff]
  %v121 = vld [vmem:[%s0 + $0x358] sm:$0xff]
  %v122 = vld [vmem:[%s0 + $0x360] sm:$0xff]
  %v123 = vld [vmem:[%s0 + $0x368] sm:$0xff]
  %v124 = vld [vmem:[%s0 + $0x370] sm:$0xff]
  %v125 = vld [vmem:[%s0 + $0x378] sm:$0xff]
  %v126 = vld [vmem:[%s0 + $0x380] sm:$0xff]
  %v127 = vld [vmem:[%s0 + $0x388] sm:$0xff]
  %v128 = vld [vmem:[%s0 + $0x390] sm:$0xff]
  %v129 = vld [vmem:[%s0 + $0x398] sm:$0xff]
  %v130 = vld [vmem:[%s0 + $0x3a0] sm:$0xff]
  %v131 = vld [vmem:[%s0 + $0x3a8] sm:$0xff]
  %v132 = vld [vmem:[%s0 + $0x3b0] sm:$0xff]
  %v133 = vld [vmem:[%s0 + $0x3b8] sm:$0xff]
  %v134 = vld [vmem:[%s0 + $0x3c0] sm:$0xff]
  %v135 = vld [vmem:[%s0 + $0x3c8] sm:$0xff]
  %v136 = vld [vmem:[%s0 + $0x3d0] sm:$0xff]
  %v137 = vld [vmem:[%s0 + $0x3d8] sm:$0xff]
  %v138 = vld [vmem:[%s0 + $0x3e0] sm:$0xff]
  %v139 = vld [vmem:[%s0 + $0x3e8] sm:$0xff]
  %v140 = vld [vmem:[%s0 + $0x3f0] sm:$0xff]
  %v141 = vld [vmem:[%s0 + $0x3f8] sm:$0xff]
  %v142 = vld [vmem:[%s0 + $0x400] sm:$0xff]
  %v143 = vld [vmem:[%s0 + $0x408] sm:$0xff]
  %v144 = vld [vmem:[%s0 + $0x410] sm:$0xff]
  %v145 = vld [vmem:[%s0 + $0x418] sm:$0xff]
  %v146 = vld [vmem:[%s0 + $0x420] sm:$0xff]
  %v147 = vld [vmem:[%s0 + $0x428] sm:$0xff]
  %v148 = vld [vmem:[%s0 + $0x430] sm:$0xff]
  %v149 = vld [vmem:[%s0 + $0x438] sm:$0xff]
  %v150 = vld [vmem:[%s0 + $0x440] sm:$0xff]
  %v151 = vld [vmem:[%s0 + $0x448] sm:$0xff]
  %v152 = vld [vmem:[%s0 + $0x450] sm:$0xff]
  %v153 = vld [vmem:[%s0 + $0x458] sm:$0xff]
  %v154 = vld [vmem:[%s0 + $0x460] sm:$0xff]
  %v155 = vld [vmem:[%s0 + $0x468] sm:$0xff]
  %v156 = vld [vmem:[%s0 + $0x470] sm:$0xff]
  %v157 = vld [vmem:[%s0 + $0x478] sm:$0xff]
  %v158 = vld [vmem:[%s0 + $0x480] sm:$0xff]
  %v159 = vld [vmem:[%s0 + $0x488] sm:$0xff]
  %v160 = vld [vmem:[%s0 + $0x490] sm:$0xff]
  %v161 = vld [vmem:[%s0 + $0x498] sm:$0xff]
  %v162 = vld [vmem:[%s0 + $0x4a0] sm:$0xff]
  %v163 = vld [vmem:[%s0 + $0x4a8] sm:$0xff]
  %v164 = vld [vmem:[%s0 + $0x4b0] sm:$0xff]
  %v165 = vld [vmem:[%s0 + $0x4b8] sm:$0xff]
  %v166 = vld [vmem:[%s0 + $0x4c0] sm:$0xff]
  %v167 = vld [vmem:[%s0 + $0x4c8] sm:$0xff]
  %v168 = vld [vmem:[%s0 + $0x4d0] sm:$0xff]
  %v169 = vld [vmem:[%s0 + $0x4d8] sm:$0xff]
  %v170 = vld [vmem:[%s0 + $0x4e0] sm:$0xff]
  %v171 = vld [vmem:[%s0 + $0x4e8] sm:$0xff]
  %v172 = vld [vmem:[%s0 + $0x4f0] sm:$0xff]
  %v173 = vld [vmem:[%s0 + $0x4f8] sm:$0xff]
  %v174 = vld [vmem:[%s0 + $0x500] sm:$0xff]
  %v175 = vld [vmem:[%s0 + $0x508] sm:$0xff]
  %v176 = vld [vmem:[%s0 + $0x510] sm:$0xff]
  %v177 = vld [vmem:[%s0 + $0x518] sm:$0xff]
  %v178 = vld [vmem:[%s0 + $0x520] sm:$0xff]
  %v179 = vld [vmem:[%s0 + $0x528] sm:$0xff]
  %v180 = vld [vmem:[%s0 + $0x530] sm:$0xff]
  %v181 = vld [vmem:[%s0 + $0x538] sm:$0xff]
  %v182 = vld [vmem:[%s0 + $0x540] sm:$0xff]
  %v183 = vld [vmem:[%s0 + $0x548] sm:$0xff]
  %v184 = vld [vmem:[%s0 + $0x550] sm:$0xff]
  %v185 = vld [vmem:[%s0 + $0x558] sm:$0xff]
  %v186 = vld [vmem:[%s0 + $0x560] sm:$0xff]
  %v187 = vld [vmem:[%s0 + $0x568] sm:$0xff]
  %v188 = vld [vmem:[%s0 + $0x570] sm:$0xff]
  %v189 = vld [vmem:[%s0 + $0x578] sm:$0xff]
  %v190 = vld [vmem:[%s0 + $0x580] sm:$0xff]
  %v191 = vld [vmem:[%s0 + $0x588] sm:$0xff]
  %v192 = vld [vmem:[%s0 + $0x590] sm:$0xff]
  %v193 = vld [vmem:[%s0 + $0x598] sm:$0xff]
  %v194 = vld [vmem:[%s0 + $0x5a0] sm:$0xff]
  %v195 = vld [vmem:[%s0 + $0x5a8] sm:$0xff]
  %v196 = vld [vmem:[%s0 + $0x5b0] sm:$0xff]
  %v197 = vld [vmem:[%s0 + $0x5b8] sm:$0xff]
  %v198 = vld [vmem:[%s0 + $0x5c0] sm:$0xff]
  %v199 = vld [vmem:[%s0 + $0x5c8] sm:$0xff]
  %v200 = vld [vmem:[%s0 + $0x5d0] sm:$0xff]
  %v201 = vld [vmem:[%s0 + $0x5d8] sm:$0xff]
  %v202 = vld [vmem:[%s0 + $0x5e0] sm:$0xff]
  %v203 = vld [vmem:[%s0 + $0x5e8] sm:$0xff]
  %v204 = vld [vmem:[%s0 + $0x5f0] sm:$0xff]
  %v205 = vld [vmem:[%s0 + $0x5f8] sm:$0xff]
  %v206 = vld [vmem:[%s0 + $0x600] sm:$0xff]
  %v207 = vld [vmem:[%s0 + $0x608] sm:$0xff]
  %v208 = vld [vmem:[%s0 + $0x610] sm:$0xff]
  %v209 = vld [vmem:[%s0 + $0x618] sm:$0xff]
  %v210 = vld [vmem:[%s0 + $0x620] sm:$0xff]
  %v211 = vld [vmem:[%s0 + $0x628] sm:$0xff]
  %v212 = vld [vmem:[%s0 + $0x630] sm:$0xff]
  %v213 = vld [vmem:[%s0 + $0x638] sm:$0xff]
  %v214 = vld [vmem:[%s0 + $0x640] sm:$0xff]
  %v215 = vld [vmem:[%s0 + $0x648] sm:$0xff]
  %v216 = vld [vmem:[%s0 + $0x650] sm:$0xff]
  %v217 = vld [vmem:[%s0 + $0x658] sm:$0xff]
  %v218 = vld [vmem:[%s0 + $0x660] sm:$0xff]
  %v219 = vld [vmem:[%s0 + $0x668] sm:$0xff]
  %v220 = vld [vmem:[%s0 + $0x670] sm:$0xff]
  %v221 = vld [vmem:[%s0 + $0x678] sm:$0xff]
  %v222 = vld [vmem:[%s0 + $0x680] sm:$0xff]
  %v223 = vld [vmem:[%s0 + $0x688] sm:$0xff]
  %v224 = vld [vmem:[%s0 + $0x690] sm:$0xff]
  %v225 = vld [vmem:[%s0 + $0x698] sm:$0xff]
  %v226 = vld [vmem:[%s0 + $0x6a0] sm:$0xff]
  %v227 = vld [vmem:[%s0 + $0x6a8] sm:$0xff]
  %v228 = vld [vmem:[%s0 + $0x6b0] sm:$0xff]
  %v229 = vld [vmem:[%s0 + $0x6b8] sm:$0xff]
  %v230 = vld [vmem:[%s0 + $0x6c0] sm:$0xff]
  %v231 = vld [vmem:[%s0 + $0x6c8] sm:$0xff]
  %v232 = vld [vmem:[%s0 + $0x6d0] sm:$0xff]
  %v233 = vld [vmem:[%s0 + $0x6d8] sm:$0xff]
  %v234 = vld [vmem:[%s0 + $0x6e0] sm:$0xff]
  %v235 = vld [vmem:[%s0 + $0x6e8] sm:$0xff]
  %v236 = vld [vmem:[%s0 + $0x6f0] sm:$0xff]
  %v237 = vld [vmem:[%s0 + $0x6f8] sm:$0xff]
  %v238 = vld [vmem:[%s0 + $0x700] sm:$0xff]
  %v239 = vld [vmem:[%s0 + $0x708] sm:$0xff]
  %v240 = vld [vmem:[%s0 + $0x710] sm:$0xff]
  %v241 = vld [vmem:[%s0 + $0x718] sm:$0xff]
  %v242 = vld [vmem:[%s0 + $0x720] sm:$0xff]
  %v243 = vld [vmem:[%s0 + $0x728] sm:$0xff]
  %v244 = vld [vmem:[%s0 + $0x730] sm:$0xff]
  %v245 = vld [vmem:[%s0 + $0x738] sm:$0xff]
  %v246 = vld [vmem:[%s0 + $0x740] sm:$0xff]
  %v247 = vld [vmem:[%s0 + $0x748] sm:$0xff]
  %v248 = vld [vmem:[%s0 + $0x750] sm:$0xff]
  %v249 = vld [vmem:[%s0 + $0x758] sm:$0xff]
  %v250 = vld [vmem:[%s0 + $0x760] sm:$0xff]
  %v251 = vld [vmem:[%s0 + $0x768] sm:$0xff]
  %v252 = vld [vmem:[%s0 + $0x770] sm:$0xff]
  %v253 = vld [vmem:[%s0 + $0x778] sm:$0xff]
  %v254 = vld [vmem:[%s0 + $0x780] sm:$0xff]
  %v255 = vld [vmem:[%s0 + $0x788] sm:$0xff]
  %v256 = vld [vmem:[%s0 + $0x790] sm:$0xff]
  %v257 = vld [vmem:[%s0 + $0x798] sm:$0xff]
  %v258 = vld [vmem:[%s0 + $0x7a0] sm:$0xff]
  %v259 = vld [vmem:[%s0 + $0x7a8] sm:$0xff]
  %v260 = vld [vmem:[%s0 + $0x7b0] sm:$0xff]
  %v261 = vld [vmem:[%s0 + $0x7b8] sm:$0xff]
  %v262 = vld [vmem:[%s0 + $0x7c0] sm:$0xff]
  %v263 = vld [vmem:[%s0 + $0x7c8] sm:$0xff]
  %v264 = vld [vmem:[%s0 + $0x7d0] sm:$0xff]
  %v265 = vld [vmem:[%s0 + $0x7d8] sm:$0xff]
  %v266 = vld [vmem:[%s0 + $0x7e0] sm:$0xff]
  %v267 = vld [vmem:[%s0 + $0x7e8] sm:$0xff]
  %v268 = vld [vmem:[%s0 + $0x7f0] sm:$0xff]
  %v269 = vld [vmem:[%s0 + $0x7f8] sm:$0xff]
  %v270 = vld [vmem:[%s0 + $0x800] sm:$0xff]
  %v271 = vld [vmem:[%s0 + $0x808] sm:$0xff]
  %v272 = vld [vmem:[%s0 + $0x810] sm:$0xff]
  %v273 = vld [vmem:[%s0 + $0x818] sm:$0xff]
  %v274 = vld [vmem:[%s0 + $0x820] sm:$0xff]
  %v275 = vld [vmem:[%s0 + $0x828] sm:$0xff]
  %v276 = vld [vmem:[%s0 + $0x830] sm:$0xff]
  %v277 = vld [vmem:[%s0 + $0x838] sm:$0xff]
  %v278 = vld [vmem:[%s0 + $0x840] sm:$0xff]
  %v279 = vld [vmem:[%s0 + $0x848] sm:$0xff]
  %v280 = vld [vmem:[%s0 + $0x850] sm:$0xff]
  %v281 = vld [vmem:[%s0 + $0x858] sm:$0xff]
  %v282 = vld [vmem:[%s0 + $0x860] sm:$0xff]
  %v283 = vld [vmem:[%s0 + $0x868] sm:$0xff]
  %v284 = vld [vmem:[%s0 + $0x870] sm:$0xff]
  %v285 = vld [vmem:[%s0 + $0x878] sm:$0xff]
  %v286 = vld [vmem:[%s0 + $0x880] sm:$0xff]
  %v287 = vld [vmem:[%s0 + $0x888] sm:$0xff]
  %v288 = vld [vmem:[%s0 + $0x890] sm:$0xff]
  %v289 = vld [vmem:[%s0 + $0x898] sm:$0xff]
  %v290 = vld [vmem:[%s0 + $0x8a0] sm:$0xff]
  %v291 = vld [vmem:[%s0 + $0x8a8] sm:$0xff]
  %v292 = vld [vmem:[%s0 + $0x8b0] sm:$0xff]
  %v293 = vld [vmem:[%s0 + $0x8b8] sm:$0xff]
  %v294 = vld [vmem:[%s0 + $0x8c0] sm:$0xff]
  %v295 = vld [vmem:[%s0 + $0x8c8] sm:$0xff]
  %v296 = vld [vmem:[%s0 + $0x8d0] sm:$0xff]
  %v297 = vld [vmem:[%s0 + $0x8d8] sm:$0xff]
  %v298 = vld [vmem:[%s0 + $0x8e0] sm:$0xff]
  %v299 = vld [vmem:[%s0 + $0x8e8] sm:$0xff]
  %v300 = vld [vmem:[%s0 + $0x8f0] sm:$0xff]
  %v301 = vld [vmem:[%s0 + $0x8f8] sm:$0xff]
  %v302 = vld [vmem:[%s0 + $0x900] sm:$0xff]
  %v303 = vld [vmem:[%s0 + $0x908] sm:$0xff]
  %v304 = vld [vmem:[%s0 + $0x910] sm:$0xff]
  %v305 = vld [vmem:[%s0 + $0x918] sm:$0xff]
  %v306 = vld [vmem:[%s0 + $0x920] sm:$0xff]
  %v307 = vld [vmem:[%s0 + $0x928] sm:$0xff]
  %v308 = vld [vmem:[%s0 + $0x930] sm:$0xff]
  %v309 = vld [vmem:[%s0 + $0x938] sm:$0xff]
  %v310 = vld [vmem:[%s0 + $0x940] sm:$0xff]
  %v311 = vld [vmem:[%s0 + $0x948] sm:$0xff]
  %v312 = vld [vmem:[%s0 + $0x950] sm:$0xff]
  %v313 = vld [vmem:[%s0 + $0x958] sm:$0xff]
  %v314 = vld [vmem:[%s0 + $0x960] sm:$0xff]
  %v315 = vld [vmem:[%s0 + $0x968] sm:$0xff]
  %v316 = vld [vmem:[%s0 + $0x970] sm:$0xff]
  %v317 = vld [vmem:[%s0 + $0x978] sm:$0xff]
  %v318 = vld [vmem:[%s0 + $0x980] sm:$0xff]
  %v319 = vld [vmem:[%s0 + $0x988] sm:$0xff]
  %v320 = vld [vmem:[%s0 + $0x990] sm:$0xff]
  %v321 = vld [vmem:[%s0 + $0x998] sm:$0xff]
  %v322 = vld [vmem:[%s0 + $0x9a0] sm:$0xff]
  %v323 = vld [vmem:[%s0 + $0x9a8] sm:$0xff]
  %v324 = vld [vmem:[%s0 + $0x9b0] sm:$0xff]
  %v325 = vld [vmem:[%s0 + $0x9b8] sm:$0xff]
  %v326 = vld [vmem:[%s0 + $0x9c0] sm:$0xff]
  %v327 = vld [vmem:[%s0 + $0x9c8] sm:$0xff]
  %v328 = vld [vmem:[%s0 + $0x9d0] sm:$0xff]
  %v329 = vld [vmem:[%s0 + $0x9d8] sm:$0xff]
  %v330 = vld [vmem:[%s0 + $0x9e0] sm:$0xff]
  %v331 = vld [vmem:[%s0 + $0x9e8] sm:$0xff]
  %v332 = vld [vmem:[%s0 + $0x9f0] sm:$0xff]
  %v333 = vld [vmem:[%s0 + $0x9f8] sm:$0xff]
  %v334 = vld [vmem:[%s0 + $0xa00] sm:$0xff]
  %v335 = vld [vmem:[%s0 + $0xa08] sm:$0xff]
  %v336 = vld [vmem:[%s0 + $0xa10] sm:$0xff]
  %v337 = vld [vmem:[%s0 + $0xa18] sm:$0xff]
  %v338 = vld [vmem:[%s0 + $0xa20] sm:$0xff]
  %v339 = vld [vmem:[%s0 + $0xa28] sm:$0xff]
  %v340 = vld [vmem:[%s0 + $0xa30] sm:$0xff]
  %v341 = vld [vmem:[%s0 + $0xa38] sm:$0xff]
  %v342 = vld [vmem:[%s0 + $0xa40] sm:$0xff]
  %v343 = vld [vmem:[%s0 + $0xa48] sm:$0xff]
  %v344 = vld [vmem:[%s0 + $0xa50] sm:$0xff]
  %v345 = vld [vmem:[%s0 + $0xa58] sm:$0xff]
  %v346 = vld [vmem:[%s0 + $0xa60] sm:$0xff]
  %v347 = vld [vmem:[%s0 + $0xa68] sm:$0xff]
  %v348 = vld [vmem:[%s0 + $0xa70] sm:$0xff]
  %v349 = vld [vmem:[%s0 + $0xa78] sm:$0xff]
  %v350 = vld [vmem:[%s0 + $0xa80] sm:$0xff]
  %v351 = vld [vmem:[%s0 + $0xa88] sm:$0xff]
  %v352 = vld [vmem:[%s0 + $0xa90] sm:$0xff]
  %v353 = vld [vmem:[%s0 + $0xa98] sm:$0xff]
  %v354 = vld [vmem:[%s0 + $0xaa0] sm:$0xff]
  %v355 = vld [vmem:[%s0 + $0xaa8] sm:$0xff]
  %v356 = vld [vmem:[%s0 + $0xab0] sm:$0xff]
  %v357 = vld [vmem:[%s0 + $0xab8] sm:$0xff]
  %v358 = vld [vmem:[%s0 + $0xac0] sm:$0xff]
  %v359 = vld [vmem:[%s0 + $0xac8] sm:$0xff]
  %v360 = vld [vmem:[%s0 + $0xad0] sm:$0xff]
  %v361 = vld [vmem:[%s0 + $0xad8] sm:$0xff]
  %v362 = vld [vmem:[%s0 + $0xae0] sm:$0xff]
  %v363 = vld [vmem:[%s0 + $0xae8] sm:$0xff]
  %v364 = vld [vmem:[%s0 + $0xaf0] sm:$0xff]
  %v365 = vld [vmem:[%s0 + $0xaf8] sm:$0xff]
  %v366 = vld [vmem:[%s0 + $0xb00] sm:$0xff]
  %v367 = vld [vmem:[%s0 + $0xb08] sm:$0xff]
  %v368 = vld [vmem:[%s0 + $0xb10] sm:$0xff]
  %v369 = vld [vmem:[%s0 + $0xb18] sm:$0xff]
  %v370 = vld [vmem:[%s0 + $0xb20] sm:$0xff]
  %v371 = vld [vmem:[%s0 + $0xb28] sm:$0xff]
  %v372 = vld [vmem:[%s0 + $0xb30] sm:$0xff]
  %v373 = vld [vmem:[%s0 + $0xb38] sm:$0xff]
  %v374 = vld [vmem:[%s0 + $0xb40] sm:$0xff]
  %v375 = vld [vmem:[%s0 + $0xb48] sm:$0xff]
  %v376 = vld [vmem:[%s0 + $0xb50] sm:$0xff]
  %v377 = vld [vmem:[%s0 + $0xb58] sm:$0xff]
  %v378 = vld [vmem:[%s0 + $0xb60] sm:$0xff]
  %v379 = vld [vmem:[%s0 + $0xb68] sm:$0xff]
  %v380 = vld [vmem:[%s0 + $0xb70] sm:$0xff]
  %v381 = vld [vmem:[%s0 + $0xb78] sm:$0xff]
  %v382 = vld [vmem:[%s0 + $0xb80] sm:$0xff]
  %v383 = vld [vmem:[%s0 + $0xb88] sm:$0xff]
  %v384 = vld [vmem:[%s0 + $0xb90] sm:$0xff]
  %v385 = vld [vmem:[%s0 + $0xb98] sm:$0xff]
  %v386 = vld [vmem:[%s0 + $0xba0] sm:$0xff]
  %v387 = vld [vmem:[%s0 + $0xba8] sm:$0xff]
  %v388 = vld [vmem:[%s0 + $0xbb0] sm:$0xff]
  %v389 = vld [vmem:[%s0 + $0xbb8] sm:$0xff]
  %v390 = vld [vmem:[%s0 + $0xbc0] sm:$0xff]
  %v391 = vld [vmem:[%s0 + $0xbc8] sm:$0xff]
  %v392 = vld [vmem:[%s0 + $0xbd0] sm:$0xff]
  %v393 = vld [vmem:[%s0 + $0xbd8] sm:$0xff]
  %v394 = vld [vmem:[%s0 + $0xbe0] sm:$0xff]
  %v395 = vld [vmem:[%s0 + $0xbe8] sm:$0xff]
  %v396 = vld [vmem:[%s0 + $0xbf0] sm:$0xff]
  %v397 = vld [vmem:[%s0 + $0xbf8] sm:$0xff]
  %v398 = vld [vmem:[%s0 + $0xc00] sm:$0xff]
  %v399 = vld [vmem:[%s0 + $0xc08] sm:$0xff]
  %v400 = vld [vmem:[%s0 + $0xc10] sm:$0xff]
  %v401 = vld [vmem:[%s0 + $0xc18] sm:$0xff]
  %v402 = vld [vmem:[%s0 + $0xc20] sm:$0xff]
  %v403 = vld [vmem:[%s0 + $0xc28] sm:$0xff]
  %v404 = vld [vmem:[%s0 + $0xc30] sm:$0xff]
  %v405 = vld [vmem:[%s0 + $0xc38] sm:$0xff]
  %v406 = vld [vmem:[%s0 + $0xc40] sm:$0xff]
  %v407 = vld [vmem:[%s0 + $0xc48] sm:$0xff]
  %v408 = vld [vmem:[%s0 + $0xc50] sm:$0xff]
  %v409 = vld [vmem:[%s0 + $0xc58] sm:$0xff]
  %v410 = vld [vmem:[%s0 + $0xc60] sm:$0xff]
  %v411 = vld [vmem:[%s0 + $0xc68] sm:$0xff]
  %v412 = vld [vmem:[%s0 + $0xc70] sm:$0xff]
  %v413 = vld [vmem:[%s0 + $0xc78] sm:$0xff]
  %v414 = vld [vmem:[%s1] sm:$0xff]
  %v415 = vld [vmem:[%s1 + $0x8] sm:$0xff]
  %v416 = vld [vmem:[%s1 + $0x10] sm:$0xff]
  %v417 = vld [vmem:[%s1 + $0x18] sm:$0xff]
  %v418 = vld [vmem:[%s1 + $0x20] sm:$0xff]
  %v419 = vld [vmem:[%s1 + $0x28] sm:$0xff]
  %v420 = vld [vmem:[%s1 + $0x30] sm:$0xff]
  %v421 = vld [vmem:[%s1 + $0x38] sm:$0xff]
  %v422 = vld [vmem:[%s1 + $0x40] sm:$0xff]
  %v423 = vld [vmem:[%s1 + $0x48] sm:$0xff]
  %v424 = vld [vmem:[%s1 + $0x50] sm:$0xff]
  %v425 = vld [vmem:[%s1 + $0x58] sm:$0xff]
  %v426 = vld [vmem:[%s1 + $0x60] sm:$0xff]
  %v427 = vld [vmem:[%s1 + $0x68] sm:$0xff]
  %v428 = vld [vmem:[%s1 + $0x70] sm:$0xff]
  %v429 = vld [vmem:[%s1 + $0x78] sm:$0xff]
  %v430 = vld [vmem:[%s1 + $0x80] sm:$0xff]
  %v431 = vld [vmem:[%s1 + $0x88] sm:$0xff]
  %v432 = vld [vmem:[%s1 + $0x90] sm:$0xff]
  %v433 = vld [vmem:[%s1 + $0x98] sm:$0xff]
  %v434 = vld [vmem:[%s1 + $0xa0] sm:$0xff]
  %v435 = vld [vmem:[%s1 + $0xa8] sm:$0xff]
  %v436 = vld [vmem:[%s1 + $0xb0] sm:$0xff]
  %v437 = vld [vmem:[%s1 + $0xb8] sm:$0xff]
  %v438 = vld [vmem:[%s1 + $0xc0] sm:$0xff]
  %v439 = vld [vmem:[%s1 + $0xc8] sm:$0xff]
  %v440 = vld [vmem:[%s1 + $0xd0] sm:$0xff]
  %v441 = vld [vmem:[%s1 + $0xd8] sm:$0xff]
  %v442 = vld [vmem:[%s1 + $0xe0] sm:$0xff]
  %v443 = vld [vmem:[%s1 + $0xe8] sm:$0xff]
  %v444 = vld [vmem:[%s1 + $0xf0] sm:$0xff]
  %v445 = vld [vmem:[%s1 + $0xf8] sm:$0xff]
  %v446 = vld [vmem:[%s1 + $0x100] sm:$0xff]
  %v447 = vld [vmem:[%s1 + $0x108] sm:$0xff]
  %v448 = vld [vmem:[%s1 + $0x110] sm:$0xff]
  %v449 = vld [vmem:[%s1 + $0x118] sm:$0xff]
  %v450 = vld [vmem:[%s1 + $0x120] sm:$0xff]
  %v451 = vld [vmem:[%s1 + $0x128] sm:$0xff]
  %v452 = vld [vmem:[%s1 + $0x130] sm:$0xff]
  %v453 = vld [vmem:[%s1 + $0x138] sm:$0xff]
  %v454 = vld [vmem:[%s1 + $0x140] sm:$0xff]
  %v455 = vld [vmem:[%s1 + $0x148] sm:$0xff]
  %v456 = vld [vmem:[%s1 + $0x150] sm:$0xff]
  %v457 = vld [vmem:[%s1 + $0x158] sm:$0xff]
  %v458 = vld [vmem:[%s1 + $0x160] sm:$0xff]
  %v459 = vld [vmem:[%s1 + $0x168] sm:$0xff]
  %v460 = vld [vmem:[%s1 + $0x170] sm:$0xff]
  %v461 = vld [vmem:[%s1 + $0x178] sm:$0xff]
  %v462 = vld [vmem:[%s1 + $0x180] sm:$0xff]
  %v463 = vld [vmem:[%s1 + $0x188] sm:$0xff]
  %v464 = vld [vmem:[%s1 + $0x190] sm:$0xff]
  %v465 = vld [vmem:[%s1 + $0x198] sm:$0xff]
  %v466 = vld [vmem:[%s1 + $0x1a0] sm:$0xff]
  %v467 = vld [vmem:[%s1 + $0x1a8] sm:$0xff]
  %v468 = vld [vmem:[%s1 + $0x1b0] sm:$0xff]
  %v469 = vld [vmem:[%s1 + $0x1b8] sm:$0xff]
  %v470 = vld [vmem:[%s1 + $0x1c0] sm:$0xff]
  %v471 = vld [vmem:[%s1 + $0x1c8] sm:$0xff]
  %v472 = vld [vmem:[%s1 + $0x1d0] sm:$0xff]
  %v473 = vld [vmem:[%s1 + $0x1d8] sm:$0xff]
  %v474 = vld [vmem:[%s1 + $0x1e0] sm:$0xff]
  %v475 = vld [vmem:[%s1 + $0x1e8] sm:$0xff]
  %v476 = vld [vmem:[%s1 + $0x1f0] sm:$0xff]
  %v477 = vld [vmem:[%s1 + $0x1f8] sm:$0xff]
  %v478 = vld [vmem:[%s1 + $0x200] sm:$0xff]
  %v479 = vld [vmem:[%s1 + $0x208] sm:$0xff]
  %v480 = vld [vmem:[%s1 + $0x210] sm:$0xff]
  %v481 = vld [vmem:[%s1 + $0x218] sm:$0xff]
  %v482 = vld [vmem:[%s1 + $0x220] sm:$0xff]
  %v483 = vld [vmem:[%s1 + $0x228] sm:$0xff]
  %v484 = vld [vmem:[%s1 + $0x230] sm:$0xff]
  %v485 = vld [vmem:[%s1 + $0x238] sm:$0xff]
  %v486 = vld [vmem:[%s1 + $0x240] sm:$0xff]
  %v487 = vld [vmem:[%s1 + $0x248] sm:$0xff]
  %v488 = vld [vmem:[%s1 + $0x250] sm:$0xff]
  %v489 = vld [vmem:[%s1 + $0x258] sm:$0xff]
  %v490 = vld [vmem:[%s1 + $0x260] sm:$0xff]
  %v491 = vld [vmem:[%s1 + $0x268] sm:$0xff]
  %v492 = vld [vmem:[%s1 + $0x270] sm:$0xff]
  %v493 = vld [vmem:[%s1 + $0x278] sm:$0xff]
  %v494 = vld [vmem:[%s1 + $0x280] sm:$0xff]
  %v495 = vld [vmem:[%s1 + $0x288] sm:$0xff]
  %v496 = vld [vmem:[%s1 + $0x290] sm:$0xff]
  %v497 = vld [vmem:[%s1 + $0x298] sm:$0xff]
  %v498 = vld [vmem:[%s1 + $0x2a0] sm:$0xff]
  %v499 = vld [vmem:[%s1 + $0x2a8] sm:$0xff]
  %v500 = vld [vmem:[%s1 + $0x2b0] sm:$0xff]
  %v501 = vld [vmem:[%s1 + $0x2b8] sm:$0xff]
  %v502 = vld [vmem:[%s1 + $0x2c0] sm:$0xff]
  %v503 = vld [vmem:[%s1 + $0x2c8] sm:$0xff]
  %v504 = vld [vmem:[%s1 + $0x2d0] sm:$0xff]
  %v505 = vld [vmem:[%s1 + $0x2d8] sm:$0xff]
  %v506 = vld [vmem:[%s1 + $0x2e0] sm:$0xff]
  %v507 = vld [vmem:[%s1 + $0x2e8] sm:$0xff]
  %v508 = vld [vmem:[%s1 + $0x2f0] sm:$0xff]
  %v509 = vld [vmem:[%s1 + $0x2f8] sm:$0xff]
  %v510 = vld [vmem:[%s1 + $0x300] sm:$0xff]
  %v511 = vld [vmem:[%s1 + $0x308] sm:$0xff]
  %v512 = vld [vmem:[%s1 + $0x310] sm:$0xff]
  %v513 = vld [vmem:[%s1 + $0x318] sm:$0xff]
  %v514 = vld [vmem:[%s1 + $0x320] sm:$0xff]
  %v515 = vld [vmem:[%s1 + $0x328] sm:$0xff]
  %v516 = vld [vmem:[%s1 + $0x330] sm:$0xff]
  %v517 = vld [vmem:[%s1 + $0x338] sm:$0xff]
  %v518 = vld [vmem:[%s1 + $0x340] sm:$0xff]
  %v519 = vld [vmem:[%s1 + $0x348] sm:$0xff]
  %v520 = vld [vmem:[%s1 + $0x350] sm:$0xff]
  %v521 = vld [vmem:[%s1 + $0x358] sm:$0xff]
  %v522 = vld [vmem:[%s1 + $0x360] sm:$0xff]
  %v523 = vld [vmem:[%s1 + $0x368] sm:$0xff]
  %v524 = vld [vmem:[%s1 + $0x370] sm:$0xff]
  %v525 = vld [vmem:[%s1 + $0x378] sm:$0xff]
  %v526 = vld [vmem:[%s1 + $0x380] sm:$0xff]
  %v527 = vld [vmem:[%s1 + $0x388] sm:$0xff]
  %v528 = vld [vmem:[%s1 + $0x390] sm:$0xff]
  %v529 = vld [vmem:[%s1 + $0x398] sm:$0xff]
  %v530 = vld [vmem:[%s1 + $0x3a0] sm:$0xff]
  %v531 = vld [vmem:[%s1 + $0x3a8] sm:$0xff]
  %v532 = vld [vmem:[%s1 + $0x3b0] sm:$0xff]
  %v533 = vld [vmem:[%s1 + $0x3b8] sm:$0xff]
  %v534 = vld [vmem:[%s1 + $0x3c0] sm:$0xff]
  %v535 = vld [vmem:[%s1 + $0x3c8] sm:$0xff]
  %v536 = vld [vmem:[%s1 + $0x3d0] sm:$0xff]
  %v537 = vld [vmem:[%s1 + $0x3d8] sm:$0xff]
  %v538 = vld [vmem:[%s1 + $0x3e0] sm:$0xff]
  %v539 = vld [vmem:[%s1 + $0x3e8] sm:$0xff]
  %v540 = vld [vmem:[%s1 + $0x3f0] sm:$0xff]
  %v541 = vld [vmem:[%s1 + $0x3f8] sm:$0xff]
  %v542 = vld [vmem:[%s1 + $0x400] sm:$0xff]
  %v543 = vld [vmem:[%s1 + $0x408] sm:$0xff]
  %v544 = vld [vmem:[%s1 + $0x410] sm:$0xff]
  %v545 = vld [vmem:[%s1 + $0x418] sm:$0xff]
  %v546 = vld [vmem:[%s1 + $0x420] sm:$0xff]
  %v547 = vld [vmem:[%s1 + $0x428] sm:$0xff]
  %v548 = vld [vmem:[%s1 + $0x430] sm:$0xff]
  %v549 = vld [vmem:[%s1 + $0x438] sm:$0xff]
  %v550 = vld [vmem:[%s1 + $0x440] sm:$0xff]
  %v551 = vld [vmem:[%s1 + $0x448] sm:$0xff]
  %v552 = vld [vmem:[%s1 + $0x450] sm:$0xff]
  %v553 = vld [vmem:[%s1 + $0x458] sm:$0xff]
  %v554 = vld [vmem:[%s1 + $0x460] sm:$0xff]
  %v555 = vld [vmem:[%s1 + $0x468] sm:$0xff]
  %v556 = vld [vmem:[%s1 + $0x470] sm:$0xff]
  %v557 = vld [vmem:[%s1 + $0x478] sm:$0xff]
  %v558 = vld [vmem:[%s1 + $0x480] sm:$0xff]
  %v559 = vld [vmem:[%s1 + $0x488] sm:$0xff]
  %v560 = vld [vmem:[%s1 + $0x490] sm:$0xff]
  %v561 = vld [vmem:[%s1 + $0x498] sm:$0xff]
  %v562 = vld [vmem:[%s1 + $0x4a0] sm:$0xff]
  %v563 = vld [vmem:[%s1 + $0x4a8] sm:$0xff]
  %v564 = vld [vmem:[%s1 + $0x4b0] sm:$0xff]
  %v565 = vld [vmem:[%s1 + $0x4b8] sm:$0xff]
  %v566 = vld [vmem:[%s1 + $0x4c0] sm:$0xff]
  %v567 = vld [vmem:[%s1 + $0x4c8] sm:$0xff]
  %v568 = vld [vmem:[%s1 + $0x4d0] sm:$0xff]
  %v569 = vld [vmem:[%s1 + $0x4d8] sm:$0xff]
  %v570 = vld [vmem:[%s1 + $0x4e0] sm:$0xff]
  %v571 = vld [vmem:[%s1 + $0x4e8] sm:$0xff]
  %v572 = vld [vmem:[%s1 + $0x4f0] sm:$0xff]
  %v573 = vld [vmem:[%s1 + $0x4f8] sm:$0xff]
  %v574 = vld [vmem:[%s1 + $0x500] sm:$0xff]
  %v575 = vld [vmem:[%s1 + $0x508] sm:$0xff]
  %v576 = vld [vmem:[%s1 + $0x510] sm:$0xff]
  %v577 = vld [vmem:[%s1 + $0x518] sm:$0xff]
  %v578 = vld [vmem:[%s1 + $0x520] sm:$0xff]
  %v579 = vld [vmem:[%s1 + $0x528] sm:$0xff]
  %v580 = vld [vmem:[%s1 + $0x530] sm:$0xff]
  %v581 = vld [vmem:[%s1 + $0x538] sm:$0xff]
  %v582 = vld [vmem:[%s1 + $0x540] sm:$0xff]
  %v583 = vld [vmem:[%s1 + $0x548] sm:$0xff]
  %v584 = vld [vmem:[%s1 + $0x550] sm:$0xff]
  %v585 = vld [vmem:[%s1 + $0x558] sm:$0xff]
  %v586 = vld [vmem:[%s1 + $0x560] sm:$0xff]
  %v587 = vld [vmem:[%s1 + $0x568] sm:$0xff]
  %v588 = vld [vmem:[%s1 + $0x570] sm:$0xff]
  %v589 = vld [vmem:[%s1 + $0x578] sm:$0xff]
  %v590 = vld [vmem:[%s1 + $0x580] sm:$0xff]
  %v591 = vld [vmem:[%s1 + $0x588] sm:$0xff]
  %v592 = vld [vmem:[%s1 + $0x590] sm:$0xff]
  %v593 = vld [vmem:[%s1 + $0x598] sm:$0xff]
  %v594 = vld [vmem:[%s1 + $0x5a0] sm:$0xff]
  %v595 = vld [vmem:[%s1 + $0x5a8] sm:$0xff]
  %v596 = vld [vmem:[%s1 + $0x5b0] sm:$0xff]
  %v597 = vld [vmem:[%s1 + $0x5b8] sm:$0xff]
  %v598 = vld [vmem:[%s1 + $0x5c0] sm:$0xff]
  %v599 = vld [vmem:[%s1 + $0x5c8] sm:$0xff]
  %v600 = vld [vmem:[%s1 + $0x5d0] sm:$0xff]
  %v601 = vld [vmem:[%s1 + $0x5d8] sm:$0xff]
  %v602 = vld [vmem:[%s1 + $0x5e0] sm:$0xff]
  %v603 = vld [vmem:[%s1 + $0x5e8] sm:$0xff]
  %v604 = vld [vmem:[%s1 + $0x5f0] sm:$0xff]
  %v605 = vld [vmem:[%s1 + $0x5f8] sm:$0xff]
  %v606 = vld [vmem:[%s1 + $0x600] sm:$0xff]
  %v607 = vld [vmem:[%s1 + $0x608] sm:$0xff]
  %v608 = vld [vmem:[%s1 + $0x610] sm:$0xff]
  %v609 = vld [vmem:[%s1 + $0x618] sm:$0xff]
  %v610 = vld [vmem:[%s1 + $0x620] sm:$0xff]
  %v611 = vld [vmem:[%s1 + $0x628] sm:$0xff]
  %v612 = vld [vmem:[%s1 + $0x630] sm:$0xff]
  %v613 = vld [vmem:[%s1 + $0x638] sm:$0xff]
  %v614 = vld [vmem:[%s1 + $0x640] sm:$0xff]
  %v615 = vld [vmem:[%s1 + $0x648] sm:$0xff]
  %v616 = vld [vmem:[%s1 + $0x650] sm:$0xff]
  %v617 = vld [vmem:[%s1 + $0x658] sm:$0xff]
  %v618 = vld [vmem:[%s1 + $0x660] sm:$0xff]
  %v619 = vld [vmem:[%s1 + $0x668] sm:$0xff]
  %v620 = vld [vmem:[%s1 + $0x670] sm:$0xff]
  %v621 = vld [vmem:[%s1 + $0x678] sm:$0xff]
  %v622 = vld [vmem:[%s1 + $0x680] sm:$0xff]
  %v623 = vld [vmem:[%s1 + $0x688] sm:$0xff]
  %v624 = vld [vmem:[%s1 + $0x690] sm:$0xff]
  %v625 = vld [vmem:[%s1 + $0x698] sm:$0xff]
  %v626 = vld [vmem:[%s1 + $0x6a0] sm:$0xff]
  %v627 = vld [vmem:[%s1 + $0x6a8] sm:$0xff]
  %v628 = vld [vmem:[%s1 + $0x6b0] sm:$0xff]
  %v629 = vld [vmem:[%s1 + $0x6b8] sm:$0xff]
  %v630 = vld [vmem:[%s1 + $0x6c0] sm:$0xff]
  %v631 = vld [vmem:[%s1 + $0x6c8] sm:$0xff]
  %v632 = vld [vmem:[%s1 + $0x6d0] sm:$0xff]
  %v633 = vld [vmem:[%s1 + $0x6d8] sm:$0xff]
  %v634 = vld [vmem:[%s1 + $0x6e0] sm:$0xff]
  %v635 = vld [vmem:[%s1 + $0x6e8] sm:$0xff]
  %v636 = vld [vmem:[%s1 + $0x6f0] sm:$0xff]
  %v637 = vld [vmem:[%s1 + $0x6f8] sm:$0xff]
  %v638 = vld [vmem:[%s1 + $0x700] sm:$0xff]
  %v639 = vld [vmem:[%s1 + $0x708] sm:$0xff]
  %v640 = vld [vmem:[%s1 + $0x710] sm:$0xff]
  %v641 = vld [vmem:[%s1 + $0x718] sm:$0xff]
  %v642 = vld [vmem:[%s1 + $0x720] sm:$0xff]
  %v643 = vld [vmem:[%s1 + $0x728] sm:$0xff]
  %v644 = vld [vmem:[%s1 + $0x730] sm:$0xff]
  %v645 = vld [vmem:[%s1 + $0x738] sm:$0xff]
  %v646 = vld [vmem:[%s1 + $0x740] sm:$0xff]
  %v647 = vld [vmem:[%s1 + $0x748] sm:$0xff]
  %v648 = vld [vmem:[%s1 + $0x750] sm:$0xff]
  %v649 = vld [vmem:[%s1 + $0x758] sm:$0xff]
  %v650 = vld [vmem:[%s1 + $0x760] sm:$0xff]
  %v651 = vld [vmem:[%s1 + $0x768] sm:$0xff]
  %v652 = vld [vmem:[%s1 + $0x770] sm:$0xff]
  %v653 = vld [vmem:[%s1 + $0x778] sm:$0xff]
  %v654 = vld [vmem:[%s1 + $0x780] sm:$0xff]
  %v655 = vld [vmem:[%s1 + $0x788] sm:$0xff]
  %v656 = vld [vmem:[%s1 + $0x790] sm:$0xff]
  %v657 = vld [vmem:[%s1 + $0x798] sm:$0xff]
  %v658 = vld [vmem:[%s1 + $0x7a0] sm:$0xff]
  %v659 = vld [vmem:[%s1 + $0x7a8] sm:$0xff]
  %v660 = vld [vmem:[%s1 + $0x7b0] sm:$0xff]
  %v661 = vld [vmem:[%s1 + $0x7b8] sm:$0xff]
  %v662 = vld [vmem:[%s1 + $0x7c0] sm:$0xff]
  %v663 = vld [vmem:[%s1 + $0x7c8] sm:$0xff]
  %v664 = vld [vmem:[%s1 + $0x7d0] sm:$0xff]
  %v665 = vld [vmem:[%s1 + $0x7d8] sm:$0xff]
  %v666 = vld [vmem:[%s1 + $0x7e0] sm:$0xff]
  %v667 = vld [vmem:[%s1 + $0x7e8] sm:$0xff]
  %v668 = vld [vmem:[%s1 + $0x7f0] sm:$0xff]
  %v669 = vld [vmem:[%s1 + $0x7f8] sm:$0xff]
  %v670 = vld [vmem:[%s1 + $0x800] sm:$0xff]
  %v671 = vld [vmem:[%s1 + $0x808] sm:$0xff]
  %v672 = vld [vmem:[%s1 + $0x810] sm:$0xff]
  %v673 = vld [vmem:[%s1 + $0x818] sm:$0xff]
  %v674 = vld [vmem:[%s1 + $0x820] sm:$0xff]
  %v675 = vld [vmem:[%s1 + $0x828] sm:$0xff]
  %v676 = vld [vmem:[%s1 + $0x830] sm:$0xff]
  %v677 = vld [vmem:[%s1 + $0x838] sm:$0xff]
  %v678 = vld [vmem:[%s1 + $0x840] sm:$0xff]
  %v679 = vld [vmem:[%s1 + $0x848] sm:$0xff]
  %v680 = vld [vmem:[%s1 + $0x850] sm:$0xff]
  %v681 = vld [vmem:[%s1 + $0x858] sm:$0xff]
  %v682 = vld [vmem:[%s1 + $0x860] sm:$0xff]
  %v683 = vld [vmem:[%s1 + $0x868] sm:$0xff]
  %v684 = vld [vmem:[%s1 + $0x870] sm:$0xff]
  %v685 = vld [vmem:[%s1 + $0x878] sm:$0xff]
  %v686 = vld [vmem:[%s1 + $0x880] sm:$0xff]
  %v687 = vld [vmem:[%s1 + $0x888] sm:$0xff]
  %v688 = vld [vmem:[%s1 + $0x890] sm:$0xff]
  %v689 = vld [vmem:[%s1 + $0x898] sm:$0xff]
  %v690 = vld [vmem:[%s1 + $0x8a0] sm:$0xff]
  %v691 = vld [vmem:[%s1 + $0x8a8] sm:$0xff]
  %v692 = vld [vmem:[%s1 + $0x8b0] sm:$0xff]
  %v693 = vld [vmem:[%s1 + $0x8b8] sm:$0xff]
  %v694 = vld [vmem:[%s1 + $0x8c0] sm:$0xff]
  %v695 = vld [vmem:[%s1 + $0x8c8] sm:$0xff]
  %v696 = vld [vmem:[%s1 + $0x8d0] sm:$0xff]
  %v697 = vld [vmem:[%s1 + $0x8d8] sm:$0xff]
  %v698 = vld [vmem:[%s1 + $0x8e0] sm:$0xff]
  %v699 = vld [vmem:[%s1 + $0x8e8] sm:$0xff]
  %v700 = vld [vmem:[%s1 + $0x8f0] sm:$0xff]
  %v701 = vld [vmem:[%s1 + $0x8f8] sm:$0xff]
  %v702 = vld [vmem:[%s1 + $0x900] sm:$0xff]
  %v703 = vld [vmem:[%s1 + $0x908] sm:$0xff]
  %v704 = vld [vmem:[%s1 + $0x910] sm:$0xff]
  %v705 = vld [vmem:[%s1 + $0x918] sm:$0xff]
  %v706 = vld [vmem:[%s1 + $0x920] sm:$0xff]
  %v707 = vld [vmem:[%s1 + $0x928] sm:$0xff]
  %v708 = vld [vmem:[%s1 + $0x930] sm:$0xff]
  %v709 = vld [vmem:[%s1 + $0x938] sm:$0xff]
  %v710 = vld [vmem:[%s1 + $0x940] sm:$0xff]
  %v711 = vld [vmem:[%s1 + $0x948] sm:$0xff]
  %v712 = vld [vmem:[%s1 + $0x950] sm:$0xff]
  %v713 = vld [vmem:[%s1 + $0x958] sm:$0xff]
  %v714 = vld [vmem:[%s1 + $0x960] sm:$0xff]
  %v715 = vld [vmem:[%s1 + $0x968] sm:$0xff]
  %v716 = vld [vmem:[%s1 + $0x970] sm:$0xff]
  %v717 = vld [vmem:[%s1 + $0x978] sm:$0xff]
  %v718 = vld [vmem:[%s1 + $0x980] sm:$0xff]
  %v719 = vld [vmem:[%s1 + $0x988] sm:$0xff]
  %v720 = vld [vmem:[%s1 + $0x990] sm:$0xff]
  %v721 = vld [vmem:[%s1 + $0x998] sm:$0xff]
  %v722 = vld [vmem:[%s1 + $0x9a0] sm:$0xff]
  %v723 = vld [vmem:[%s1 + $0x9a8] sm:$0xff]
  %v724 = vld [vmem:[%s1 + $0x9b0] sm:$0xff]
  %v725 = vld [vmem:[%s1 + $0x9b8] sm:$0xff]
  %v726 = vld [vmem:[%s1 + $0x9c0] sm:$0xff]
  %v727 = vld [vmem:[%s1 + $0x9c8] sm:$0xff]
  %v728 = vld [vmem:[%s1 + $0x9d0] sm:$0xff]
  %v729 = vld [vmem:[%s1 + $0x9d8] sm:$0xff]
  %v730 = vld [vmem:[%s1 + $0x9e0] sm:$0xff]
  %v731 = vld [vmem:[%s1 + $0x9e8] sm:$0xff]
  %v732 = vld [vmem:[%s1 + $0x9f0] sm:$0xff]
  %v733 = vld [vmem:[%s1 + $0x9f8] sm:$0xff]
  %v734 = vld [vmem:[%s1 + $0xa00] sm:$0xff]
  %v735 = vld [vmem:[%s1 + $0xa08] sm:$0xff]
  %v736 = vld [vmem:[%s1 + $0xa10] sm:$0xff]
  %v737 = vld [vmem:[%s1 + $0xa18] sm:$0xff]
  %v738 = vld [vmem:[%s1 + $0xa20] sm:$0xff]
  %v739 = vld [vmem:[%s1 + $0xa28] sm:$0xff]
  %v740 = vld [vmem:[%s1 + $0xa30] sm:$0xff]
  %v741 = vld [vmem:[%s1 + $0xa38] sm:$0xff]
  %v742 = vld [vmem:[%s1 + $0xa40] sm:$0xff]
  %v743 = vld [vmem:[%s1 + $0xa48] sm:$0xff]
  %v744 = vld [vmem:[%s1 + $0xa50] sm:$0xff]
  %v745 = vld [vmem:[%s1 + $0xa58] sm:$0xff]
  %v746 = vld [vmem:[%s1 + $0xa60] sm:$0xff]
  %v747 = vld [vmem:[%s1 + $0xa68] sm:$0xff]
  %v748 = vld [vmem:[%s1 + $0xa70] sm:$0xff]
  %v749 = vld [vmem:[%s1 + $0xa78] sm:$0xff]
  %v750 = vld [vmem:[%s1 + $0xa80] sm:$0xff]
  %v751 = vld [vmem:[%s1 + $0xa88] sm:$0xff]
  %v752 = vld [vmem:[%s1 + $0xa90] sm:$0xff]
  %v753 = vld [vmem:[%s1 + $0xa98] sm:$0xff]
  %v754 = vld [vmem:[%s1 + $0xaa0] sm:$0xff]
  %v755 = vld [vmem:[%s1 + $0xaa8] sm:$0xff]
  %v756 = vld [vmem:[%s1 + $0xab0] sm:$0xff]
  %v757 = vld [vmem:[%s1 + $0xab8] sm:$0xff]
  %v758 = vld [vmem:[%s1 + $0xac0] sm:$0xff]
  %v759 = vld [vmem:[%s1 + $0xac8] sm:$0xff]
  %v760 = vld [vmem:[%s1 + $0xad0] sm:$0xff]
  %v761 = vld [vmem:[%s1 + $0xad8] sm:$0xff]
  %v762 = vld [vmem:[%s1 + $0xae0] sm:$0xff]
  %v763 = vld [vmem:[%s1 + $0xae8] sm:$0xff]
  %v764 = vld [vmem:[%s1 + $0xaf0] sm:$0xff]
  %v765 = vld [vmem:[%s1 + $0xaf8] sm:$0xff]
  %v766 = vld [vmem:[%s1 + $0xb00] sm:$0xff]
  %v767 = vld [vmem:[%s1 + $0xb08] sm:$0xff]
  %v768 = vld [vmem:[%s1 + $0xb10] sm:$0xff]
  %v769 = vld [vmem:[%s1 + $0xb18] sm:$0xff]
  %v770 = vld [vmem:[%s1 + $0xb20] sm:$0xff]
  %v771 = vld [vmem:[%s1 + $0xb28] sm:$0xff]
  %v772 = vld [vmem:[%s1 + $0xb30] sm:$0xff]
  %v773 = vld [vmem:[%s1 + $0xb38] sm:$0xff]
  %v774 = vld [vmem:[%s1 + $0xb40] sm:$0xff]
  %v775 = vld [vmem:[%s1 + $0xb48] sm:$0xff]
  %v776 = vld [vmem:[%s1 + $0xb50] sm:$0xff]
  %v777 = vld [vmem:[%s1 + $0xb58] sm:$0xff]
  %v778 = vld [vmem:[%s1 + $0xb60] sm:$0xff]
  %v779 = vld [vmem:[%s1 + $0xb68] sm:$0xff]
  %v780 = vld [vmem:[%s1 + $0xb70] sm:$0xff]
  %v781 = vld [vmem:[%s1 + $0xb78] sm:$0xff]
  %v782 = vld [vmem:[%s1 + $0xb80] sm:$0xff]
  %v783 = vld [vmem:[%s1 + $0xb88] sm:$0xff]
  %v784 = vld [vmem:[%s1 + $0xb90] sm:$0xff]
  %v785 = vld [vmem:[%s1 + $0xb98] sm:$0xff]
  %v786 = vld [vmem:[%s1 + $0xba0] sm:$0xff]
  %v787 = vld [vmem:[%s1 + $0xba8] sm:$0xff]
  %v788 = vld [vmem:[%s1 + $0xbb0] sm:$0xff]
  %v789 = vld [vmem:[%s1 + $0xbb8] sm:$0xff]
  %v790 = vld [vmem:[%s1 + $0xbc0] sm:$0xff]
  %v791 = vld [vmem:[%s1 + $0xbc8] sm:$0xff]
  %v792 = vld [vmem:[%s1 + $0xbd0] sm:$0xff]
  %v793 = vld [vmem:[%s1 + $0xbd8] sm:$0xff]
  %v794 = vld [vmem:[%s1 + $0xbe0] sm:$0xff]
  %v795 = vld [vmem:[%s1 + $0xbe8] sm:$0xff]
  %v796 = vld [vmem:[%s1 + $0xbf0] sm:$0xff]
  %v797 = vld [vmem:[%s1 + $0xbf8] sm:$0xff]
  %v798 = vld [vmem:[%s1 + $0xc00] sm:$0xff]
  %v799 = vld [vmem:[%s1 + $0xc08] sm:$0xff]
  %v800 = vld [vmem:[%s1 + $0xc10] sm:$0xff]
  %v801 = vld [vmem:[%s1 + $0xc18] sm:$0xff]
  %v802 = vld [vmem:[%s1 + $0xc20] sm:$0xff]
  %v803 = vld [vmem:[%s1 + $0xc28] sm:$0xff]
  %v804 = vld [vmem:[%s1 + $0xc30] sm:$0xff]
  %v805 = vld [vmem:[%s1 + $0xc38] sm:$0xff]
  %v806 = vld [vmem:[%s1 + $0xc40] sm:$0xff]
  %v807 = vld [vmem:[%s1 + $0xc48] sm:$0xff]
  %v808 = vld [vmem:[%s1 + $0xc50] sm:$0xff]
  %v809 = vld [vmem:[%s1 + $0xc58] sm:$0xff]
  %v810 = vld [vmem:[%s1 + $0xc60] sm:$0xff]
  %v811 = vld [vmem:[%s1 + $0xc68] sm:$0xff]
  %v812 = vld [vmem:[%s1 + $0xc70] sm:$0xff]
  %v813 = vld [vmem:[%s1 + $0xc78] sm:$0xff]
  %v814 = vld [vmem:[%s2] sm:$0x1]
  %v816 = vlaneseq
  %v817 = vshrl.u32 %v816, 7
  %v818 = vsub.s32 0, %v817
  %v819 = vrot.slane %v814, %v818
  %821 = vmatprep.subr.mxu0 0.0
  %822 = vmatpush1.msra.mxu0 %v429
  %823 = vmatprep.subr.mxu0 0.0
  %824 = vmatpush1.msra.mxu0 %v428
  %825 = vmatprep.subr.mxu0 0.0
  %826 = vmatpush1.msra.mxu0 %v427
  %827 = vmatprep.subr.mxu0 0.0
  %828 = vmatpush1.msra.mxu0 %v426
  %829 = vmatprep.subr.mxu0 0.0
  %830 = vmatpush1.msra.mxu0 %v425
  %831 = vmatprep.subr.mxu0 0.0
  %832 = vmatpush1.msra.mxu0 %v424
  %833 = vmatprep.subr.mxu0 0.0
  %834 = vmatpush1.msra.mxu0 %v423
  %835 = vmatprep.subr.mxu0 0.0
  %836 = vmatpush1.msra.mxu0 %v422
  %837 = vmatprep.subr.mxu0 0.0
  %838 = vmatpush1.msra.mxu0 %v421
  %839 = vmatprep.subr.mxu0 0.0
  %840 = vmatpush1.msra.mxu0 %v420
  %841 = vmatprep.subr.mxu0 0.0
  %842 = vmatpush1.msra.mxu0 %v419
  %843 = vmatprep.subr.mxu0 0.0
  %844 = vmatpush1.msra.mxu0 %v418
  %845 = vmatprep.subr.mxu0 0.0
  %846 = vmatpush1.msra.mxu0 %v417
  %847 = vmatprep.subr.mxu0 0.0
  %848 = vmatpush1.msra.mxu0 %v416
  %849 = vmatprep.subr.mxu0 0.0
  %850 = vmatpush1.msra.mxu0 %v415
  %851 = vmatprep.subr.mxu0 0.0
  %852 = vmatpush1.msra.mxu0 %v414
  %853 = vmatprep.subr.mxu0 0.0
  %854 = vmatpush2.msra.mxu0 %v445
  %855 = vmatprep.subr.mxu0 0.0
  %856 = vmatpush2.msra.mxu0 %v444
  %857 = vmatprep.subr.mxu0 0.0
  %858 = vmatpush2.msra.mxu0 %v443
  %859 = vmatprep.subr.mxu0 0.0
  %860 = vmatpush2.msra.mxu0 %v442
  %861 = vmatprep.subr.mxu0 0.0
  %862 = vmatpush2.msra.mxu0 %v441
  %863 = vmatprep.subr.mxu0 0.0
  %864 = vmatpush2.msra.mxu0 %v440
  %865 = vmatprep.subr.mxu0 0.0
  %866 = vmatpush2.msra.mxu0 %v439
  %867 = vmatprep.subr.mxu0 0.0
  %868 = vmatpush2.msra.mxu0 %v438
  %869 = vmatprep.subr.mxu0 0.0
  %870 = vmatpush2.msra.mxu0 %v437
  %871 = vmatprep.subr.mxu0 0.0
  %872 = vmatpush2.msra.mxu0 %v436
  %873 = vmatprep.subr.mxu0 0.0
  %874 = vmatpush2.msra.mxu0 %v435
  %875 = vmatprep.subr.mxu0 0.0
  %876 = vmatpush2.msra.mxu0 %v434
  %877 = vmatprep.subr.mxu0 0.0
  %878 = vmatpush2.msra.mxu0 %v433
  %879 = vmatprep.subr.mxu0 0.0
  %880 = vmatpush2.msra.mxu0 %v432
  %881 = vmatprep.subr.mxu0 0.0
  %882 = vmatpush2.msra.mxu0 %v431
  %883 = vmatprep.subr.mxu0 0.0
  %884 = vmatpush2.msra.mxu0 %v430
  %885 = vmatprep.mubr.f32.mxu0 %v15
  %886 = vmatmul.mubr.f32.gmra.mxu0 %v14
  %v887 = vpop.f32.mrf.mxu0
  %v888 = vadd.f32 %v819, %v887
  %v889 = vpop.f32.mrf.mxu0
  %890 = vmatprep.mubr.f32.mxu0 %v40
  %891 = vmatmul.mubr.f32.gmra.mxu0 %v39
  %v892 = vpop.f32.mrf.mxu0
  %v893 = vadd.f32 %v819, %v892
  %v894 = vpop.f32.mrf.mxu0
  %895 = vmatprep.mubr.f32.mxu0 %v65
  %896 = vmatmul.mubr.f32.gmra.mxu0 %v64
  %v897 = vpop.f32.mrf.mxu0
  %v898 = vadd.f32 %v819, %v897
  %v899 = vpop.f32.mrf.mxu0
  %900 = vmatprep.mubr.f32.mxu0 %v90
  %901 = vmatmul.mubr.f32.gmra.mxu0 %v89
  %v902 = vpop.f32.mrf.mxu0
  %v903 = vadd.f32 %v819, %v902
  %v904 = vpop.f32.mrf.mxu0
  %905 = vmatprep.mubr.f32.mxu0 %v115
  %906 = vmatmul.mubr.f32.gmra.mxu0 %v114
  %v907 = vpop.f32.mrf.mxu0
  %v908 = vadd.f32 %v819, %v907
  %v909 = vpop.f32.mrf.mxu0
  %910 = vmatprep.mubr.f32.mxu0 %v140
  %911 = vmatmul.mubr.f32.gmra.mxu0 %v139
  %v912 = vpop.f32.mrf.mxu0
  %v913 = vadd.f32 %v819, %v912
  %v914 = vpop.f32.mrf.mxu0
  %915 = vmatprep.mubr.f32.mxu0 %v165
  %916 = vmatmul.mubr.f32.gmra.mxu0 %v164
  %v917 = vpop.f32.mrf.mxu0
  %v918 = vadd.f32 %v819, %v917
  %v919 = vpop.f32.mrf.mxu0
  %920 = vmatprep.mubr.f32.mxu0 %v190
  %921 = vmatmul.mubr.f32.gmra.mxu0 %v189
  %v922 = vpop.f32.mrf.mxu0
  %v923 = vadd.f32 %v819, %v922
  %v924 = vpop.f32.mrf.mxu0
  %925 = vmatprep.mubr.f32.mxu0 %v215
  %926 = vmatmul.mubr.f32.gmra.mxu0 %v214
  %v927 = vpop.f32.mrf.mxu0
  %v928 = vadd.f32 %v819, %v927
  %v929 = vpop.f32.mrf.mxu0
  %930 = vmatprep.mubr.f32.mxu0 %v240
  %931 = vmatmul.mubr.f32.gmra.mxu0 %v239
  %v932 = vpop.f32.mrf.mxu0
  %v933 = vadd.f32 %v819, %v932
  %v934 = vpop.f32.mrf.mxu0
  %935 = vmatprep.mubr.f32.mxu0 %v265
  %936 = vmatmul.mubr.f32.gmra.mxu0 %v264
  %v937 = vpop.f32.mrf.mxu0
  %v938 = vadd.f32 %v819, %v937
  %v939 = vpop.f32.mrf.mxu0
  %940 = vmatprep.mubr.f32.mxu0 %v290
  %941 = vmatmul.mubr.f32.gmra.mxu0 %v289
  %v942 = vpop.f32.mrf.mxu0
  %v943 = vadd.f32 %v819, %v942
  %v944 = vpop.f32.mrf.mxu0
  %945 = vmatprep.mubr.f32.mxu0 %v315
  %946 = vmatmul.mubr.f32.gmra.mxu0 %v314
  %v947 = vpop.f32.mrf.mxu0
  %v948 = vadd.f32 %v819, %v947
  %v949 = vpop.f32.mrf.mxu0
  %950 = vmatprep.mubr.f32.mxu0 %v340
  %951 = vmatmul.mubr.f32.gmra.mxu0 %v339
  %v952 = vpop.f32.mrf.mxu0
  %v953 = vadd.f32 %v819, %v952
  %v954 = vpop.f32.mrf.mxu0
  %955 = vmatprep.mubr.f32.mxu0 %v365
  %956 = vmatmul.mubr.f32.gmra.mxu0 %v364
  %v957 = vpop.f32.mrf.mxu0
  %v958 = vadd.f32 %v819, %v957
  %v959 = vpop.f32.mrf.mxu0
  %960 = vmatprep.mubr.f32.mxu0 %v390
  %961 = vmatmul.mubr.f32.gmra.mxu0 %v389
  %v962 = vpop.f32.mrf.mxu0
  %v963 = vadd.f32 %v819, %v962
  %v964 = vpop.f32.mrf.mxu0
  %965 = vdwg.mxu0
  %966 = vmatprep.subr.mxu0 0.0
  %967 = vmatpush1.msra.mxu0 %v461
  %968 = vmatprep.subr.mxu0 0.0
  %969 = vmatpush1.msra.mxu0 %v460
  %970 = vmatprep.subr.mxu0 0.0
  %971 = vmatpush1.msra.mxu0 %v459
  %972 = vmatprep.subr.mxu0 0.0
  %973 = vmatpush1.msra.mxu0 %v458
  %974 = vmatprep.subr.mxu0 0.0
  %975 = vmatpush1.msra.mxu0 %v457
  %976 = vmatprep.subr.mxu0 0.0
  %977 = vmatpush1.msra.mxu0 %v456
  %978 = vmatprep.subr.mxu0 0.0
  %979 = vmatpush1.msra.mxu0 %v455
  %980 = vmatprep.subr.mxu0 0.0
  %981 = vmatpush1.msra.mxu0 %v454
  %982 = vmatprep.subr.mxu0 0.0
  %983 = vmatpush1.msra.mxu0 %v453
  %984 = vmatprep.subr.mxu0 0.0
  %985 = vmatpush1.msra.mxu0 %v452
  %986 = vmatprep.subr.mxu0 0.0
  %987 = vmatpush1.msra.mxu0 %v451
  %988 = vmatprep.subr.mxu0 0.0
  %989 = vmatpush1.msra.mxu0 %v450
  %990 = vmatprep.subr.mxu0 0.0
  %991 = vmatpush1.msra.mxu0 %v449
  %992 = vmatprep.subr.mxu0 0.0
  %993 = vmatpush1.msra.mxu0 %v448
  %994 = vmatprep.subr.mxu0 0.0
  %995 = vmatpush1.msra.mxu0 %v447
  %996 = vmatprep.subr.mxu0 0.0
  %997 = vmatpush1.msra.mxu0 %v446
  %998 = vmatprep.subr.mxu0 0.0
  %999 = vmatpush2.msra.mxu0 %v477
  %1000 = vmatprep.subr.mxu0 0.0
  %1001 = vmatpush2.msra.mxu0 %v476
  %1002 = vmatprep.subr.mxu0 0.0
  %1003 = vmatpush2.msra.mxu0 %v475
  %1004 = vmatprep.subr.mxu0 0.0
  %1005 = vmatpush2.msra.mxu0 %v474
  %1006 = vmatprep.subr.mxu0 0.0
  %1007 = vmatpush2.msra.mxu0 %v473
  %1008 = vmatprep.subr.mxu0 0.0
  %1009 = vmatpush2.msra.mxu0 %v472
  %1010 = vmatprep.subr.mxu0 0.0
  %1011 = vmatpush2.msra.mxu0 %v471
  %1012 = vmatprep.subr.mxu0 0.0
  %1013 = vmatpush2.msra.mxu0 %v470
  %1014 = vmatprep.subr.mxu0 0.0
  %1015 = vmatpush2.msra.mxu0 %v469
  %1016 = vmatprep.subr.mxu0 0.0
  %1017 = vmatpush2.msra.mxu0 %v468
  %1018 = vmatprep.subr.mxu0 0.0
  %1019 = vmatpush2.msra.mxu0 %v467
  %1020 = vmatprep.subr.mxu0 0.0
  %1021 = vmatpush2.msra.mxu0 %v466
  %1022 = vmatprep.subr.mxu0 0.0
  %1023 = vmatpush2.msra.mxu0 %v465
  %1024 = vmatprep.subr.mxu0 0.0
  %1025 = vmatpush2.msra.mxu0 %v464
  %1026 = vmatprep.subr.mxu0 0.0
  %1027 = vmatpush2.msra.mxu0 %v463
  %1028 = vmatprep.subr.mxu0 0.0
  %1029 = vmatpush2.msra.mxu0 %v462
  %1030 = vmatprep.mubr.f32.mxu0 %v17
  %1031 = vmatmul.mubr.f32.gmra.mxu0 %v16
  %v1032 = vpop.f32.mrf.mxu0
  %v1033 = vadd.f32 %v888, %v1032
  %v1034 = vpop.f32.mrf.mxu0
  %1035 = vmatprep.mubr.f32.mxu0 %v42
  %1036 = vmatmul.mubr.f32.gmra.mxu0 %v41
  %v1037 = vpop.f32.mrf.mxu0
  %v1038 = vadd.f32 %v893, %v1037
  %v1039 = vpop.f32.mrf.mxu0
  %1040 = vmatprep.mubr.f32.mxu0 %v67
  %1041 = vmatmul.mubr.f32.gmra.mxu0 %v66
  %v1042 = vpop.f32.mrf.mxu0
  %v1043 = vadd.f32 %v898, %v1042
  %v1044 = vpop.f32.mrf.mxu0
  %1045 = vmatprep.mubr.f32.mxu0 %v92
  %1046 = vmatmul.mubr.f32.gmra.mxu0 %v91
  %v1047 = vpop.f32.mrf.mxu0
  %v1048 = vadd.f32 %v903, %v1047
  %v1049 = vpop.f32.mrf.mxu0
  %1050 = vmatprep.mubr.f32.mxu0 %v117
  %1051 = vmatmul.mubr.f32.gmra.mxu0 %v116
  %v1052 = vpop.f32.mrf.mxu0
  %v1053 = vadd.f32 %v908, %v1052
  %v1054 = vpop.f32.mrf.mxu0
  %1055 = vmatprep.mubr.f32.mxu0 %v142
  %1056 = vmatmul.mubr.f32.gmra.mxu0 %v141
  %v1057 = vpop.f32.mrf.mxu0
  %v1058 = vadd.f32 %v913, %v1057
  %v1059 = vpop.f32.mrf.mxu0
  %1060 = vmatprep.mubr.f32.mxu0 %v167
  %1061 = vmatmul.mubr.f32.gmra.mxu0 %v166
  %v1062 = vpop.f32.mrf.mxu0
  %v1063 = vadd.f32 %v918, %v1062
  %v1064 = vpop.f32.mrf.mxu0
  %1065 = vmatprep.mubr.f32.mxu0 %v192
  %1066 = vmatmul.mubr.f32.gmra.mxu0 %v191
  %v1067 = vpop.f32.mrf.mxu0
  %v1068 = vadd.f32 %v923, %v1067
  %v1069 = vpop.f32.mrf.mxu0
  %1070 = vmatprep.mubr.f32.mxu0 %v217
  %1071 = vmatmul.mubr.f32.gmra.mxu0 %v216
  %v1072 = vpop.f32.mrf.mxu0
  %v1073 = vadd.f32 %v928, %v1072
  %v1074 = vpop.f32.mrf.mxu0
  %1075 = vmatprep.mubr.f32.mxu0 %v242
  %1076 = vmatmul.mubr.f32.gmra.mxu0 %v241
  %v1077 = vpop.f32.mrf.mxu0
  %v1078 = vadd.f32 %v933, %v1077
  %v1079 = vpop.f32.mrf.mxu0
  %1080 = vmatprep.mubr.f32.mxu0 %v267
  %1081 = vmatmul.mubr.f32.gmra.mxu0 %v266
  %v1082 = vpop.f32.mrf.mxu0
  %v1083 = vadd.f32 %v938, %v1082
  %v1084 = vpop.f32.mrf.mxu0
  %1085 = vmatprep.mubr.f32.mxu0 %v292
  %1086 = vmatmul.mubr.f32.gmra.mxu0 %v291
  %v1087 = vpop.f32.mrf.mxu0
  %v1088 = vadd.f32 %v943, %v1087
  %v1089 = vpop.f32.mrf.mxu0
  %1090 = vmatprep.mubr.f32.mxu0 %v317
  %1091 = vmatmul.mubr.f32.gmra.mxu0 %v316
  %v1092 = vpop.f32.mrf.mxu0
  %v1093 = vadd.f32 %v948, %v1092
  %v1094 = vpop.f32.mrf.mxu0
  %1095 = vmatprep.mubr.f32.mxu0 %v342
  %1096 = vmatmul.mubr.f32.gmra.mxu0 %v341
  %v1097 = vpop.f32.mrf.mxu0
  %v1098 = vadd.f32 %v953, %v1097
  %v1099 = vpop.f32.mrf.mxu0
  %1100 = vmatprep.mubr.f32.mxu0 %v367
  %1101 = vmatmul.mubr.f32.gmra.mxu0 %v366
  %v1102 = vpop.f32.mrf.mxu0
  %v1103 = vadd.f32 %v958, %v1102
  %v1104 = vpop.f32.mrf.mxu0
  %1105 = vmatprep.mubr.f32.mxu0 %v392
  %1106 = vmatmul.mubr.f32.gmra.mxu0 %v391
  %v1107 = vpop.f32.mrf.mxu0
  %v1108 = vadd.f32 %v963, %v1107
  %v1109 = vpop.f32.mrf.mxu0
  %1110 = vdwg.mxu0
  %1111 = vmatprep.subr.mxu0 0.0
  %1112 = vmatpush1.msra.mxu0 %v493
  %1113 = vmatprep.subr.mxu0 0.0
  %1114 = vmatpush1.msra.mxu0 %v492
  %1115 = vmatprep.subr.mxu0 0.0
  %1116 = vmatpush1.msra.mxu0 %v491
  %1117 = vmatprep.subr.mxu0 0.0
  %1118 = vmatpush1.msra.mxu0 %v490
  %1119 = vmatprep.subr.mxu0 0.0
  %1120 = vmatpush1.msra.mxu0 %v489
  %1121 = vmatprep.subr.mxu0 0.0
  %1122 = vmatpush1.msra.mxu0 %v488
  %1123 = vmatprep.subr.mxu0 0.0
  %1124 = vmatpush1.msra.mxu0 %v487
  %1125 = vmatprep.subr.mxu0 0.0
  %1126 = vmatpush1.msra.mxu0 %v486
  %1127 = vmatprep.subr.mxu0 0.0
  %1128 = vmatpush1.msra.mxu0 %v485
  %1129 = vmatprep.subr.mxu0 0.0
  %1130 = vmatpush1.msra.mxu0 %v484
  %1131 = vmatprep.subr.mxu0 0.0
  %1132 = vmatpush1.msra.mxu0 %v483
  %1133 = vmatprep.subr.mxu0 0.0
  %1134 = vmatpush1.msra.mxu0 %v482
  %1135 = vmatprep.subr.mxu0 0.0
  %1136 = vmatpush1.msra.mxu0 %v481
  %1137 = vmatprep.subr.mxu0 0.0
  %1138 = vmatpush1.msra.mxu0 %v480
  %1139 = vmatprep.subr.mxu0 0.0
  %1140 = vmatpush1.msra.mxu0 %v479
  %1141 = vmatprep.subr.mxu0 0.0
  %1142 = vmatpush1.msra.mxu0 %v478
  %1143 = vmatprep.subr.mxu0 0.0
  %1144 = vmatpush2.msra.mxu0 %v509
  %1145 = vmatprep.subr.mxu0 0.0
  %1146 = vmatpush2.msra.mxu0 %v508
  %1147 = vmatprep.subr.mxu0 0.0
  %1148 = vmatpush2.msra.mxu0 %v507
  %1149 = vmatprep.subr.mxu0 0.0
  %1150 = vmatpush2.msra.mxu0 %v506
  %1151 = vmatprep.subr.mxu0 0.0
  %1152 = vmatpush2.msra.mxu0 %v505
  %1153 = vmatprep.subr.mxu0 0.0
  %1154 = vmatpush2.msra.mxu0 %v504
  %1155 = vmatprep.subr.mxu0 0.0
  %1156 = vmatpush2.msra.mxu0 %v503
  %1157 = vmatprep.subr.mxu0 0.0
  %1158 = vmatpush2.msra.mxu0 %v502
  %1159 = vmatprep.subr.mxu0 0.0
  %1160 = vmatpush2.msra.mxu0 %v501
  %1161 = vmatprep.subr.mxu0 0.0
  %1162 = vmatpush2.msra.mxu0 %v500
  %1163 = vmatprep.subr.mxu0 0.0
  %1164 = vmatpush2.msra.mxu0 %v499
  %1165 = vmatprep.subr.mxu0 0.0
  %1166 = vmatpush2.msra.mxu0 %v498
  %1167 = vmatprep.subr.mxu0 0.0
  %1168 = vmatpush2.msra.mxu0 %v497
  %1169 = vmatprep.subr.mxu0 0.0
  %1170 = vmatpush2.msra.mxu0 %v496
  %1171 = vmatprep.subr.mxu0 0.0
  %1172 = vmatpush2.msra.mxu0 %v495
  %1173 = vmatprep.subr.mxu0 0.0
  %1174 = vmatpush2.msra.mxu0 %v494
  %1175 = vmatprep.mubr.f32.mxu0 %v19
  %1176 = vmatmul.mubr.f32.gmra.mxu0 %v18
  %v1177 = vpop.f32.mrf.mxu0
  %v1178 = vadd.f32 %v1033, %v1177
  %v1179 = vpop.f32.mrf.mxu0
  %1180 = vmatprep.mubr.f32.mxu0 %v44
  %1181 = vmatmul.mubr.f32.gmra.mxu0 %v43
  %v1182 = vpop.f32.mrf.mxu0
  %v1183 = vadd.f32 %v1038, %v1182
  %v1184 = vpop.f32.mrf.mxu0
  %1185 = vmatprep.mubr.f32.mxu0 %v69
  %1186 = vmatmul.mubr.f32.gmra.mxu0 %v68
  %v1187 = vpop.f32.mrf.mxu0
  %v1188 = vadd.f32 %v1043, %v1187
  %v1189 = vpop.f32.mrf.mxu0
  %1190 = vmatprep.mubr.f32.mxu0 %v94
  %1191 = vmatmul.mubr.f32.gmra.mxu0 %v93
  %v1192 = vpop.f32.mrf.mxu0
  %v1193 = vadd.f32 %v1048, %v1192
  %v1194 = vpop.f32.mrf.mxu0
  %1195 = vmatprep.mubr.f32.mxu0 %v119
  %1196 = vmatmul.mubr.f32.gmra.mxu0 %v118
  %v1197 = vpop.f32.mrf.mxu0
  %v1198 = vadd.f32 %v1053, %v1197
  %v1199 = vpop.f32.mrf.mxu0
  %1200 = vmatprep.mubr.f32.mxu0 %v144
  %1201 = vmatmul.mubr.f32.gmra.mxu0 %v143
  %v1202 = vpop.f32.mrf.mxu0
  %v1203 = vadd.f32 %v1058, %v1202
  %v1204 = vpop.f32.mrf.mxu0
  %1205 = vmatprep.mubr.f32.mxu0 %v169
  %1206 = vmatmul.mubr.f32.gmra.mxu0 %v168
  %v1207 = vpop.f32.mrf.mxu0
  %v1208 = vadd.f32 %v1063, %v1207
  %v1209 = vpop.f32.mrf.mxu0
  %1210 = vmatprep.mubr.f32.mxu0 %v194
  %1211 = vmatmul.mubr.f32.gmra.mxu0 %v193
  %v1212 = vpop.f32.mrf.mxu0
  %v1213 = vadd.f32 %v1068, %v1212
  %v1214 = vpop.f32.mrf.mxu0
  %1215 = vmatprep.mubr.f32.mxu0 %v219
  %1216 = vmatmul.mubr.f32.gmra.mxu0 %v218
  %v1217 = vpop.f32.mrf.mxu0
  %v1218 = vadd.f32 %v1073, %v1217
  %v1219 = vpop.f32.mrf.mxu0
  %1220 = vmatprep.mubr.f32.mxu0 %v244
  %1221 = vmatmul.mubr.f32.gmra.mxu0 %v243
  %v1222 = vpop.f32.mrf.mxu0
  %v1223 = vadd.f32 %v1078, %v1222
  %v1224 = vpop.f32.mrf.mxu0
  %1225 = vmatprep.mubr.f32.mxu0 %v269
  %1226 = vmatmul.mubr.f32.gmra.mxu0 %v268
  %v1227 = vpop.f32.mrf.mxu0
  %v1228 = vadd.f32 %v1083, %v1227
  %v1229 = vpop.f32.mrf.mxu0
  %1230 = vmatprep.mubr.f32.mxu0 %v294
  %1231 = vmatmul.mubr.f32.gmra.mxu0 %v293
  %v1232 = vpop.f32.mrf.mxu0
  %v1233 = vadd.f32 %v1088, %v1232
  %v1234 = vpop.f32.mrf.mxu0
  %1235 = vmatprep.mubr.f32.mxu0 %v319
  %1236 = vmatmul.mubr.f32.gmra.mxu0 %v318
  %v1237 = vpop.f32.mrf.mxu0
  %v1238 = vadd.f32 %v1093, %v1237
  %v1239 = vpop.f32.mrf.mxu0
  %1240 = vmatprep.mubr.f32.mxu0 %v344
  %1241 = vmatmul.mubr.f32.gmra.mxu0 %v343
  %v1242 = vpop.f32.mrf.mxu0
  %v1243 = vadd.f32 %v1098, %v1242
  %v1244 = vpop.f32.mrf.mxu0
  %1245 = vmatprep.mubr.f32.mxu0 %v369
  %1246 = vmatmul.mubr.f32.gmra.mxu0 %v368
  %v1247 = vpop.f32.mrf.mxu0
  %v1248 = vadd.f32 %v1103, %v1247
  %v1249 = vpop.f32.mrf.mxu0
  %1250 = vmatprep.mubr.f32.mxu0 %v394
  %1251 = vmatmul.mubr.f32.gmra.mxu0 %v393
  %v1252 = vpop.f32.mrf.mxu0
  %v1253 = vadd.f32 %v1108, %v1252
  %v1254 = vpop.f32.mrf.mxu0
  %1255 = vdwg.mxu0
  %1256 = vmatprep.subr.mxu0 0.0
  %1257 = vmatpush1.msra.mxu0 %v525
  %1258 = vmatprep.subr.mxu0 0.0
  %1259 = vmatpush1.msra.mxu0 %v524
  %1260 = vmatprep.subr.mxu0 0.0
  %1261 = vmatpush1.msra.mxu0 %v523
  %1262 = vmatprep.subr.mxu0 0.0
  %1263 = vmatpush1.msra.mxu0 %v522
  %1264 = vmatprep.subr.mxu0 0.0
  %1265 = vmatpush1.msra.mxu0 %v521
  %1266 = vmatprep.subr.mxu0 0.0
  %1267 = vmatpush1.msra.mxu0 %v520
  %1268 = vmatprep.subr.mxu0 0.0
  %1269 = vmatpush1.msra.mxu0 %v519
  %1270 = vmatprep.subr.mxu0 0.0
  %1271 = vmatpush1.msra.mxu0 %v518
  %1272 = vmatprep.subr.mxu0 0.0
  %1273 = vmatpush1.msra.mxu0 %v517
  %1274 = vmatprep.subr.mxu0 0.0
  %1275 = vmatpush1.msra.mxu0 %v516
  %1276 = vmatprep.subr.mxu0 0.0
  %1277 = vmatpush1.msra.mxu0 %v515
  %1278 = vmatprep.subr.mxu0 0.0
  %1279 = vmatpush1.msra.mxu0 %v514
  %1280 = vmatprep.subr.mxu0 0.0
  %1281 = vmatpush1.msra.mxu0 %v513
  %1282 = vmatprep.subr.mxu0 0.0
  %1283 = vmatpush1.msra.mxu0 %v512
  %1284 = vmatprep.subr.mxu0 0.0
  %1285 = vmatpush1.msra.mxu0 %v511
  %1286 = vmatprep.subr.mxu0 0.0
  %1287 = vmatpush1.msra.mxu0 %v510
  %1288 = vmatprep.subr.mxu0 0.0
  %1289 = vmatpush2.msra.mxu0 %v541
  %1290 = vmatprep.subr.mxu0 0.0
  %1291 = vmatpush2.msra.mxu0 %v540
  %1292 = vmatprep.subr.mxu0 0.0
  %1293 = vmatpush2.msra.mxu0 %v539
  %1294 = vmatprep.subr.mxu0 0.0
  %1295 = vmatpush2.msra.mxu0 %v538
  %1296 = vmatprep.subr.mxu0 0.0
  %1297 = vmatpush2.msra.mxu0 %v537
  %1298 = vmatprep.subr.mxu0 0.0
  %1299 = vmatpush2.msra.mxu0 %v536
  %1300 = vmatprep.subr.mxu0 0.0
  %1301 = vmatpush2.msra.mxu0 %v535
  %1302 = vmatprep.subr.mxu0 0.0
  %1303 = vmatpush2.msra.mxu0 %v534
  %1304 = vmatprep.subr.mxu0 0.0
  %1305 = vmatpush2.msra.mxu0 %v533
  %1306 = vmatprep.subr.mxu0 0.0
  %1307 = vmatpush2.msra.mxu0 %v532
  %1308 = vmatprep.subr.mxu0 0.0
  %1309 = vmatpush2.msra.mxu0 %v531
  %1310 = vmatprep.subr.mxu0 0.0
  %1311 = vmatpush2.msra.mxu0 %v530
  %1312 = vmatprep.subr.mxu0 0.0
  %1313 = vmatpush2.msra.mxu0 %v529
  %1314 = vmatprep.subr.mxu0 0.0
  %1315 = vmatpush2.msra.mxu0 %v528
  %1316 = vmatprep.subr.mxu0 0.0
  %1317 = vmatpush2.msra.mxu0 %v527
  %1318 = vmatprep.subr.mxu0 0.0
  %1319 = vmatpush2.msra.mxu0 %v526
  %1320 = vmatprep.mubr.f32.mxu0 %v21
  %1321 = vmatmul.mubr.f32.gmra.mxu0 %v20
  %v1322 = vpop.f32.mrf.mxu0
  %v1323 = vadd.f32 %v1178, %v1322
  %v1324 = vpop.f32.mrf.mxu0
  %1325 = vmatprep.mubr.f32.mxu0 %v46
  %1326 = vmatmul.mubr.f32.gmra.mxu0 %v45
  %v1327 = vpop.f32.mrf.mxu0
  %v1328 = vadd.f32 %v1183, %v1327
  %v1329 = vpop.f32.mrf.mxu0
  %1330 = vmatprep.mubr.f32.mxu0 %v71
  %1331 = vmatmul.mubr.f32.gmra.mxu0 %v70
  %v1332 = vpop.f32.mrf.mxu0
  %v1333 = vadd.f32 %v1188, %v1332
  %v1334 = vpop.f32.mrf.mxu0
  %1335 = vmatprep.mubr.f32.mxu0 %v96
  %1336 = vmatmul.mubr.f32.gmra.mxu0 %v95
  %v1337 = vpop.f32.mrf.mxu0
  %v1338 = vadd.f32 %v1193, %v1337
  %v1339 = vpop.f32.mrf.mxu0
  %1340 = vmatprep.mubr.f32.mxu0 %v121
  %1341 = vmatmul.mubr.f32.gmra.mxu0 %v120
  %v1342 = vpop.f32.mrf.mxu0
  %v1343 = vadd.f32 %v1198, %v1342
  %v1344 = vpop.f32.mrf.mxu0
  %1345 = vmatprep.mubr.f32.mxu0 %v146
  %1346 = vmatmul.mubr.f32.gmra.mxu0 %v145
  %v1347 = vpop.f32.mrf.mxu0
  %v1348 = vadd.f32 %v1203, %v1347
  %v1349 = vpop.f32.mrf.mxu0
  %1350 = vmatprep.mubr.f32.mxu0 %v171
  %1351 = vmatmul.mubr.f32.gmra.mxu0 %v170
  %v1352 = vpop.f32.mrf.mxu0
  %v1353 = vadd.f32 %v1208, %v1352
  %v1354 = vpop.f32.mrf.mxu0
  %1355 = vmatprep.mubr.f32.mxu0 %v196
  %1356 = vmatmul.mubr.f32.gmra.mxu0 %v195
  %v1357 = vpop.f32.mrf.mxu0
  %v1358 = vadd.f32 %v1213, %v1357
  %v1359 = vpop.f32.mrf.mxu0
  %1360 = vmatprep.mubr.f32.mxu0 %v221
  %1361 = vmatmul.mubr.f32.gmra.mxu0 %v220
  %v1362 = vpop.f32.mrf.mxu0
  %v1363 = vadd.f32 %v1218, %v1362
  %v1364 = vpop.f32.mrf.mxu0
  %1365 = vmatprep.mubr.f32.mxu0 %v246
  %1366 = vmatmul.mubr.f32.gmra.mxu0 %v245
  %v1367 = vpop.f32.mrf.mxu0
  %v1368 = vadd.f32 %v1223, %v1367
  %v1369 = vpop.f32.mrf.mxu0
  %1370 = vmatprep.mubr.f32.mxu0 %v271
  %1371 = vmatmul.mubr.f32.gmra.mxu0 %v270
  %v1372 = vpop.f32.mrf.mxu0
  %v1373 = vadd.f32 %v1228, %v1372
  %v1374 = vpop.f32.mrf.mxu0
  %1375 = vmatprep.mubr.f32.mxu0 %v296
  %1376 = vmatmul.mubr.f32.gmra.mxu0 %v295
  %v1377 = vpop.f32.mrf.mxu0
  %v1378 = vadd.f32 %v1233, %v1377
  %v1379 = vpop.f32.mrf.mxu0
  %1380 = vmatprep.mubr.f32.mxu0 %v321
  %1381 = vmatmul.mubr.f32.gmra.mxu0 %v320
  %v1382 = vpop.f32.mrf.mxu0
  %v1383 = vadd.f32 %v1238, %v1382
  %v1384 = vpop.f32.mrf.mxu0
  %1385 = vmatprep.mubr.f32.mxu0 %v346
  %1386 = vmatmul.mubr.f32.gmra.mxu0 %v345
  %v1387 = vpop.f32.mrf.mxu0
  %v1388 = vadd.f32 %v1243, %v1387
  %v1389 = vpop.f32.mrf.mxu0
  %1390 = vmatprep.mubr.f32.mxu0 %v371
  %1391 = vmatmul.mubr.f32.gmra.mxu0 %v370
  %v1392 = vpop.f32.mrf.mxu0
  %v1393 = vadd.f32 %v1248, %v1392
  %v1394 = vpop.f32.mrf.mxu0
  %1395 = vmatprep.mubr.f32.mxu0 %v396
  %1396 = vmatmul.mubr.f32.gmra.mxu0 %v395
  %v1397 = vpop.f32.mrf.mxu0
  %v1398 = vadd.f32 %v1253, %v1397
  %v1399 = vpop.f32.mrf.mxu0
  %1400 = vdwg.mxu0
  %1401 = vmatprep.subr.mxu0 0.0
  %1402 = vmatpush1.msra.mxu0 %v557
  %1403 = vmatprep.subr.mxu0 0.0
  %1404 = vmatpush1.msra.mxu0 %v556
  %1405 = vmatprep.subr.mxu0 0.0
  %1406 = vmatpush1.msra.mxu0 %v555
  %1407 = vmatprep.subr.mxu0 0.0
  %1408 = vmatpush1.msra.mxu0 %v554
  %1409 = vmatprep.subr.mxu0 0.0
  %1410 = vmatpush1.msra.mxu0 %v553
  %1411 = vmatprep.subr.mxu0 0.0
  %1412 = vmatpush1.msra.mxu0 %v552
  %1413 = vmatprep.subr.mxu0 0.0
  %1414 = vmatpush1.msra.mxu0 %v551
  %1415 = vmatprep.subr.mxu0 0.0
  %1416 = vmatpush1.msra.mxu0 %v550
  %1417 = vmatprep.subr.mxu0 0.0
  %1418 = vmatpush1.msra.mxu0 %v549
  %1419 = vmatprep.subr.mxu0 0.0
  %1420 = vmatpush1.msra.mxu0 %v548
  %1421 = vmatprep.subr.mxu0 0.0
  %1422 = vmatpush1.msra.mxu0 %v547
  %1423 = vmatprep.subr.mxu0 0.0
  %1424 = vmatpush1.msra.mxu0 %v546
  %1425 = vmatprep.subr.mxu0 0.0
  %1426 = vmatpush1.msra.mxu0 %v545
  %1427 = vmatprep.subr.mxu0 0.0
  %1428 = vmatpush1.msra.mxu0 %v544
  %1429 = vmatprep.subr.mxu0 0.0
  %1430 = vmatpush1.msra.mxu0 %v543
  %1431 = vmatprep.subr.mxu0 0.0
  %1432 = vmatpush1.msra.mxu0 %v542
  %1433 = vmatprep.subr.mxu0 0.0
  %1434 = vmatpush2.msra.mxu0 %v573
  %1435 = vmatprep.subr.mxu0 0.0
  %1436 = vmatpush2.msra.mxu0 %v572
  %1437 = vmatprep.subr.mxu0 0.0
  %1438 = vmatpush2.msra.mxu0 %v571
  %1439 = vmatprep.subr.mxu0 0.0
  %1440 = vmatpush2.msra.mxu0 %v570
  %1441 = vmatprep.subr.mxu0 0.0
  %1442 = vmatpush2.msra.mxu0 %v569
  %1443 = vmatprep.subr.mxu0 0.0
  %1444 = vmatpush2.msra.mxu0 %v568
  %1445 = vmatprep.subr.mxu0 0.0
  %1446 = vmatpush2.msra.mxu0 %v567
  %1447 = vmatprep.subr.mxu0 0.0
  %1448 = vmatpush2.msra.mxu0 %v566
  %1449 = vmatprep.subr.mxu0 0.0
  %1450 = vmatpush2.msra.mxu0 %v565
  %1451 = vmatprep.subr.mxu0 0.0
  %1452 = vmatpush2.msra.mxu0 %v564
  %1453 = vmatprep.subr.mxu0 0.0
  %1454 = vmatpush2.msra.mxu0 %v563
  %1455 = vmatprep.subr.mxu0 0.0
  %1456 = vmatpush2.msra.mxu0 %v562
  %1457 = vmatprep.subr.mxu0 0.0
  %1458 = vmatpush2.msra.mxu0 %v561
  %1459 = vmatprep.subr.mxu0 0.0
  %1460 = vmatpush2.msra.mxu0 %v560
  %1461 = vmatprep.subr.mxu0 0.0
  %1462 = vmatpush2.msra.mxu0 %v559
  %1463 = vmatprep.subr.mxu0 0.0
  %1464 = vmatpush2.msra.mxu0 %v558
  %1465 = vmatprep.mubr.f32.mxu0 %v23
  %1466 = vmatmul.mubr.f32.gmra.mxu0 %v22
  %v1467 = vpop.f32.mrf.mxu0
  %v1468 = vadd.f32 %v1323, %v1467
  %v1469 = vpop.f32.mrf.mxu0
  %1470 = vmatprep.mubr.f32.mxu0 %v48
  %1471 = vmatmul.mubr.f32.gmra.mxu0 %v47
  %v1472 = vpop.f32.mrf.mxu0
  %v1473 = vadd.f32 %v1328, %v1472
  %v1474 = vpop.f32.mrf.mxu0
  %1475 = vmatprep.mubr.f32.mxu0 %v73
  %1476 = vmatmul.mubr.f32.gmra.mxu0 %v72
  %v1477 = vpop.f32.mrf.mxu0
  %v1478 = vadd.f32 %v1333, %v1477
  %v1479 = vpop.f32.mrf.mxu0
  %1480 = vmatprep.mubr.f32.mxu0 %v98
  %1481 = vmatmul.mubr.f32.gmra.mxu0 %v97
  %v1482 = vpop.f32.mrf.mxu0
  %v1483 = vadd.f32 %v1338, %v1482
  %v1484 = vpop.f32.mrf.mxu0
  %1485 = vmatprep.mubr.f32.mxu0 %v123
  %1486 = vmatmul.mubr.f32.gmra.mxu0 %v122
  %v1487 = vpop.f32.mrf.mxu0
  %v1488 = vadd.f32 %v1343, %v1487
  %v1489 = vpop.f32.mrf.mxu0
  %1490 = vmatprep.mubr.f32.mxu0 %v148
  %1491 = vmatmul.mubr.f32.gmra.mxu0 %v147
  %v1492 = vpop.f32.mrf.mxu0
  %v1493 = vadd.f32 %v1348, %v1492
  %v1494 = vpop.f32.mrf.mxu0
  %1495 = vmatprep.mubr.f32.mxu0 %v173
  %1496 = vmatmul.mubr.f32.gmra.mxu0 %v172
  %v1497 = vpop.f32.mrf.mxu0
  %v1498 = vadd.f32 %v1353, %v1497
  %v1499 = vpop.f32.mrf.mxu0
  %1500 = vmatprep.mubr.f32.mxu0 %v198
  %1501 = vmatmul.mubr.f32.gmra.mxu0 %v197
  %v1502 = vpop.f32.mrf.mxu0
  %v1503 = vadd.f32 %v1358, %v1502
  %v1504 = vpop.f32.mrf.mxu0
  %1505 = vmatprep.mubr.f32.mxu0 %v223
  %1506 = vmatmul.mubr.f32.gmra.mxu0 %v222
  %v1507 = vpop.f32.mrf.mxu0
  %v1508 = vadd.f32 %v1363, %v1507
  %v1509 = vpop.f32.mrf.mxu0
  %1510 = vmatprep.mubr.f32.mxu0 %v248
  %1511 = vmatmul.mubr.f32.gmra.mxu0 %v247
  %v1512 = vpop.f32.mrf.mxu0
  %v1513 = vadd.f32 %v1368, %v1512
  %v1514 = vpop.f32.mrf.mxu0
  %1515 = vmatprep.mubr.f32.mxu0 %v273
  %1516 = vmatmul.mubr.f32.gmra.mxu0 %v272
  %v1517 = vpop.f32.mrf.mxu0
  %v1518 = vadd.f32 %v1373, %v1517
  %v1519 = vpop.f32.mrf.mxu0
  %1520 = vmatprep.mubr.f32.mxu0 %v298
  %1521 = vmatmul.mubr.f32.gmra.mxu0 %v297
  %v1522 = vpop.f32.mrf.mxu0
  %v1523 = vadd.f32 %v1378, %v1522
  %v1524 = vpop.f32.mrf.mxu0
  %1525 = vmatprep.mubr.f32.mxu0 %v323
  %1526 = vmatmul.mubr.f32.gmra.mxu0 %v322
  %v1527 = vpop.f32.mrf.mxu0
  %v1528 = vadd.f32 %v1383, %v1527
  %v1529 = vpop.f32.mrf.mxu0
  %1530 = vmatprep.mubr.f32.mxu0 %v348
  %1531 = vmatmul.mubr.f32.gmra.mxu0 %v347
  %v1532 = vpop.f32.mrf.mxu0
  %v1533 = vadd.f32 %v1388, %v1532
  %v1534 = vpop.f32.mrf.mxu0
  %1535 = vmatprep.mubr.f32.mxu0 %v373
  %1536 = vmatmul.mubr.f32.gmra.mxu0 %v372
  %v1537 = vpop.f32.mrf.mxu0
  %v1538 = vadd.f32 %v1393, %v1537
  %v1539 = vpop.f32.mrf.mxu0
  %1540 = vmatprep.mubr.f32.mxu0 %v398
  %1541 = vmatmul.mubr.f32.gmra.mxu0 %v397
  %v1542 = vpop.f32.mrf.mxu0
  %v1543 = vadd.f32 %v1398, %v1542
  %v1544 = vpop.f32.mrf.mxu0
  %1545 = vdwg.mxu0
  %1546 = vmatprep.subr.mxu0 0.0
  %1547 = vmatpush1.msra.mxu0 %v589
  %1548 = vmatprep.subr.mxu0 0.0
  %1549 = vmatpush1.msra.mxu0 %v588
  %1550 = vmatprep.subr.mxu0 0.0
  %1551 = vmatpush1.msra.mxu0 %v587
  %1552 = vmatprep.subr.mxu0 0.0
  %1553 = vmatpush1.msra.mxu0 %v586
  %1554 = vmatprep.subr.mxu0 0.0
  %1555 = vmatpush1.msra.mxu0 %v585
  %1556 = vmatprep.subr.mxu0 0.0
  %1557 = vmatpush1.msra.mxu0 %v584
  %1558 = vmatprep.subr.mxu0 0.0
  %1559 = vmatpush1.msra.mxu0 %v583
  %1560 = vmatprep.subr.mxu0 0.0
  %1561 = vmatpush1.msra.mxu0 %v582
  %1562 = vmatprep.subr.mxu0 0.0
  %1563 = vmatpush1.msra.mxu0 %v581
  %1564 = vmatprep.subr.mxu0 0.0
  %1565 = vmatpush1.msra.mxu0 %v580
  %1566 = vmatprep.subr.mxu0 0.0
  %1567 = vmatpush1.msra.mxu0 %v579
  %1568 = vmatprep.subr.mxu0 0.0
  %1569 = vmatpush1.msra.mxu0 %v578
  %1570 = vmatprep.subr.mxu0 0.0
  %1571 = vmatpush1.msra.mxu0 %v577
  %1572 = vmatprep.subr.mxu0 0.0
  %1573 = vmatpush1.msra.mxu0 %v576
  %1574 = vmatprep.subr.mxu0 0.0
  %1575 = vmatpush1.msra.mxu0 %v575
  %1576 = vmatprep.subr.mxu0 0.0
  %1577 = vmatpush1.msra.mxu0 %v574
  %1578 = vmatprep.subr.mxu0 0.0
  %1579 = vmatpush2.msra.mxu0 %v605
  %1580 = vmatprep.subr.mxu0 0.0
  %1581 = vmatpush2.msra.mxu0 %v604
  %1582 = vmatprep.subr.mxu0 0.0
  %1583 = vmatpush2.msra.mxu0 %v603
  %1584 = vmatprep.subr.mxu0 0.0
  %1585 = vmatpush2.msra.mxu0 %v602
  %1586 = vmatprep.subr.mxu0 0.0
  %1587 = vmatpush2.msra.mxu0 %v601
  %1588 = vmatprep.subr.mxu0 0.0
  %1589 = vmatpush2.msra.mxu0 %v600
  %1590 = vmatprep.subr.mxu0 0.0
  %1591 = vmatpush2.msra.mxu0 %v599
  %1592 = vmatprep.subr.mxu0 0.0
  %1593 = vmatpush2.msra.mxu0 %v598
  %1594 = vmatprep.subr.mxu0 0.0
  %1595 = vmatpush2.msra.mxu0 %v597
  %1596 = vmatprep.subr.mxu0 0.0
  %1597 = vmatpush2.msra.mxu0 %v596
  %1598 = vmatprep.subr.mxu0 0.0
  %1599 = vmatpush2.msra.mxu0 %v595
  %1600 = vmatprep.subr.mxu0 0.0
  %1601 = vmatpush2.msra.mxu0 %v594
  %1602 = vmatprep.subr.mxu0 0.0
  %1603 = vmatpush2.msra.mxu0 %v593
  %1604 = vmatprep.subr.mxu0 0.0
  %1605 = vmatpush2.msra.mxu0 %v592
  %1606 = vmatprep.subr.mxu0 0.0
  %1607 = vmatpush2.msra.mxu0 %v591
  %1608 = vmatprep.subr.mxu0 0.0
  %1609 = vmatpush2.msra.mxu0 %v590
  %1610 = vmatprep.mubr.f32.mxu0 %v25
  %1611 = vmatmul.mubr.f32.gmra.mxu0 %v24
  %v1612 = vpop.f32.mrf.mxu0
  %v1613 = vadd.f32 %v1468, %v1612
  %v1614 = vpop.f32.mrf.mxu0
  %1615 = vmatprep.mubr.f32.mxu0 %v50
  %1616 = vmatmul.mubr.f32.gmra.mxu0 %v49
  %v1617 = vpop.f32.mrf.mxu0
  %v1618 = vadd.f32 %v1473, %v1617
  %v1619 = vpop.f32.mrf.mxu0
  %1620 = vmatprep.mubr.f32.mxu0 %v75
  %1621 = vmatmul.mubr.f32.gmra.mxu0 %v74
  %v1622 = vpop.f32.mrf.mxu0
  %v1623 = vadd.f32 %v1478, %v1622
  %v1624 = vpop.f32.mrf.mxu0
  %1625 = vmatprep.mubr.f32.mxu0 %v100
  %1626 = vmatmul.mubr.f32.gmra.mxu0 %v99
  %v1627 = vpop.f32.mrf.mxu0
  %v1628 = vadd.f32 %v1483, %v1627
  %v1629 = vpop.f32.mrf.mxu0
  %1630 = vmatprep.mubr.f32.mxu0 %v125
  %1631 = vmatmul.mubr.f32.gmra.mxu0 %v124
  %v1632 = vpop.f32.mrf.mxu0
  %v1633 = vadd.f32 %v1488, %v1632
  %v1634 = vpop.f32.mrf.mxu0
  %1635 = vmatprep.mubr.f32.mxu0 %v150
  %1636 = vmatmul.mubr.f32.gmra.mxu0 %v149
  %v1637 = vpop.f32.mrf.mxu0
  %v1638 = vadd.f32 %v1493, %v1637
  %v1639 = vpop.f32.mrf.mxu0
  %1640 = vmatprep.mubr.f32.mxu0 %v175
  %1641 = vmatmul.mubr.f32.gmra.mxu0 %v174
  %v1642 = vpop.f32.mrf.mxu0
  %v1643 = vadd.f32 %v1498, %v1642
  %v1644 = vpop.f32.mrf.mxu0
  %1645 = vmatprep.mubr.f32.mxu0 %v200
  %1646 = vmatmul.mubr.f32.gmra.mxu0 %v199
  %v1647 = vpop.f32.mrf.mxu0
  %v1648 = vadd.f32 %v1503, %v1647
  %v1649 = vpop.f32.mrf.mxu0
  %1650 = vmatprep.mubr.f32.mxu0 %v225
  %1651 = vmatmul.mubr.f32.gmra.mxu0 %v224
  %v1652 = vpop.f32.mrf.mxu0
  %v1653 = vadd.f32 %v1508, %v1652
  %v1654 = vpop.f32.mrf.mxu0
  %1655 = vmatprep.mubr.f32.mxu0 %v250
  %1656 = vmatmul.mubr.f32.gmra.mxu0 %v249
  %v1657 = vpop.f32.mrf.mxu0
  %v1658 = vadd.f32 %v1513, %v1657
  %v1659 = vpop.f32.mrf.mxu0
  %1660 = vmatprep.mubr.f32.mxu0 %v275
  %1661 = vmatmul.mubr.f32.gmra.mxu0 %v274
  %v1662 = vpop.f32.mrf.mxu0
  %v1663 = vadd.f32 %v1518, %v1662
  %v1664 = vpop.f32.mrf.mxu0
  %1665 = vmatprep.mubr.f32.mxu0 %v300
  %1666 = vmatmul.mubr.f32.gmra.mxu0 %v299
  %v1667 = vpop.f32.mrf.mxu0
  %v1668 = vadd.f32 %v1523, %v1667
  %v1669 = vpop.f32.mrf.mxu0
  %1670 = vmatprep.mubr.f32.mxu0 %v325
  %1671 = vmatmul.mubr.f32.gmra.mxu0 %v324
  %v1672 = vpop.f32.mrf.mxu0
  %v1673 = vadd.f32 %v1528, %v1672
  %v1674 = vpop.f32.mrf.mxu0
  %1675 = vmatprep.mubr.f32.mxu0 %v350
  %1676 = vmatmul.mubr.f32.gmra.mxu0 %v349
  %v1677 = vpop.f32.mrf.mxu0
  %v1678 = vadd.f32 %v1533, %v1677
  %v1679 = vpop.f32.mrf.mxu0
  %1680 = vmatprep.mubr.f32.mxu0 %v375
  %1681 = vmatmul.mubr.f32.gmra.mxu0 %v374
  %v1682 = vpop.f32.mrf.mxu0
  %v1683 = vadd.f32 %v1538, %v1682
  %v1684 = vpop.f32.mrf.mxu0
  %1685 = vmatprep.mubr.f32.mxu0 %v400
  %1686 = vmatmul.mubr.f32.gmra.mxu0 %v399
  %v1687 = vpop.f32.mrf.mxu0
  %v1688 = vadd.f32 %v1543, %v1687
  %v1689 = vpop.f32.mrf.mxu0
  %1690 = vdwg.mxu0
  %1691 = vmatprep.subr.mxu0 0.0
  %1692 = vmatpush1.msra.mxu0 %v621
  %1693 = vmatprep.subr.mxu0 0.0
  %1694 = vmatpush1.msra.mxu0 %v620
  %1695 = vmatprep.subr.mxu0 0.0
  %1696 = vmatpush1.msra.mxu0 %v619
  %1697 = vmatprep.subr.mxu0 0.0
  %1698 = vmatpush1.msra.mxu0 %v618
  %1699 = vmatprep.subr.mxu0 0.0
  %1700 = vmatpush1.msra.mxu0 %v617
  %1701 = vmatprep.subr.mxu0 0.0
  %1702 = vmatpush1.msra.mxu0 %v616
  %1703 = vmatprep.subr.mxu0 0.0
  %1704 = vmatpush1.msra.mxu0 %v615
  %1705 = vmatprep.subr.mxu0 0.0
  %1706 = vmatpush1.msra.mxu0 %v614
  %1707 = vmatprep.subr.mxu0 0.0
  %1708 = vmatpush1.msra.mxu0 %v613
  %1709 = vmatprep.subr.mxu0 0.0
  %1710 = vmatpush1.msra.mxu0 %v612
  %1711 = vmatprep.subr.mxu0 0.0
  %1712 = vmatpush1.msra.mxu0 %v611
  %1713 = vmatprep.subr.mxu0 0.0
  %1714 = vmatpush1.msra.mxu0 %v610
  %1715 = vmatprep.subr.mxu0 0.0
  %1716 = vmatpush1.msra.mxu0 %v609
  %1717 = vmatprep.subr.mxu0 0.0
  %1718 = vmatpush1.msra.mxu0 %v608
  %1719 = vmatprep.subr.mxu0 0.0
  %1720 = vmatpush1.msra.mxu0 %v607
  %1721 = vmatprep.subr.mxu0 0.0
  %1722 = vmatpush1.msra.mxu0 %v606
  %1723 = vmatprep.subr.mxu0 0.0
  %1724 = vmatpush2.msra.mxu0 %v637
  %1725 = vmatprep.subr.mxu0 0.0
  %1726 = vmatpush2.msra.mxu0 %v636
  %1727 = vmatprep.subr.mxu0 0.0
  %1728 = vmatpush2.msra.mxu0 %v635
  %1729 = vmatprep.subr.mxu0 0.0
  %1730 = vmatpush2.msra.mxu0 %v634
  %1731 = vmatprep.subr.mxu0 0.0
  %1732 = vmatpush2.msra.mxu0 %v633
  %1733 = vmatprep.subr.mxu0 0.0
  %1734 = vmatpush2.msra.mxu0 %v632
  %1735 = vmatprep.subr.mxu0 0.0
  %1736 = vmatpush2.msra.mxu0 %v631
  %1737 = vmatprep.subr.mxu0 0.0
  %1738 = vmatpush2.msra.mxu0 %v630
  %1739 = vmatprep.subr.mxu0 0.0
  %1740 = vmatpush2.msra.mxu0 %v629
  %1741 = vmatprep.subr.mxu0 0.0
  %1742 = vmatpush2.msra.mxu0 %v628
  %1743 = vmatprep.subr.mxu0 0.0
  %1744 = vmatpush2.msra.mxu0 %v627
  %1745 = vmatprep.subr.mxu0 0.0
  %1746 = vmatpush2.msra.mxu0 %v626
  %1747 = vmatprep.subr.mxu0 0.0
  %1748 = vmatpush2.msra.mxu0 %v625
  %1749 = vmatprep.subr.mxu0 0.0
  %1750 = vmatpush2.msra.mxu0 %v624
  %1751 = vmatprep.subr.mxu0 0.0
  %1752 = vmatpush2.msra.mxu0 %v623
  %1753 = vmatprep.subr.mxu0 0.0
  %1754 = vmatpush2.msra.mxu0 %v622
  %1755 = vmatprep.mubr.f32.mxu0 %v27
  %1756 = vmatmul.mubr.f32.gmra.mxu0 %v26
  %v1757 = vpop.f32.mrf.mxu0
  %v1758 = vadd.f32 %v1613, %v1757
  %v1759 = vpop.f32.mrf.mxu0
  %1760 = vmatprep.mubr.f32.mxu0 %v52
  %1761 = vmatmul.mubr.f32.gmra.mxu0 %v51
  %v1762 = vpop.f32.mrf.mxu0
  %v1763 = vadd.f32 %v1618, %v1762
  %v1764 = vpop.f32.mrf.mxu0
  %1765 = vmatprep.mubr.f32.mxu0 %v77
  %1766 = vmatmul.mubr.f32.gmra.mxu0 %v76
  %v1767 = vpop.f32.mrf.mxu0
  %v1768 = vadd.f32 %v1623, %v1767
  %v1769 = vpop.f32.mrf.mxu0
  %1770 = vmatprep.mubr.f32.mxu0 %v102
  %1771 = vmatmul.mubr.f32.gmra.mxu0 %v101
  %v1772 = vpop.f32.mrf.mxu0
  %v1773 = vadd.f32 %v1628, %v1772
  %v1774 = vpop.f32.mrf.mxu0
  %1775 = vmatprep.mubr.f32.mxu0 %v127
  %1776 = vmatmul.mubr.f32.gmra.mxu0 %v126
  %v1777 = vpop.f32.mrf.mxu0
  %v1778 = vadd.f32 %v1633, %v1777
  %v1779 = vpop.f32.mrf.mxu0
  %1780 = vmatprep.mubr.f32.mxu0 %v152
  %1781 = vmatmul.mubr.f32.gmra.mxu0 %v151
  %v1782 = vpop.f32.mrf.mxu0
  %v1783 = vadd.f32 %v1638, %v1782
  %v1784 = vpop.f32.mrf.mxu0
  %1785 = vmatprep.mubr.f32.mxu0 %v177
  %1786 = vmatmul.mubr.f32.gmra.mxu0 %v176
  %v1787 = vpop.f32.mrf.mxu0
  %v1788 = vadd.f32 %v1643, %v1787
  %v1789 = vpop.f32.mrf.mxu0
  %1790 = vmatprep.mubr.f32.mxu0 %v202
  %1791 = vmatmul.mubr.f32.gmra.mxu0 %v201
  %v1792 = vpop.f32.mrf.mxu0
  %v1793 = vadd.f32 %v1648, %v1792
  %v1794 = vpop.f32.mrf.mxu0
  %1795 = vmatprep.mubr.f32.mxu0 %v227
  %1796 = vmatmul.mubr.f32.gmra.mxu0 %v226
  %v1797 = vpop.f32.mrf.mxu0
  %v1798 = vadd.f32 %v1653, %v1797
  %v1799 = vpop.f32.mrf.mxu0
  %1800 = vmatprep.mubr.f32.mxu0 %v252
  %1801 = vmatmul.mubr.f32.gmra.mxu0 %v251
  %v1802 = vpop.f32.mrf.mxu0
  %v1803 = vadd.f32 %v1658, %v1802
  %v1804 = vpop.f32.mrf.mxu0
  %1805 = vmatprep.mubr.f32.mxu0 %v277
  %1806 = vmatmul.mubr.f32.gmra.mxu0 %v276
  %v1807 = vpop.f32.mrf.mxu0
  %v1808 = vadd.f32 %v1663, %v1807
  %v1809 = vpop.f32.mrf.mxu0
  %1810 = vmatprep.mubr.f32.mxu0 %v302
  %1811 = vmatmul.mubr.f32.gmra.mxu0 %v301
  %v1812 = vpop.f32.mrf.mxu0
  %v1813 = vadd.f32 %v1668, %v1812
  %v1814 = vpop.f32.mrf.mxu0
  %1815 = vmatprep.mubr.f32.mxu0 %v327
  %1816 = vmatmul.mubr.f32.gmra.mxu0 %v326
  %v1817 = vpop.f32.mrf.mxu0
  %v1818 = vadd.f32 %v1673, %v1817
  %v1819 = vpop.f32.mrf.mxu0
  %1820 = vmatprep.mubr.f32.mxu0 %v352
  %1821 = vmatmul.mubr.f32.gmra.mxu0 %v351
  %v1822 = vpop.f32.mrf.mxu0
  %v1823 = vadd.f32 %v1678, %v1822
  %v1824 = vpop.f32.mrf.mxu0
  %1825 = vmatprep.mubr.f32.mxu0 %v377
  %1826 = vmatmul.mubr.f32.gmra.mxu0 %v376
  %v1827 = vpop.f32.mrf.mxu0
  %v1828 = vadd.f32 %v1683, %v1827
  %v1829 = vpop.f32.mrf.mxu0
  %1830 = vmatprep.mubr.f32.mxu0 %v402
  %1831 = vmatmul.mubr.f32.gmra.mxu0 %v401
  %v1832 = vpop.f32.mrf.mxu0
  %v1833 = vadd.f32 %v1688, %v1832
  %v1834 = vpop.f32.mrf.mxu0
  %1835 = vdwg.mxu0
  %1836 = vmatprep.subr.mxu0 0.0
  %1837 = vmatpush1.msra.mxu0 %v653
  %1838 = vmatprep.subr.mxu0 0.0
  %1839 = vmatpush1.msra.mxu0 %v652
  %1840 = vmatprep.subr.mxu0 0.0
  %1841 = vmatpush1.msra.mxu0 %v651
  %1842 = vmatprep.subr.mxu0 0.0
  %1843 = vmatpush1.msra.mxu0 %v650
  %1844 = vmatprep.subr.mxu0 0.0
  %1845 = vmatpush1.msra.mxu0 %v649
  %1846 = vmatprep.subr.mxu0 0.0
  %1847 = vmatpush1.msra.mxu0 %v648
  %1848 = vmatprep.subr.mxu0 0.0
  %1849 = vmatpush1.msra.mxu0 %v647
  %1850 = vmatprep.subr.mxu0 0.0
  %1851 = vmatpush1.msra.mxu0 %v646
  %1852 = vmatprep.subr.mxu0 0.0
  %1853 = vmatpush1.msra.mxu0 %v645
  %1854 = vmatprep.subr.mxu0 0.0
  %1855 = vmatpush1.msra.mxu0 %v644
  %1856 = vmatprep.subr.mxu0 0.0
  %1857 = vmatpush1.msra.mxu0 %v643
  %1858 = vmatprep.subr.mxu0 0.0
  %1859 = vmatpush1.msra.mxu0 %v642
  %1860 = vmatprep.subr.mxu0 0.0
  %1861 = vmatpush1.msra.mxu0 %v641
  %1862 = vmatprep.subr.mxu0 0.0
  %1863 = vmatpush1.msra.mxu0 %v640
  %1864 = vmatprep.subr.mxu0 0.0
  %1865 = vmatpush1.msra.mxu0 %v639
  %1866 = vmatprep.subr.mxu0 0.0
  %1867 = vmatpush1.msra.mxu0 %v638
  %1868 = vmatprep.subr.mxu0 0.0
  %1869 = vmatpush2.msra.mxu0 %v669
  %1870 = vmatprep.subr.mxu0 0.0
  %1871 = vmatpush2.msra.mxu0 %v668
  %1872 = vmatprep.subr.mxu0 0.0
  %1873 = vmatpush2.msra.mxu0 %v667
  %1874 = vmatprep.subr.mxu0 0.0
  %1875 = vmatpush2.msra.mxu0 %v666
  %1876 = vmatprep.subr.mxu0 0.0
  %1877 = vmatpush2.msra.mxu0 %v665
  %1878 = vmatprep.subr.mxu0 0.0
  %1879 = vmatpush2.msra.mxu0 %v664
  %1880 = vmatprep.subr.mxu0 0.0
  %1881 = vmatpush2.msra.mxu0 %v663
  %1882 = vmatprep.subr.mxu0 0.0
  %1883 = vmatpush2.msra.mxu0 %v662
  %1884 = vmatprep.subr.mxu0 0.0
  %1885 = vmatpush2.msra.mxu0 %v661
  %1886 = vmatprep.subr.mxu0 0.0
  %1887 = vmatpush2.msra.mxu0 %v660
  %1888 = vmatprep.subr.mxu0 0.0
  %1889 = vmatpush2.msra.mxu0 %v659
  %1890 = vmatprep.subr.mxu0 0.0
  %1891 = vmatpush2.msra.mxu0 %v658
  %1892 = vmatprep.subr.mxu0 0.0
  %1893 = vmatpush2.msra.mxu0 %v657
  %1894 = vmatprep.subr.mxu0 0.0
  %1895 = vmatpush2.msra.mxu0 %v656
  %1896 = vmatprep.subr.mxu0 0.0
  %1897 = vmatpush2.msra.mxu0 %v655
  %1898 = vmatprep.subr.mxu0 0.0
  %1899 = vmatpush2.msra.mxu0 %v654
  %1900 = vmatprep.mubr.f32.mxu0 %v29
  %1901 = vmatmul.mubr.f32.gmra.mxu0 %v28
  %v1902 = vpop.f32.mrf.mxu0
  %v1903 = vadd.f32 %v1758, %v1902
  %v1904 = vpop.f32.mrf.mxu0
  %1905 = vmatprep.mubr.f32.mxu0 %v54
  %1906 = vmatmul.mubr.f32.gmra.mxu0 %v53
  %v1907 = vpop.f32.mrf.mxu0
  %v1908 = vadd.f32 %v1763, %v1907
  %v1909 = vpop.f32.mrf.mxu0
  %1910 = vmatprep.mubr.f32.mxu0 %v79
  %1911 = vmatmul.mubr.f32.gmra.mxu0 %v78
  %v1912 = vpop.f32.mrf.mxu0
  %v1913 = vadd.f32 %v1768, %v1912
  %v1914 = vpop.f32.mrf.mxu0
  %1915 = vmatprep.mubr.f32.mxu0 %v104
  %1916 = vmatmul.mubr.f32.gmra.mxu0 %v103
  %v1917 = vpop.f32.mrf.mxu0
  %v1918 = vadd.f32 %v1773, %v1917
  %v1919 = vpop.f32.mrf.mxu0
  %1920 = vmatprep.mubr.f32.mxu0 %v129
  %1921 = vmatmul.mubr.f32.gmra.mxu0 %v128
  %v1922 = vpop.f32.mrf.mxu0
  %v1923 = vadd.f32 %v1778, %v1922
  %v1924 = vpop.f32.mrf.mxu0
  %1925 = vmatprep.mubr.f32.mxu0 %v154
  %1926 = vmatmul.mubr.f32.gmra.mxu0 %v153
  %v1927 = vpop.f32.mrf.mxu0
  %v1928 = vadd.f32 %v1783, %v1927
  %v1929 = vpop.f32.mrf.mxu0
  %1930 = vmatprep.mubr.f32.mxu0 %v179
  %1931 = vmatmul.mubr.f32.gmra.mxu0 %v178
  %v1932 = vpop.f32.mrf.mxu0
  %v1933 = vadd.f32 %v1788, %v1932
  %v1934 = vpop.f32.mrf.mxu0
  %1935 = vmatprep.mubr.f32.mxu0 %v204
  %1936 = vmatmul.mubr.f32.gmra.mxu0 %v203
  %v1937 = vpop.f32.mrf.mxu0
  %v1938 = vadd.f32 %v1793, %v1937
  %v1939 = vpop.f32.mrf.mxu0
  %1940 = vmatprep.mubr.f32.mxu0 %v229
  %1941 = vmatmul.mubr.f32.gmra.mxu0 %v228
  %v1942 = vpop.f32.mrf.mxu0
  %v1943 = vadd.f32 %v1798, %v1942
  %v1944 = vpop.f32.mrf.mxu0
  %1945 = vmatprep.mubr.f32.mxu0 %v254
  %1946 = vmatmul.mubr.f32.gmra.mxu0 %v253
  %v1947 = vpop.f32.mrf.mxu0
  %v1948 = vadd.f32 %v1803, %v1947
  %v1949 = vpop.f32.mrf.mxu0
  %1950 = vmatprep.mubr.f32.mxu0 %v279
  %1951 = vmatmul.mubr.f32.gmra.mxu0 %v278
  %v1952 = vpop.f32.mrf.mxu0
  %v1953 = vadd.f32 %v1808, %v1952
  %v1954 = vpop.f32.mrf.mxu0
  %1955 = vmatprep.mubr.f32.mxu0 %v304
  %1956 = vmatmul.mubr.f32.gmra.mxu0 %v303
  %v1957 = vpop.f32.mrf.mxu0
  %v1958 = vadd.f32 %v1813, %v1957
  %v1959 = vpop.f32.mrf.mxu0
  %1960 = vmatprep.mubr.f32.mxu0 %v329
  %1961 = vmatmul.mubr.f32.gmra.mxu0 %v328
  %v1962 = vpop.f32.mrf.mxu0
  %v1963 = vadd.f32 %v1818, %v1962
  %v1964 = vpop.f32.mrf.mxu0
  %1965 = vmatprep.mubr.f32.mxu0 %v354
  %1966 = vmatmul.mubr.f32.gmra.mxu0 %v353
  %v1967 = vpop.f32.mrf.mxu0
  %v1968 = vadd.f32 %v1823, %v1967
  %v1969 = vpop.f32.mrf.mxu0
  %1970 = vmatprep.mubr.f32.mxu0 %v379
  %1971 = vmatmul.mubr.f32.gmra.mxu0 %v378
  %v1972 = vpop.f32.mrf.mxu0
  %v1973 = vadd.f32 %v1828, %v1972
  %v1974 = vpop.f32.mrf.mxu0
  %1975 = vmatprep.mubr.f32.mxu0 %v404
  %1976 = vmatmul.mubr.f32.gmra.mxu0 %v403
  %v1977 = vpop.f32.mrf.mxu0
  %v1978 = vadd.f32 %v1833, %v1977
  %v1979 = vpop.f32.mrf.mxu0
  %1980 = vdwg.mxu0
  %1981 = vmatprep.subr.mxu0 0.0
  %1982 = vmatpush1.msra.mxu0 %v685
  %1983 = vmatprep.subr.mxu0 0.0
  %1984 = vmatpush1.msra.mxu0 %v684
  %1985 = vmatprep.subr.mxu0 0.0
  %1986 = vmatpush1.msra.mxu0 %v683
  %1987 = vmatprep.subr.mxu0 0.0
  %1988 = vmatpush1.msra.mxu0 %v682
  %1989 = vmatprep.subr.mxu0 0.0
  %1990 = vmatpush1.msra.mxu0 %v681
  %1991 = vmatprep.subr.mxu0 0.0
  %1992 = vmatpush1.msra.mxu0 %v680
  %1993 = vmatprep.subr.mxu0 0.0
  %1994 = vmatpush1.msra.mxu0 %v679
  %1995 = vmatprep.subr.mxu0 0.0
  %1996 = vmatpush1.msra.mxu0 %v678
  %1997 = vmatprep.subr.mxu0 0.0
  %1998 = vmatpush1.msra.mxu0 %v677
  %1999 = vmatprep.subr.mxu0 0.0
  %2000 = vmatpush1.msra.mxu0 %v676
  %2001 = vmatprep.subr.mxu0 0.0
  %2002 = vmatpush1.msra.mxu0 %v675
  %2003 = vmatprep.subr.mxu0 0.0
  %2004 = vmatpush1.msra.mxu0 %v674
  %2005 = vmatprep.subr.mxu0 0.0
  %2006 = vmatpush1.msra.mxu0 %v673
  %2007 = vmatprep.subr.mxu0 0.0
  %2008 = vmatpush1.msra.mxu0 %v672
  %2009 = vmatprep.subr.mxu0 0.0
  %2010 = vmatpush1.msra.mxu0 %v671
  %2011 = vmatprep.subr.mxu0 0.0
  %2012 = vmatpush1.msra.mxu0 %v670
  %2013 = vmatprep.subr.mxu0 0.0
  %2014 = vmatpush2.msra.mxu0 %v701
  %2015 = vmatprep.subr.mxu0 0.0
  %2016 = vmatpush2.msra.mxu0 %v700
  %2017 = vmatprep.subr.mxu0 0.0
  %2018 = vmatpush2.msra.mxu0 %v699
  %2019 = vmatprep.subr.mxu0 0.0
  %2020 = vmatpush2.msra.mxu0 %v698
  %2021 = vmatprep.subr.mxu0 0.0
  %2022 = vmatpush2.msra.mxu0 %v697
  %2023 = vmatprep.subr.mxu0 0.0
  %2024 = vmatpush2.msra.mxu0 %v696
  %2025 = vmatprep.subr.mxu0 0.0
  %2026 = vmatpush2.msra.mxu0 %v695
  %2027 = vmatprep.subr.mxu0 0.0
  %2028 = vmatpush2.msra.mxu0 %v694
  %2029 = vmatprep.subr.mxu0 0.0
  %2030 = vmatpush2.msra.mxu0 %v693
  %2031 = vmatprep.subr.mxu0 0.0
  %2032 = vmatpush2.msra.mxu0 %v692
  %2033 = vmatprep.subr.mxu0 0.0
  %2034 = vmatpush2.msra.mxu0 %v691
  %2035 = vmatprep.subr.mxu0 0.0
  %2036 = vmatpush2.msra.mxu0 %v690
  %2037 = vmatprep.subr.mxu0 0.0
  %2038 = vmatpush2.msra.mxu0 %v689
  %2039 = vmatprep.subr.mxu0 0.0
  %2040 = vmatpush2.msra.mxu0 %v688
  %2041 = vmatprep.subr.mxu0 0.0
  %2042 = vmatpush2.msra.mxu0 %v687
  %2043 = vmatprep.subr.mxu0 0.0
  %2044 = vmatpush2.msra.mxu0 %v686
  %2045 = vmatprep.mubr.f32.mxu0 %v31
  %2046 = vmatmul.mubr.f32.gmra.mxu0 %v30
  %v2047 = vpop.f32.mrf.mxu0
  %v2048 = vadd.f32 %v1903, %v2047
  %v2049 = vpop.f32.mrf.mxu0
  %2050 = vmatprep.mubr.f32.mxu0 %v56
  %2051 = vmatmul.mubr.f32.gmra.mxu0 %v55
  %v2052 = vpop.f32.mrf.mxu0
  %v2053 = vadd.f32 %v1908, %v2052
  %v2054 = vpop.f32.mrf.mxu0
  %2055 = vmatprep.mubr.f32.mxu0 %v81
  %2056 = vmatmul.mubr.f32.gmra.mxu0 %v80
  %v2057 = vpop.f32.mrf.mxu0
  %v2058 = vadd.f32 %v1913, %v2057
  %v2059 = vpop.f32.mrf.mxu0
  %2060 = vmatprep.mubr.f32.mxu0 %v106
  %2061 = vmatmul.mubr.f32.gmra.mxu0 %v105
  %v2062 = vpop.f32.mrf.mxu0
  %v2063 = vadd.f32 %v1918, %v2062
  %v2064 = vpop.f32.mrf.mxu0
  %2065 = vmatprep.mubr.f32.mxu0 %v131
  %2066 = vmatmul.mubr.f32.gmra.mxu0 %v130
  %v2067 = vpop.f32.mrf.mxu0
  %v2068 = vadd.f32 %v1923, %v2067
  %v2069 = vpop.f32.mrf.mxu0
  %2070 = vmatprep.mubr.f32.mxu0 %v156
  %2071 = vmatmul.mubr.f32.gmra.mxu0 %v155
  %v2072 = vpop.f32.mrf.mxu0
  %v2073 = vadd.f32 %v1928, %v2072
  %v2074 = vpop.f32.mrf.mxu0
  %2075 = vmatprep.mubr.f32.mxu0 %v181
  %2076 = vmatmul.mubr.f32.gmra.mxu0 %v180
  %v2077 = vpop.f32.mrf.mxu0
  %v2078 = vadd.f32 %v1933, %v2077
  %v2079 = vpop.f32.mrf.mxu0
  %2080 = vmatprep.mubr.f32.mxu0 %v206
  %2081 = vmatmul.mubr.f32.gmra.mxu0 %v205
  %v2082 = vpop.f32.mrf.mxu0
  %v2083 = vadd.f32 %v1938, %v2082
  %v2084 = vpop.f32.mrf.mxu0
  %2085 = vmatprep.mubr.f32.mxu0 %v231
  %2086 = vmatmul.mubr.f32.gmra.mxu0 %v230
  %v2087 = vpop.f32.mrf.mxu0
  %v2088 = vadd.f32 %v1943, %v2087
  %v2089 = vpop.f32.mrf.mxu0
  %2090 = vmatprep.mubr.f32.mxu0 %v256
  %2091 = vmatmul.mubr.f32.gmra.mxu0 %v255
  %v2092 = vpop.f32.mrf.mxu0
  %v2093 = vadd.f32 %v1948, %v2092
  %v2094 = vpop.f32.mrf.mxu0
  %2095 = vmatprep.mubr.f32.mxu0 %v281
  %2096 = vmatmul.mubr.f32.gmra.mxu0 %v280
  %v2097 = vpop.f32.mrf.mxu0
  %v2098 = vadd.f32 %v1953, %v2097
  %v2099 = vpop.f32.mrf.mxu0
  %2100 = vmatprep.mubr.f32.mxu0 %v306
  %2101 = vmatmul.mubr.f32.gmra.mxu0 %v305
  %v2102 = vpop.f32.mrf.mxu0
  %v2103 = vadd.f32 %v1958, %v2102
  %v2104 = vpop.f32.mrf.mxu0
  %2105 = vmatprep.mubr.f32.mxu0 %v331
  %2106 = vmatmul.mubr.f32.gmra.mxu0 %v330
  %v2107 = vpop.f32.mrf.mxu0
  %v2108 = vadd.f32 %v1963, %v2107
  %v2109 = vpop.f32.mrf.mxu0
  %2110 = vmatprep.mubr.f32.mxu0 %v356
  %2111 = vmatmul.mubr.f32.gmra.mxu0 %v355
  %v2112 = vpop.f32.mrf.mxu0
  %v2113 = vadd.f32 %v1968, %v2112
  %v2114 = vpop.f32.mrf.mxu0
  %2115 = vmatprep.mubr.f32.mxu0 %v381
  %2116 = vmatmul.mubr.f32.gmra.mxu0 %v380
  %v2117 = vpop.f32.mrf.mxu0
  %v2118 = vadd.f32 %v1973, %v2117
  %v2119 = vpop.f32.mrf.mxu0
  %2120 = vmatprep.mubr.f32.mxu0 %v406
  %2121 = vmatmul.mubr.f32.gmra.mxu0 %v405
  %v2122 = vpop.f32.mrf.mxu0
  %v2123 = vadd.f32 %v1978, %v2122
  %v2124 = vpop.f32.mrf.mxu0
  %2125 = vdwg.mxu0
  %2126 = vmatprep.subr.mxu0 0.0
  %2127 = vmatpush1.msra.mxu0 %v717
  %2128 = vmatprep.subr.mxu0 0.0
  %2129 = vmatpush1.msra.mxu0 %v716
  %2130 = vmatprep.subr.mxu0 0.0
  %2131 = vmatpush1.msra.mxu0 %v715
  %2132 = vmatprep.subr.mxu0 0.0
  %2133 = vmatpush1.msra.mxu0 %v714
  %2134 = vmatprep.subr.mxu0 0.0
  %2135 = vmatpush1.msra.mxu0 %v713
  %2136 = vmatprep.subr.mxu0 0.0
  %2137 = vmatpush1.msra.mxu0 %v712
  %2138 = vmatprep.subr.mxu0 0.0
  %2139 = vmatpush1.msra.mxu0 %v711
  %2140 = vmatprep.subr.mxu0 0.0
  %2141 = vmatpush1.msra.mxu0 %v710
  %2142 = vmatprep.subr.mxu0 0.0
  %2143 = vmatpush1.msra.mxu0 %v709
  %2144 = vmatprep.subr.mxu0 0.0
  %2145 = vmatpush1.msra.mxu0 %v708
  %2146 = vmatprep.subr.mxu0 0.0
  %2147 = vmatpush1.msra.mxu0 %v707
  %2148 = vmatprep.subr.mxu0 0.0
  %2149 = vmatpush1.msra.mxu0 %v706
  %2150 = vmatprep.subr.mxu0 0.0
  %2151 = vmatpush1.msra.mxu0 %v705
  %2152 = vmatprep.subr.mxu0 0.0
  %2153 = vmatpush1.msra.mxu0 %v704
  %2154 = vmatprep.subr.mxu0 0.0
  %2155 = vmatpush1.msra.mxu0 %v703
  %2156 = vmatprep.subr.mxu0 0.0
  %2157 = vmatpush1.msra.mxu0 %v702
  %2158 = vmatprep.subr.mxu0 0.0
  %2159 = vmatpush2.msra.mxu0 %v733
  %2160 = vmatprep.subr.mxu0 0.0
  %2161 = vmatpush2.msra.mxu0 %v732
  %2162 = vmatprep.subr.mxu0 0.0
  %2163 = vmatpush2.msra.mxu0 %v731
  %2164 = vmatprep.subr.mxu0 0.0
  %2165 = vmatpush2.msra.mxu0 %v730
  %2166 = vmatprep.subr.mxu0 0.0
  %2167 = vmatpush2.msra.mxu0 %v729
  %2168 = vmatprep.subr.mxu0 0.0
  %2169 = vmatpush2.msra.mxu0 %v728
  %2170 = vmatprep.subr.mxu0 0.0
  %2171 = vmatpush2.msra.mxu0 %v727
  %2172 = vmatprep.subr.mxu0 0.0
  %2173 = vmatpush2.msra.mxu0 %v726
  %2174 = vmatprep.subr.mxu0 0.0
  %2175 = vmatpush2.msra.mxu0 %v725
  %2176 = vmatprep.subr.mxu0 0.0
  %2177 = vmatpush2.msra.mxu0 %v724
  %2178 = vmatprep.subr.mxu0 0.0
  %2179 = vmatpush2.msra.mxu0 %v723
  %2180 = vmatprep.subr.mxu0 0.0
  %2181 = vmatpush2.msra.mxu0 %v722
  %2182 = vmatprep.subr.mxu0 0.0
  %2183 = vmatpush2.msra.mxu0 %v721
  %2184 = vmatprep.subr.mxu0 0.0
  %2185 = vmatpush2.msra.mxu0 %v720
  %2186 = vmatprep.subr.mxu0 0.0
  %2187 = vmatpush2.msra.mxu0 %v719
  %2188 = vmatprep.subr.mxu0 0.0
  %2189 = vmatpush2.msra.mxu0 %v718
  %2190 = vmatprep.mubr.f32.mxu0 %v33
  %2191 = vmatmul.mubr.f32.gmra.mxu0 %v32
  %v2192 = vpop.f32.mrf.mxu0
  %v2193 = vadd.f32 %v2048, %v2192
  %v2194 = vpop.f32.mrf.mxu0
  %2195 = vmatprep.mubr.f32.mxu0 %v58
  %2196 = vmatmul.mubr.f32.gmra.mxu0 %v57
  %v2197 = vpop.f32.mrf.mxu0
  %v2198 = vadd.f32 %v2053, %v2197
  %v2199 = vpop.f32.mrf.mxu0
  %2200 = vmatprep.mubr.f32.mxu0 %v83
  %2201 = vmatmul.mubr.f32.gmra.mxu0 %v82
  %v2202 = vpop.f32.mrf.mxu0
  %v2203 = vadd.f32 %v2058, %v2202
  %v2204 = vpop.f32.mrf.mxu0
  %2205 = vmatprep.mubr.f32.mxu0 %v108
  %2206 = vmatmul.mubr.f32.gmra.mxu0 %v107
  %v2207 = vpop.f32.mrf.mxu0
  %v2208 = vadd.f32 %v2063, %v2207
  %v2209 = vpop.f32.mrf.mxu0
  %2210 = vmatprep.mubr.f32.mxu0 %v133
  %2211 = vmatmul.mubr.f32.gmra.mxu0 %v132
  %v2212 = vpop.f32.mrf.mxu0
  %v2213 = vadd.f32 %v2068, %v2212
  %v2214 = vpop.f32.mrf.mxu0
  %2215 = vmatprep.mubr.f32.mxu0 %v158
  %2216 = vmatmul.mubr.f32.gmra.mxu0 %v157
  %v2217 = vpop.f32.mrf.mxu0
  %v2218 = vadd.f32 %v2073, %v2217
  %v2219 = vpop.f32.mrf.mxu0
  %2220 = vmatprep.mubr.f32.mxu0 %v183
  %2221 = vmatmul.mubr.f32.gmra.mxu0 %v182
  %v2222 = vpop.f32.mrf.mxu0
  %v2223 = vadd.f32 %v2078, %v2222
  %v2224 = vpop.f32.mrf.mxu0
  %2225 = vmatprep.mubr.f32.mxu0 %v208
  %2226 = vmatmul.mubr.f32.gmra.mxu0 %v207
  %v2227 = vpop.f32.mrf.mxu0
  %v2228 = vadd.f32 %v2083, %v2227
  %v2229 = vpop.f32.mrf.mxu0
  %2230 = vmatprep.mubr.f32.mxu0 %v233
  %2231 = vmatmul.mubr.f32.gmra.mxu0 %v232
  %v2232 = vpop.f32.mrf.mxu0
  %v2233 = vadd.f32 %v2088, %v2232
  %v2234 = vpop.f32.mrf.mxu0
  %2235 = vmatprep.mubr.f32.mxu0 %v258
  %2236 = vmatmul.mubr.f32.gmra.mxu0 %v257
  %v2237 = vpop.f32.mrf.mxu0
  %v2238 = vadd.f32 %v2093, %v2237
  %v2239 = vpop.f32.mrf.mxu0
  %2240 = vmatprep.mubr.f32.mxu0 %v283
  %2241 = vmatmul.mubr.f32.gmra.mxu0 %v282
  %v2242 = vpop.f32.mrf.mxu0
  %v2243 = vadd.f32 %v2098, %v2242
  %v2244 = vpop.f32.mrf.mxu0
  %2245 = vmatprep.mubr.f32.mxu0 %v308
  %2246 = vmatmul.mubr.f32.gmra.mxu0 %v307
  %v2247 = vpop.f32.mrf.mxu0
  %v2248 = vadd.f32 %v2103, %v2247
  %v2249 = vpop.f32.mrf.mxu0
  %2250 = vmatprep.mubr.f32.mxu0 %v333
  %2251 = vmatmul.mubr.f32.gmra.mxu0 %v332
  %v2252 = vpop.f32.mrf.mxu0
  %v2253 = vadd.f32 %v2108, %v2252
  %v2254 = vpop.f32.mrf.mxu0
  %2255 = vmatprep.mubr.f32.mxu0 %v358
  %2256 = vmatmul.mubr.f32.gmra.mxu0 %v357
  %v2257 = vpop.f32.mrf.mxu0
  %v2258 = vadd.f32 %v2113, %v2257
  %v2259 = vpop.f32.mrf.mxu0
  %2260 = vmatprep.mubr.f32.mxu0 %v383
  %2261 = vmatmul.mubr.f32.gmra.mxu0 %v382
  %v2262 = vpop.f32.mrf.mxu0
  %v2263 = vadd.f32 %v2118, %v2262
  %v2264 = vpop.f32.mrf.mxu0
  %2265 = vmatprep.mubr.f32.mxu0 %v408
  %2266 = vmatmul.mubr.f32.gmra.mxu0 %v407
  %v2267 = vpop.f32.mrf.mxu0
  %v2268 = vadd.f32 %v2123, %v2267
  %v2269 = vpop.f32.mrf.mxu0
  %2270 = vdwg.mxu0
  %2271 = vmatprep.subr.mxu0 0.0
  %2272 = vmatpush1.msra.mxu0 %v749
  %2273 = vmatprep.subr.mxu0 0.0
  %2274 = vmatpush1.msra.mxu0 %v748
  %2275 = vmatprep.subr.mxu0 0.0
  %2276 = vmatpush1.msra.mxu0 %v747
  %2277 = vmatprep.subr.mxu0 0.0
  %2278 = vmatpush1.msra.mxu0 %v746
  %2279 = vmatprep.subr.mxu0 0.0
  %2280 = vmatpush1.msra.mxu0 %v745
  %2281 = vmatprep.subr.mxu0 0.0
  %2282 = vmatpush1.msra.mxu0 %v744
  %2283 = vmatprep.subr.mxu0 0.0
  %2284 = vmatpush1.msra.mxu0 %v743
  %2285 = vmatprep.subr.mxu0 0.0
  %2286 = vmatpush1.msra.mxu0 %v742
  %2287 = vmatprep.subr.mxu0 0.0
  %2288 = vmatpush1.msra.mxu0 %v741
  %2289 = vmatprep.subr.mxu0 0.0
  %2290 = vmatpush1.msra.mxu0 %v740
  %2291 = vmatprep.subr.mxu0 0.0
  %2292 = vmatpush1.msra.mxu0 %v739
  %2293 = vmatprep.subr.mxu0 0.0
  %2294 = vmatpush1.msra.mxu0 %v738
  %2295 = vmatprep.subr.mxu0 0.0
  %2296 = vmatpush1.msra.mxu0 %v737
  %2297 = vmatprep.subr.mxu0 0.0
  %2298 = vmatpush1.msra.mxu0 %v736
  %2299 = vmatprep.subr.mxu0 0.0
  %2300 = vmatpush1.msra.mxu0 %v735
  %2301 = vmatprep.subr.mxu0 0.0
  %2302 = vmatpush1.msra.mxu0 %v734
  %2303 = vmatprep.subr.mxu0 0.0
  %2304 = vmatpush2.msra.mxu0 %v765
  %2305 = vmatprep.subr.mxu0 0.0
  %2306 = vmatpush2.msra.mxu0 %v764
  %2307 = vmatprep.subr.mxu0 0.0
  %2308 = vmatpush2.msra.mxu0 %v763
  %2309 = vmatprep.subr.mxu0 0.0
  %2310 = vmatpush2.msra.mxu0 %v762
  %2311 = vmatprep.subr.mxu0 0.0
  %2312 = vmatpush2.msra.mxu0 %v761
  %2313 = vmatprep.subr.mxu0 0.0
  %2314 = vmatpush2.msra.mxu0 %v760
  %2315 = vmatprep.subr.mxu0 0.0
  %2316 = vmatpush2.msra.mxu0 %v759
  %2317 = vmatprep.subr.mxu0 0.0
  %2318 = vmatpush2.msra.mxu0 %v758
  %2319 = vmatprep.subr.mxu0 0.0
  %2320 = vmatpush2.msra.mxu0 %v757
  %2321 = vmatprep.subr.mxu0 0.0
  %2322 = vmatpush2.msra.mxu0 %v756
  %2323 = vmatprep.subr.mxu0 0.0
  %2324 = vmatpush2.msra.mxu0 %v755
  %2325 = vmatprep.subr.mxu0 0.0
  %2326 = vmatpush2.msra.mxu0 %v754
  %2327 = vmatprep.subr.mxu0 0.0
  %2328 = vmatpush2.msra.mxu0 %v753
  %2329 = vmatprep.subr.mxu0 0.0
  %2330 = vmatpush2.msra.mxu0 %v752
  %2331 = vmatprep.subr.mxu0 0.0
  %2332 = vmatpush2.msra.mxu0 %v751
  %2333 = vmatprep.subr.mxu0 0.0
  %2334 = vmatpush2.msra.mxu0 %v750
  %2335 = vmatprep.mubr.f32.mxu0 %v35
  %2336 = vmatmul.mubr.f32.gmra.mxu0 %v34
  %v2337 = vpop.f32.mrf.mxu0
  %v2338 = vadd.f32 %v2193, %v2337
  %v2339 = vpop.f32.mrf.mxu0
  %2340 = vmatprep.mubr.f32.mxu0 %v60
  %2341 = vmatmul.mubr.f32.gmra.mxu0 %v59
  %v2342 = vpop.f32.mrf.mxu0
  %v2343 = vadd.f32 %v2198, %v2342
  %v2344 = vpop.f32.mrf.mxu0
  %2345 = vmatprep.mubr.f32.mxu0 %v85
  %2346 = vmatmul.mubr.f32.gmra.mxu0 %v84
  %v2347 = vpop.f32.mrf.mxu0
  %v2348 = vadd.f32 %v2203, %v2347
  %v2349 = vpop.f32.mrf.mxu0
  %2350 = vmatprep.mubr.f32.mxu0 %v110
  %2351 = vmatmul.mubr.f32.gmra.mxu0 %v109
  %v2352 = vpop.f32.mrf.mxu0
  %v2353 = vadd.f32 %v2208, %v2352
  %v2354 = vpop.f32.mrf.mxu0
  %2355 = vmatprep.mubr.f32.mxu0 %v135
  %2356 = vmatmul.mubr.f32.gmra.mxu0 %v134
  %v2357 = vpop.f32.mrf.mxu0
  %v2358 = vadd.f32 %v2213, %v2357
  %v2359 = vpop.f32.mrf.mxu0
  %2360 = vmatprep.mubr.f32.mxu0 %v160
  %2361 = vmatmul.mubr.f32.gmra.mxu0 %v159
  %v2362 = vpop.f32.mrf.mxu0
  %v2363 = vadd.f32 %v2218, %v2362
  %v2364 = vpop.f32.mrf.mxu0
  %2365 = vmatprep.mubr.f32.mxu0 %v185
  %2366 = vmatmul.mubr.f32.gmra.mxu0 %v184
  %v2367 = vpop.f32.mrf.mxu0
  %v2368 = vadd.f32 %v2223, %v2367
  %v2369 = vpop.f32.mrf.mxu0
  %2370 = vmatprep.mubr.f32.mxu0 %v210
  %2371 = vmatmul.mubr.f32.gmra.mxu0 %v209
  %v2372 = vpop.f32.mrf.mxu0
  %v2373 = vadd.f32 %v2228, %v2372
  %v2374 = vpop.f32.mrf.mxu0
  %2375 = vmatprep.mubr.f32.mxu0 %v235
  %2376 = vmatmul.mubr.f32.gmra.mxu0 %v234
  %v2377 = vpop.f32.mrf.mxu0
  %v2378 = vadd.f32 %v2233, %v2377
  %v2379 = vpop.f32.mrf.mxu0
  %2380 = vmatprep.mubr.f32.mxu0 %v260
  %2381 = vmatmul.mubr.f32.gmra.mxu0 %v259
  %v2382 = vpop.f32.mrf.mxu0
  %v2383 = vadd.f32 %v2238, %v2382
  %v2384 = vpop.f32.mrf.mxu0
  %2385 = vmatprep.mubr.f32.mxu0 %v285
  %2386 = vmatmul.mubr.f32.gmra.mxu0 %v284
  %v2387 = vpop.f32.mrf.mxu0
  %v2388 = vadd.f32 %v2243, %v2387
  %v2389 = vpop.f32.mrf.mxu0
  %2390 = vmatprep.mubr.f32.mxu0 %v310
  %2391 = vmatmul.mubr.f32.gmra.mxu0 %v309
  %v2392 = vpop.f32.mrf.mxu0
  %v2393 = vadd.f32 %v2248, %v2392
  %v2394 = vpop.f32.mrf.mxu0
  %2395 = vmatprep.mubr.f32.mxu0 %v335
  %2396 = vmatmul.mubr.f32.gmra.mxu0 %v334
  %v2397 = vpop.f32.mrf.mxu0
  %v2398 = vadd.f32 %v2253, %v2397
  %v2399 = vpop.f32.mrf.mxu0
  %2400 = vmatprep.mubr.f32.mxu0 %v360
  %2401 = vmatmul.mubr.f32.gmra.mxu0 %v359
  %v2402 = vpop.f32.mrf.mxu0
  %v2403 = vadd.f32 %v2258, %v2402
  %v2404 = vpop.f32.mrf.mxu0
  %2405 = vmatprep.mubr.f32.mxu0 %v385
  %2406 = vmatmul.mubr.f32.gmra.mxu0 %v384
  %v2407 = vpop.f32.mrf.mxu0
  %v2408 = vadd.f32 %v2263, %v2407
  %v2409 = vpop.f32.mrf.mxu0
  %2410 = vmatprep.mubr.f32.mxu0 %v410
  %2411 = vmatmul.mubr.f32.gmra.mxu0 %v409
  %v2412 = vpop.f32.mrf.mxu0
  %v2413 = vadd.f32 %v2268, %v2412
  %v2414 = vpop.f32.mrf.mxu0
  %2415 = vdwg.mxu0
  %2416 = vmatprep.subr.mxu0 0.0
  %2417 = vmatpush1.msra.mxu0 %v781
  %2418 = vmatprep.subr.mxu0 0.0
  %2419 = vmatpush1.msra.mxu0 %v780
  %2420 = vmatprep.subr.mxu0 0.0
  %2421 = vmatpush1.msra.mxu0 %v779
  %2422 = vmatprep.subr.mxu0 0.0
  %2423 = vmatpush1.msra.mxu0 %v778
  %2424 = vmatprep.subr.mxu0 0.0
  %2425 = vmatpush1.msra.mxu0 %v777
  %2426 = vmatprep.subr.mxu0 0.0
  %2427 = vmatpush1.msra.mxu0 %v776
  %2428 = vmatprep.subr.mxu0 0.0
  %2429 = vmatpush1.msra.mxu0 %v775
  %2430 = vmatprep.subr.mxu0 0.0
  %2431 = vmatpush1.msra.mxu0 %v774
  %2432 = vmatprep.subr.mxu0 0.0
  %2433 = vmatpush1.msra.mxu0 %v773
  %2434 = vmatprep.subr.mxu0 0.0
  %2435 = vmatpush1.msra.mxu0 %v772
  %2436 = vmatprep.subr.mxu0 0.0
  %2437 = vmatpush1.msra.mxu0 %v771
  %2438 = vmatprep.subr.mxu0 0.0
  %2439 = vmatpush1.msra.mxu0 %v770
  %2440 = vmatprep.subr.mxu0 0.0
  %2441 = vmatpush1.msra.mxu0 %v769
  %2442 = vmatprep.subr.mxu0 0.0
  %2443 = vmatpush1.msra.mxu0 %v768
  %2444 = vmatprep.subr.mxu0 0.0
  %2445 = vmatpush1.msra.mxu0 %v767
  %2446 = vmatprep.subr.mxu0 0.0
  %2447 = vmatpush1.msra.mxu0 %v766
  %2448 = vmatprep.subr.mxu0 0.0
  %2449 = vmatpush2.msra.mxu0 %v797
  %2450 = vmatprep.subr.mxu0 0.0
  %2451 = vmatpush2.msra.mxu0 %v796
  %2452 = vmatprep.subr.mxu0 0.0
  %2453 = vmatpush2.msra.mxu0 %v795
  %2454 = vmatprep.subr.mxu0 0.0
  %2455 = vmatpush2.msra.mxu0 %v794
  %2456 = vmatprep.subr.mxu0 0.0
  %2457 = vmatpush2.msra.mxu0 %v793
  %2458 = vmatprep.subr.mxu0 0.0
  %2459 = vmatpush2.msra.mxu0 %v792
  %2460 = vmatprep.subr.mxu0 0.0
  %2461 = vmatpush2.msra.mxu0 %v791
  %2462 = vmatprep.subr.mxu0 0.0
  %2463 = vmatpush2.msra.mxu0 %v790
  %2464 = vmatprep.subr.mxu0 0.0
  %2465 = vmatpush2.msra.mxu0 %v789
  %2466 = vmatprep.subr.mxu0 0.0
  %2467 = vmatpush2.msra.mxu0 %v788
  %2468 = vmatprep.subr.mxu0 0.0
  %2469 = vmatpush2.msra.mxu0 %v787
  %2470 = vmatprep.subr.mxu0 0.0
  %2471 = vmatpush2.msra.mxu0 %v786
  %2472 = vmatprep.subr.mxu0 0.0
  %2473 = vmatpush2.msra.mxu0 %v785
  %2474 = vmatprep.subr.mxu0 0.0
  %2475 = vmatpush2.msra.mxu0 %v784
  %2476 = vmatprep.subr.mxu0 0.0
  %2477 = vmatpush2.msra.mxu0 %v783
  %2478 = vmatprep.subr.mxu0 0.0
  %2479 = vmatpush2.msra.mxu0 %v782
  %2480 = vmatprep.mubr.f32.mxu0 %v37
  %2481 = vmatmul.mubr.f32.gmra.mxu0 %v36
  %v2482 = vpop.f32.mrf.mxu0
  %v2483 = vadd.f32 %v2338, %v2482
  %v2484 = vpop.f32.mrf.mxu0
  %2485 = vmatprep.mubr.f32.mxu0 %v62
  %2486 = vmatmul.mubr.f32.gmra.mxu0 %v61
  %v2487 = vpop.f32.mrf.mxu0
  %v2488 = vadd.f32 %v2343, %v2487
  %v2489 = vpop.f32.mrf.mxu0
  %2490 = vmatprep.mubr.f32.mxu0 %v87
  %2491 = vmatmul.mubr.f32.gmra.mxu0 %v86
  %v2492 = vpop.f32.mrf.mxu0
  %v2493 = vadd.f32 %v2348, %v2492
  %v2494 = vpop.f32.mrf.mxu0
  %2495 = vmatprep.mubr.f32.mxu0 %v112
  %2496 = vmatmul.mubr.f32.gmra.mxu0 %v111
  %v2497 = vpop.f32.mrf.mxu0
  %v2498 = vadd.f32 %v2353, %v2497
  %v2499 = vpop.f32.mrf.mxu0
  %2500 = vmatprep.mubr.f32.mxu0 %v137
  %2501 = vmatmul.mubr.f32.gmra.mxu0 %v136
  %v2502 = vpop.f32.mrf.mxu0
  %v2503 = vadd.f32 %v2358, %v2502
  %v2504 = vpop.f32.mrf.mxu0
  %2505 = vmatprep.mubr.f32.mxu0 %v162
  %2506 = vmatmul.mubr.f32.gmra.mxu0 %v161
  %v2507 = vpop.f32.mrf.mxu0
  %v2508 = vadd.f32 %v2363, %v2507
  %v2509 = vpop.f32.mrf.mxu0
  %2510 = vmatprep.mubr.f32.mxu0 %v187
  %2511 = vmatmul.mubr.f32.gmra.mxu0 %v186
  %v2512 = vpop.f32.mrf.mxu0
  %v2513 = vadd.f32 %v2368, %v2512
  %v2514 = vpop.f32.mrf.mxu0
  %2515 = vmatprep.mubr.f32.mxu0 %v212
  %2516 = vmatmul.mubr.f32.gmra.mxu0 %v211
  %v2517 = vpop.f32.mrf.mxu0
  %v2518 = vadd.f32 %v2373, %v2517
  %v2519 = vpop.f32.mrf.mxu0
  %2520 = vmatprep.mubr.f32.mxu0 %v237
  %2521 = vmatmul.mubr.f32.gmra.mxu0 %v236
  %v2522 = vpop.f32.mrf.mxu0
  %v2523 = vadd.f32 %v2378, %v2522
  %v2524 = vpop.f32.mrf.mxu0
  %2525 = vmatprep.mubr.f32.mxu0 %v262
  %2526 = vmatmul.mubr.f32.gmra.mxu0 %v261
  %v2527 = vpop.f32.mrf.mxu0
  %v2528 = vadd.f32 %v2383, %v2527
  %v2529 = vpop.f32.mrf.mxu0
  %2530 = vmatprep.mubr.f32.mxu0 %v287
  %2531 = vmatmul.mubr.f32.gmra.mxu0 %v286
  %v2532 = vpop.f32.mrf.mxu0
  %v2533 = vadd.f32 %v2388, %v2532
  %v2534 = vpop.f32.mrf.mxu0
  %2535 = vmatprep.mubr.f32.mxu0 %v312
  %2536 = vmatmul.mubr.f32.gmra.mxu0 %v311
  %v2537 = vpop.f32.mrf.mxu0
  %v2538 = vadd.f32 %v2393, %v2537
  %v2539 = vpop.f32.mrf.mxu0
  %2540 = vmatprep.mubr.f32.mxu0 %v337
  %2541 = vmatmul.mubr.f32.gmra.mxu0 %v336
  %v2542 = vpop.f32.mrf.mxu0
  %v2543 = vadd.f32 %v2398, %v2542
  %v2544 = vpop.f32.mrf.mxu0
  %2545 = vmatprep.mubr.f32.mxu0 %v362
  %2546 = vmatmul.mubr.f32.gmra.mxu0 %v361
  %v2547 = vpop.f32.mrf.mxu0
  %v2548 = vadd.f32 %v2403, %v2547
  %v2549 = vpop.f32.mrf.mxu0
  %2550 = vmatprep.mubr.f32.mxu0 %v387
  %2551 = vmatmul.mubr.f32.gmra.mxu0 %v386
  %v2552 = vpop.f32.mrf.mxu0
  %v2553 = vadd.f32 %v2408, %v2552
  %v2554 = vpop.f32.mrf.mxu0
  %2555 = vmatprep.mubr.f32.mxu0 %v412
  %2556 = vmatmul.mubr.f32.gmra.mxu0 %v411
  %v2557 = vpop.f32.mrf.mxu0
  %v2558 = vadd.f32 %v2413, %v2557
  %v2559 = vpop.f32.mrf.mxu0
  %2560 = vdwg.mxu0
  %2561 = vmatprep.subr.mxu0 0.0
  %2562 = vmatpush1.msra.mxu0 %v813
  %2563 = vmatprep.subr.mxu0 0.0
  %2564 = vmatpush1.msra.mxu0 %v812
  %2565 = vmatprep.subr.mxu0 0.0
  %2566 = vmatpush1.msra.mxu0 %v811
  %2567 = vmatprep.subr.mxu0 0.0
  %2568 = vmatpush1.msra.mxu0 %v810
  %2569 = vmatprep.subr.mxu0 0.0
  %2570 = vmatpush1.msra.mxu0 %v809
  %2571 = vmatprep.subr.mxu0 0.0
  %2572 = vmatpush1.msra.mxu0 %v808
  %2573 = vmatprep.subr.mxu0 0.0
  %2574 = vmatpush1.msra.mxu0 %v807
  %2575 = vmatprep.subr.mxu0 0.0
  %2576 = vmatpush1.msra.mxu0 %v806
  %2577 = vmatprep.subr.mxu0 0.0
  %2578 = vmatpush1.msra.mxu0 %v805
  %2579 = vmatprep.subr.mxu0 0.0
  %2580 = vmatpush1.msra.mxu0 %v804
  %2581 = vmatprep.subr.mxu0 0.0
  %2582 = vmatpush1.msra.mxu0 %v803
  %2583 = vmatprep.subr.mxu0 0.0
  %2584 = vmatpush1.msra.mxu0 %v802
  %2585 = vmatprep.subr.mxu0 0.0
  %2586 = vmatpush1.msra.mxu0 %v801
  %2587 = vmatprep.subr.mxu0 0.0
  %2588 = vmatpush1.msra.mxu0 %v800
  %2589 = vmatprep.subr.mxu0 0.0
  %2590 = vmatpush1.msra.mxu0 %v799
  %2591 = vmatprep.subr.mxu0 0.0
  %2592 = vmatpush1.msra.mxu0 %v798
  %2593 = vmatprep.subr.mxu0 0.0
  %2594 = vmatpush2.msra.mxu0 0.0
  %2595 = vmatprep.subr.mxu0 0.0
  %2596 = vmatpush2.msra.mxu0 0.0
  %2597 = vmatprep.subr.mxu0 0.0
  %2598 = vmatpush2.msra.mxu0 0.0
  %2599 = vmatprep.subr.mxu0 0.0
  %2600 = vmatpush2.msra.mxu0 0.0
  %2601 = vmatprep.subr.mxu0 0.0
  %2602 = vmatpush2.msra.mxu0 0.0
  %2603 = vmatprep.subr.mxu0 0.0
  %2604 = vmatpush2.msra.mxu0 0.0
  %2605 = vmatprep.subr.mxu0 0.0
  %2606 = vmatpush2.msra.mxu0 0.0
  %2607 = vmatprep.subr.mxu0 0.0
  %2608 = vmatpush2.msra.mxu0 0.0
  %2609 = vmatprep.subr.mxu0 0.0
  %2610 = vmatpush2.msra.mxu0 0.0
  %2611 = vmatprep.subr.mxu0 0.0
  %2612 = vmatpush2.msra.mxu0 0.0
  %2613 = vmatprep.subr.mxu0 0.0
  %2614 = vmatpush2.msra.mxu0 0.0
  %2615 = vmatprep.subr.mxu0 0.0
  %2616 = vmatpush2.msra.mxu0 0.0
  %2617 = vmatprep.subr.mxu0 0.0
  %2618 = vmatpush2.msra.mxu0 0.0
  %2619 = vmatprep.subr.mxu0 0.0
  %2620 = vmatpush2.msra.mxu0 0.0
  %2621 = vmatprep.subr.mxu0 0.0
  %2622 = vmatpush2.msra.mxu0 0.0
  %2623 = vmatprep.subr.mxu0 0.0
  %2624 = vmatpush2.msra.mxu0 0.0
  %2625 = vmatprep.mubr.f32.mxu0 0.0
  %2626 = vmatmul.mubr.f32.gmra.mxu0 %v38
  %v2627 = vpop.f32.mrf.mxu0
  %v2628 = vadd.f32 %v2483, %v2627
  %v2629 = vpop.f32.mrf.mxu0
  %2630 = vmatprep.mubr.f32.mxu0 0.0
  %2631 = vmatmul.mubr.f32.gmra.mxu0 %v63
  %v2632 = vpop.f32.mrf.mxu0
  %v2633 = vadd.f32 %v2488, %v2632
  %v2634 = vpop.f32.mrf.mxu0
  %2635 = vmatprep.mubr.f32.mxu0 0.0
  %2636 = vmatmul.mubr.f32.gmra.mxu0 %v88
  %v2637 = vpop.f32.mrf.mxu0
  %v2638 = vadd.f32 %v2493, %v2637
  %v2639 = vpop.f32.mrf.mxu0
  %2640 = vmatprep.mubr.f32.mxu0 0.0
  %2641 = vmatmul.mubr.f32.gmra.mxu0 %v113
  %v2642 = vpop.f32.mrf.mxu0
  %v2643 = vadd.f32 %v2498, %v2642
  %v2644 = vpop.f32.mrf.mxu0
  %2645 = vmatprep.mubr.f32.mxu0 0.0
  %2646 = vmatmul.mubr.f32.gmra.mxu0 %v138
  %v2647 = vpop.f32.mrf.mxu0
  %v2648 = vadd.f32 %v2503, %v2647
  %v2649 = vpop.f32.mrf.mxu0
  %2650 = vmatprep.mubr.f32.mxu0 0.0
  %2651 = vmatmul.mubr.f32.gmra.mxu0 %v163
  %v2652 = vpop.f32.mrf.mxu0
  %v2653 = vadd.f32 %v2508, %v2652
  %v2654 = vpop.f32.mrf.mxu0
  %2655 = vmatprep.mubr.f32.mxu0 0.0
  %2656 = vmatmul.mubr.f32.gmra.mxu0 %v188
  %v2657 = vpop.f32.mrf.mxu0
  %v2658 = vadd.f32 %v2513, %v2657
  %v2659 = vpop.f32.mrf.mxu0
  %2660 = vmatprep.mubr.f32.mxu0 0.0
  %2661 = vmatmul.mubr.f32.gmra.mxu0 %v213
  %v2662 = vpop.f32.mrf.mxu0
  %v2663 = vadd.f32 %v2518, %v2662
  %v2664 = vpop.f32.mrf.mxu0
  %2665 = vmatprep.mubr.f32.mxu0 0.0
  %2666 = vmatmul.mubr.f32.gmra.mxu0 %v238
  %v2667 = vpop.f32.mrf.mxu0
  %v2668 = vadd.f32 %v2523, %v2667
  %v2669 = vpop.f32.mrf.mxu0
  %2670 = vmatprep.mubr.f32.mxu0 0.0
  %2671 = vmatmul.mubr.f32.gmra.mxu0 %v263
  %v2672 = vpop.f32.mrf.mxu0
  %v2673 = vadd.f32 %v2528, %v2672
  %v2674 = vpop.f32.mrf.mxu0
  %2675 = vmatprep.mubr.f32.mxu0 0.0
  %2676 = vmatmul.mubr.f32.gmra.mxu0 %v288
  %v2677 = vpop.f32.mrf.mxu0
  %v2678 = vadd.f32 %v2533, %v2677
  %v2679 = vpop.f32.mrf.mxu0
  %2680 = vmatprep.mubr.f32.mxu0 0.0
  %2681 = vmatmul.mubr.f32.gmra.mxu0 %v313
  %v2682 = vpop.f32.mrf.mxu0
  %v2683 = vadd.f32 %v2538, %v2682
  %v2684 = vpop.f32.mrf.mxu0
  %2685 = vmatprep.mubr.f32.mxu0 0.0
  %2686 = vmatmul.mubr.f32.gmra.mxu0 %v338
  %v2687 = vpop.f32.mrf.mxu0
  %v2688 = vadd.f32 %v2543, %v2687
  %v2689 = vpop.f32.mrf.mxu0
  %2690 = vmatprep.mubr.f32.mxu0 0.0
  %2691 = vmatmul.mubr.f32.gmra.mxu0 %v363
  %v2692 = vpop.f32.mrf.mxu0
  %v2693 = vadd.f32 %v2548, %v2692
  %v2694 = vpop.f32.mrf.mxu0
  %2695 = vmatprep.mubr.f32.mxu0 0.0
  %2696 = vmatmul.mubr.f32.gmra.mxu0 %v388
  %v2697 = vpop.f32.mrf.mxu0
  %v2698 = vadd.f32 %v2553, %v2697
  %v2699 = vpop.f32.mrf.mxu0
  %2700 = vmatprep.mubr.f32.mxu0 0.0
  %2701 = vmatmul.mubr.f32.gmra.mxu0 %v413
  %v2702 = vpop.f32.mrf.mxu0
  %v2703 = vadd.f32 %v2558, %v2702
  %v2704 = vpop.f32.mrf.mxu0
  %2705 = vdwg.mxu0
  %v2706 = vmax.f32 %v2628, 0.0
  %v2707 = vmax.f32 %v2633, 0.0
  %v2708 = vmax.f32 %v2638, 0.0
  %v2709 = vmax.f32 %v2643, 0.0
  %v2710 = vmax.f32 %v2648, 0.0
  %v2711 = vmax.f32 %v2653, 0.0
  %v2712 = vmax.f32 %v2658, 0.0
  %v2713 = vmax.f32 %v2663, 0.0
  %v2714 = vmax.f32 %v2668, 0.0
  %v2715 = vmax.f32 %v2673, 0.0
  %v2716 = vmax.f32 %v2678, 0.0
  %v2717 = vmax.f32 %v2683, 0.0
  %v2718 = vmax.f32 %v2688, 0.0
  %v2719 = vmax.f32 %v2693, 0.0
  %v2720 = vmax.f32 %v2698, 0.0
  %v2721 = vmax.f32 %v2703, 0.0
  %v2722 = vmax.f32 %v2706, %v2710
  %v2723 = vmax.f32 %v2707, %v2711
  %v2724 = vmax.f32 %v2708, %v2712
  %v2725 = vmax.f32 %v2709, %v2713
  %v2726 = vmax.f32 %v2714, %v2718
  %v2727 = vmax.f32 %v2715, %v2719
  %v2728 = vmax.f32 %v2716, %v2720
  %v2729 = vmax.f32 %v2717, %v2721
  %v2730 = vmax.f32 %v2722, %v2726
  %v2731 = vmax.f32 %v2723, %v2727
  %v2732 = vmax.f32 %v2724, %v2728
  %v2733 = vmax.f32 %v2725, %v2729
  %2734 = vst [vmem:[%s3] sm:$0xff] %v2730
  %2735 = vst [vmem:[%s3 + $0x8] sm:$0xff] %v2731
  %2736 = vst [vmem:[%s3 + $0x10] sm:$0xff] %v2732
  %2737 = vst [vmem:[%s3 + $0x18] sm:$0xff] %v2733
  // Predicated region
  $region14: #{medium_forward.4} parent=0 // pred_check
    _
  $region15: #{medium_forward.4} parent=0 // pred_check_branch
    %2739 = sbr.rel (0) target = $region17
  $region16: #{medium_forward.4} parent=0 // pred_region
    _
  $region17: #{medium_forward.4} parent=0 // pred_fallthru
    _
  // Predicated region
  $region18: #{medium_forward.4} parent=0 // pred_check
    _
  $region19: #{medium_forward.4} parent=0 // pred_check_branch
    %2741 = sbr.rel (0) target = $region21
  $region20: #{medium_forward.4} parent=0 // pred_region
    _
  $region21: #{medium_forward.4} parent=0 // pred_fallthru
    _

// kernel: medium_forward.5
$region0: #{medium_forward.5}
  #allocation0 [shape = 'u32[]', space=smem, size = 0x4, offset = 0x4, fixed_abs, tag = 'smem constant byte address 0x4 - core index']
  #allocation1 [shape = 'u32[144,128]{1,0:T(1,128)}', space=vmem, size = 0x12000, scoped, tag = 'internal scratch']
  %s0 = inlined_call_operand.vmem [shape: f32[32,1152], index: 0, kind: input, shape index: {}]
  %s1 = inlined_call_operand.vmem [shape: f32[1152,128], index: 1, kind: input, shape index: {}]
  %s2 = inlined_call_operand.vmem [shape: f32[1,128], index: 2, kind: input, shape index: {}]
  %s3 = inlined_call_operand.vmem [shape: f32[512,512], index: 3, kind: input, shape index: {}]
  %s4 = inlined_call_operand.vmem [shape: f32[1,512], index: 4, kind: input, shape index: {}]
  %s5 = inlined_call_operand.vmem [shape: f32[512,128], index: 5, kind: input, shape index: {}]
  %s6 = inlined_call_operand.vmem [shape: f32[1,128], index: 6, kind: input, shape index: {}]
  %s7 = inlined_call_operand.hbm [shape: f32[2,128], index: 7, kind: output, shape index: {0}]
  %s8 = inlined_call_operand.hbm [shape: f32[2,512], index: 8, kind: output, shape index: {1}]
  %9 = xla_tuple %s7, %s8
  %s10 = sld [smem:[#allocation0]]
  $region46: #{medium_forward.5} parent=0
    _
  %s12 = ssub.s32 1, %s10
  %s13 = scalar_select 0, %s12, %s10
  $region1: #{medium_forward.5} parent=0
    #allocation2 [shape = 'u8[1024]{0}', space=vmem, size = 0x400, scoped, tag = 'output window, operand 0, single buffered']
    #allocation3 [shape = 's32[1]{0}', space=sflag, size = 0x4, scoped, tag = 'scoped memory for medium_forward.5']
    #allocation4 [shape = 'u8[4096]{0}', space=vmem, size = 0x1000, scoped, tag = 'output window, operand 1, single buffered']
    #allocation5 [shape = 's32[1]{0}', space=sflag, size = 0x4, scoped, tag = 'scoped memory for medium_forward.5']
    %14 = vsyncpa [#allocation3], 0
    %15 = vsyncpa [#allocation5], 0
    // Predicated region
    $region2: #{medium_forward.5} parent=1 // pred_check
      _
    $region3: #{medium_forward.5} parent=1 // pred_check_branch
      %17 = sbr.rel (0) target = $region5
    $region4: #{medium_forward.5} parent=1 // pred_region
      _
    $region5: #{medium_forward.5} parent=1 // pred_fallthru
      _
    // Predicated region
    $region6: #{medium_forward.5} parent=1 // pred_check
      _
    $region7: #{medium_forward.5} parent=1 // pred_check_branch
      %19 = sbr.rel (0) target = $region9
    $region8: #{medium_forward.5} parent=1 // pred_region
      _
    $region9: #{medium_forward.5} parent=1 // pred_fallthru
      _
    // Predicated region
    $region10: #{medium_forward.5} parent=1 // pred_check
      _
    $region11: #{medium_forward.5} parent=1 // pred_check_branch
      %21 = sbr.rel (0) target = $region13
    $region12: #{medium_forward.5} parent=1 // pred_region
      _
    $region13: #{medium_forward.5} parent=1 // pred_fallthru
      _
    // Predicated region
    $region14: #{medium_forward.5} parent=1 // pred_check
      _
    $region15: #{medium_forward.5} parent=1 // pred_check_branch
      %23 = sbr.rel (0) target = $region17
    $region16: #{medium_forward.5} parent=1 // pred_region
      _
    $region17: #{medium_forward.5} parent=1 // pred_fallthru
      _
    // Predicated region
    $region18: #{medium_forward.5} parent=1 // pred_check
      _
    $region19: #{medium_forward.5} parent=1 // pred_check_branch
      %25 = sbr.rel (0) target = $region21
    $region20: #{medium_forward.5} parent=1 // pred_region
      _
    $region21: #{medium_forward.5} parent=1 // pred_fallthru
      _
    // Predicated region
    $region22: #{medium_forward.5} parent=1 // pred_check
      _
    $region23: #{medium_forward.5} parent=1 // pred_check_branch
      %27 = sbr.rel (0) target = $region25
    $region24: #{medium_forward.5} parent=1 // pred_region
      _
    $region25: #{medium_forward.5} parent=1 // pred_fallthru
      _
    // Predicated region
    $region26: #{medium_forward.5} parent=1 // pred_check
      _
    $region27: #{medium_forward.5} parent=1 // pred_check_branch
      %29 = sbr.rel (0) target = $region29
    $region28: #{medium_forward.5} parent=1 // pred_region
      _
    $region29: #{medium_forward.5} parent=1 // pred_fallthru
      _
    %v30 = vld [vmem:[%s0] sm:$0xff]
    %v31 = vld [vmem:[%s0 + $0x8] sm:$0xff]
    %v32 = vld [vmem:[%s0 + $0x10] sm:$0xff]
    %v33 = vld [vmem:[%s0 + $0x18] sm:$0xff]
    %v34 = vld [vmem:[%s0 + $0x20] sm:$0xff]
    %v35 = vld [vmem:[%s0 + $0x28] sm:$0xff]
    %v36 = vld [vmem:[%s0 + $0x30] sm:$0xff]
    %v37 = vld [vmem:[%s0 + $0x38] sm:$0xff]
    %v38 = vld [vmem:[%s0 + $0x40] sm:$0xff]
    %v39 = vld [vmem:[%s0 + $0x48] sm:$0xff]
    %v40 = vld [vmem:[%s0 + $0x50] sm:$0xff]
    %v41 = vld [vmem:[%s0 + $0x58] sm:$0xff]
    %v42 = vld [vmem:[%s0 + $0x60] sm:$0xff]
    %v43 = vld [vmem:[%s0 + $0x68] sm:$0xff]
    %v44 = vld [vmem:[%s0 + $0x70] sm:$0xff]
    %v45 = vld [vmem:[%s0 + $0x78] sm:$0xff]
    %v46 = vld [vmem:[%s0 + $0x80] sm:$0xff]
    %v47 = vld [vmem:[%s0 + $0x88] sm:$0xff]
    %v48 = vld [vmem:[%s0 + $0x90] sm:$0xff]
    %v49 = vld [vmem:[%s0 + $0x98] sm:$0xff]
    %v50 = vld [vmem:[%s0 + $0xa0] sm:$0xff]
    %v51 = vld [vmem:[%s0 + $0xa8] sm:$0xff]
    %v52 = vld [vmem:[%s0 + $0xb0] sm:$0xff]
    %v53 = vld [vmem:[%s0 + $0xb8] sm:$0xff]
    %v54 = vld [vmem:[%s0 + $0xc0] sm:$0xff]
    %v55 = vld [vmem:[%s0 + $0xc8] sm:$0xff]
    %v56 = vld [vmem:[%s0 + $0xd0] sm:$0xff]
    %v57 = vld [vmem:[%s0 + $0xd8] sm:$0xff]
    %v58 = vld [vmem:[%s0 + $0xe0] sm:$0xff]
    %v59 = vld [vmem:[%s0 + $0xe8] sm:$0xff]
    %v60 = vld [vmem:[%s0 + $0xf0] sm:$0xff]
    %v61 = vld [vmem:[%s0 + $0xf8] sm:$0xff]
    %v62 = vld [vmem:[%s0 + $0x100] sm:$0xff]
    %v63 = vld [vmem:[%s0 + $0x108] sm:$0xff]
    %v64 = vld [vmem:[%s0 + $0x110] sm:$0xff]
    %v65 = vld [vmem:[%s0 + $0x118] sm:$0xff]
    %v66 = vld [vmem:[%s1] sm:$0xff]
    %v67 = vld [vmem:[%s1 + $0x8] sm:$0xff]
    %v68 = vld [vmem:[%s1 + $0x10] sm:$0xff]
    %v69 = vld [vmem:[%s1 + $0x18] sm:$0xff]
    %v70 = vld [vmem:[%s1 + $0x20] sm:$0xff]
    %v71 = vld [vmem:[%s1 + $0x28] sm:$0xff]
    %v72 = vld [vmem:[%s1 + $0x30] sm:$0xff]
    %v73 = vld [vmem:[%s1 + $0x38] sm:$0xff]
    %v74 = vld [vmem:[%s1 + $0x40] sm:$0xff]
    %v75 = vld [vmem:[%s1 + $0x48] sm:$0xff]
    %v76 = vld [vmem:[%s1 + $0x50] sm:$0xff]
    %v77 = vld [vmem:[%s1 + $0x58] sm:$0xff]
    %v78 = vld [vmem:[%s1 + $0x60] sm:$0xff]
    %v79 = vld [vmem:[%s1 + $0x68] sm:$0xff]
    %v80 = vld [vmem:[%s1 + $0x70] sm:$0xff]
    %v81 = vld [vmem:[%s1 + $0x78] sm:$0xff]
    %v82 = vld [vmem:[%s1 + $0x80] sm:$0xff]
    %v83 = vld [vmem:[%s1 + $0x88] sm:$0xff]
    %v84 = vld [vmem:[%s1 + $0x90] sm:$0xff]
    %v85 = vld [vmem:[%s1 + $0x98] sm:$0xff]
    %v86 = vld [vmem:[%s1 + $0xa0] sm:$0xff]
    %v87 = vld [vmem:[%s1 + $0xa8] sm:$0xff]
    %v88 = vld [vmem:[%s1 + $0xb0] sm:$0xff]
    %v89 = vld [vmem:[%s1 + $0xb8] sm:$0xff]
    %v90 = vld [vmem:[%s1 + $0xc0] sm:$0xff]
    %v91 = vld [vmem:[%s1 + $0xc8] sm:$0xff]
    %v92 = vld [vmem:[%s1 + $0xd0] sm:$0xff]
    %v93 = vld [vmem:[%s1 + $0xd8] sm:$0xff]
    %v94 = vld [vmem:[%s1 + $0xe0] sm:$0xff]
    %v95 = vld [vmem:[%s1 + $0xe8] sm:$0xff]
    %v96 = vld [vmem:[%s1 + $0xf0] sm:$0xff]
    %v97 = vld [vmem:[%s1 + $0xf8] sm:$0xff]
    %v98 = vld [vmem:[%s1 + $0x100] sm:$0xff]
    %v99 = vld [vmem:[%s1 + $0x108] sm:$0xff]
    %v100 = vld [vmem:[%s1 + $0x110] sm:$0xff]
    %v101 = vld [vmem:[%s1 + $0x118] sm:$0xff]
    %v102 = vld [vmem:[%s1 + $0x120] sm:$0xff]
    %v103 = vld [vmem:[%s1 + $0x128] sm:$0xff]
    %v104 = vld [vmem:[%s1 + $0x130] sm:$0xff]
    %v105 = vld [vmem:[%s1 + $0x138] sm:$0xff]
    %v106 = vld [vmem:[%s1 + $0x140] sm:$0xff]
    %v107 = vld [vmem:[%s1 + $0x148] sm:$0xff]
    %v108 = vld [vmem:[%s1 + $0x150] sm:$0xff]
    %v109 = vld [vmem:[%s1 + $0x158] sm:$0xff]
    %v110 = vld [vmem:[%s1 + $0x160] sm:$0xff]
    %v111 = vld [vmem:[%s1 + $0x168] sm:$0xff]
    %v112 = vld [vmem:[%s1 + $0x170] sm:$0xff]
    %v113 = vld [vmem:[%s1 + $0x178] sm:$0xff]
    %v114 = vld [vmem:[%s1 + $0x180] sm:$0xff]
    %v115 = vld [vmem:[%s1 + $0x188] sm:$0xff]
    %v116 = vld [vmem:[%s1 + $0x190] sm:$0xff]
    %v117 = vld [vmem:[%s1 + $0x198] sm:$0xff]
    %v118 = vld [vmem:[%s1 + $0x1a0] sm:$0xff]
    %v119 = vld [vmem:[%s1 + $0x1a8] sm:$0xff]
    %v120 = vld [vmem:[%s1 + $0x1b0] sm:$0xff]
    %v121 = vld [vmem:[%s1 + $0x1b8] sm:$0xff]
    %v122 = vld [vmem:[%s1 + $0x1c0] sm:$0xff]
    %v123 = vld [vmem:[%s1 + $0x1c8] sm:$0xff]
    %v124 = vld [vmem:[%s1 + $0x1d0] sm:$0xff]
    %v125 = vld [vmem:[%s1 + $0x1d8] sm:$0xff]
    %v126 = vld [vmem:[%s1 + $0x1e0] sm:$0xff]
    %v127 = vld [vmem:[%s1 + $0x1e8] sm:$0xff]
    %v128 = vld [vmem:[%s1 + $0x1f0] sm:$0xff]
    %v129 = vld [vmem:[%s1 + $0x1f8] sm:$0xff]
    %v130 = vld [vmem:[%s1 + $0x200] sm:$0xff]
    %v131 = vld [vmem:[%s1 + $0x208] sm:$0xff]
    %v132 = vld [vmem:[%s1 + $0x210] sm:$0xff]
    %v133 = vld [vmem:[%s1 + $0x218] sm:$0xff]
    %v134 = vld [vmem:[%s1 + $0x220] sm:$0xff]
    %v135 = vld [vmem:[%s1 + $0x228] sm:$0xff]
    %v136 = vld [vmem:[%s1 + $0x230] sm:$0xff]
    %v137 = vld [vmem:[%s1 + $0x238] sm:$0xff]
    %v138 = vld [vmem:[%s1 + $0x240] sm:$0xff]
    %v139 = vld [vmem:[%s1 + $0x248] sm:$0xff]
    %v140 = vld [vmem:[%s1 + $0x250] sm:$0xff]
    %v141 = vld [vmem:[%s1 + $0x258] sm:$0xff]
    %v142 = vld [vmem:[%s1 + $0x260] sm:$0xff]
    %v143 = vld [vmem:[%s1 + $0x268] sm:$0xff]
    %v144 = vld [vmem:[%s1 + $0x270] sm:$0xff]
    %v145 = vld [vmem:[%s1 + $0x278] sm:$0xff]
    %v146 = vld [vmem:[%s1 + $0x280] sm:$0xff]
    %v147 = vld [vmem:[%s1 + $0x288] sm:$0xff]
    %v148 = vld [vmem:[%s1 + $0x290] sm:$0xff]
    %v149 = vld [vmem:[%s1 + $0x298] sm:$0xff]
    %v150 = vld [vmem:[%s1 + $0x2a0] sm:$0xff]
    %v151 = vld [vmem:[%s1 + $0x2a8] sm:$0xff]
    %v152 = vld [vmem:[%s1 + $0x2b0] sm:$0xff]
    %v153 = vld [vmem:[%s1 + $0x2b8] sm:$0xff]
    %v154 = vld [vmem:[%s1 + $0x2c0] sm:$0xff]
    %v155 = vld [vmem:[%s1 + $0x2c8] sm:$0xff]
    %v156 = vld [vmem:[%s1 + $0x2d0] sm:$0xff]
    %v157 = vld [vmem:[%s1 + $0x2d8] sm:$0xff]
    %v158 = vld [vmem:[%s1 + $0x2e0] sm:$0xff]
    %v159 = vld [vmem:[%s1 + $0x2e8] sm:$0xff]
    %v160 = vld [vmem:[%s1 + $0x2f0] sm:$0xff]
    %v161 = vld [vmem:[%s1 + $0x2f8] sm:$0xff]
    %v162 = vld [vmem:[%s1 + $0x300] sm:$0xff]
    %v163 = vld [vmem:[%s1 + $0x308] sm:$0xff]
    %v164 = vld [vmem:[%s1 + $0x310] sm:$0xff]
    %v165 = vld [vmem:[%s1 + $0x318] sm:$0xff]
    %v166 = vld [vmem:[%s1 + $0x320] sm:$0xff]
    %v167 = vld [vmem:[%s1 + $0x328] sm:$0xff]
    %v168 = vld [vmem:[%s1 + $0x330] sm:$0xff]
    %v169 = vld [vmem:[%s1 + $0x338] sm:$0xff]
    %v170 = vld [vmem:[%s1 + $0x340] sm:$0xff]
    %v171 = vld [vmem:[%s1 + $0x348] sm:$0xff]
    %v172 = vld [vmem:[%s1 + $0x350] sm:$0xff]
    %v173 = vld [vmem:[%s1 + $0x358] sm:$0xff]
    %v174 = vld [vmem:[%s1 + $0x360] sm:$0xff]
    %v175 = vld [vmem:[%s1 + $0x368] sm:$0xff]
    %v176 = vld [vmem:[%s1 + $0x370] sm:$0xff]
    %v177 = vld [vmem:[%s1 + $0x378] sm:$0xff]
    %v178 = vld [vmem:[%s1 + $0x380] sm:$0xff]
    %v179 = vld [vmem:[%s1 + $0x388] sm:$0xff]
    %v180 = vld [vmem:[%s1 + $0x390] sm:$0xff]
    %v181 = vld [vmem:[%s1 + $0x398] sm:$0xff]
    %v182 = vld [vmem:[%s1 + $0x3a0] sm:$0xff]
    %v183 = vld [vmem:[%s1 + $0x3a8] sm:$0xff]
    %v184 = vld [vmem:[%s1 + $0x3b0] sm:$0xff]
    %v185 = vld [vmem:[%s1 + $0x3b8] sm:$0xff]
    %v186 = vld [vmem:[%s1 + $0x3c0] sm:$0xff]
    %v187 = vld [vmem:[%s1 + $0x3c8] sm:$0xff]
    %v188 = vld [vmem:[%s1 + $0x3d0] sm:$0xff]
    %v189 = vld [vmem:[%s1 + $0x3d8] sm:$0xff]
    %v190 = vld [vmem:[%s1 + $0x3e0] sm:$0xff]
    %v191 = vld [vmem:[%s1 + $0x3e8] sm:$0xff]
    %v192 = vld [vmem:[%s1 + $0x3f0] sm:$0xff]
    %v193 = vld [vmem:[%s1 + $0x3f8] sm:$0xff]
    %v194 = vld [vmem:[%s1 + $0x400] sm:$0xff]
    %v195 = vld [vmem:[%s1 + $0x408] sm:$0xff]
    %v196 = vld [vmem:[%s1 + $0x410] sm:$0xff]
    %v197 = vld [vmem:[%s1 + $0x418] sm:$0xff]
    %v198 = vld [vmem:[%s1 + $0x420] sm:$0xff]
    %v199 = vld [vmem:[%s1 + $0x428] sm:$0xff]
    %v200 = vld [vmem:[%s1 + $0x430] sm:$0xff]
    %v201 = vld [vmem:[%s1 + $0x438] sm:$0xff]
    %v202 = vld [vmem:[%s1 + $0x440] sm:$0xff]
    %v203 = vld [vmem:[%s1 + $0x448] sm:$0xff]
    %v204 = vld [vmem:[%s1 + $0x450] sm:$0xff]
    %v205 = vld [vmem:[%s1 + $0x458] sm:$0xff]
    %v206 = vld [vmem:[%s1 + $0x460] sm:$0xff]
    %v207 = vld [vmem:[%s1 + $0x468] sm:$0xff]
    %v208 = vld [vmem:[%s1 + $0x470] sm:$0xff]
    %v209 = vld [vmem:[%s1 + $0x478] sm:$0xff]
    %v210 = vld [vmem:[%s2] sm:$0x1]
    %v212 = vlaneseq
    %v213 = vshrl.u32 %v212, 7
    %v214 = vsub.s32 0, %v213
    %v215 = vrot.slane %v210, %v214
    %217 = vmatprep.subr.mxu0 0.0
    %218 = vmatpush1.msra.mxu0 %v81
    %219 = vmatprep.subr.mxu0 0.0
    %220 = vmatpush1.msra.mxu0 %v80
    %221 = vmatprep.subr.mxu0 0.0
    %222 = vmatpush1.msra.mxu0 %v79
    %223 = vmatprep.subr.mxu0 0.0
    %224 = vmatpush1.msra.mxu0 %v78
    %225 = vmatprep.subr.mxu0 0.0
    %226 = vmatpush1.msra.mxu0 %v77
    %227 = vmatprep.subr.mxu0 0.0
    %228 = vmatpush1.msra.mxu0 %v76
    %229 = vmatprep.subr.mxu0 0.0
    %230 = vmatpush1.msra.mxu0 %v75
    %231 = vmatprep.subr.mxu0 0.0
    %232 = vmatpush1.msra.mxu0 %v74
    %233 = vmatprep.subr.mxu0 0.0
    %234 = vmatpush1.msra.mxu0 %v73
    %235 = vmatprep.subr.mxu0 0.0
    %236 = vmatpush1.msra.mxu0 %v72
    %237 = vmatprep.subr.mxu0 0.0
    %238 = vmatpush1.msra.mxu0 %v71
    %239 = vmatprep.subr.mxu0 0.0
    %240 = vmatpush1.msra.mxu0 %v70
    %241 = vmatprep.subr.mxu0 0.0
    %242 = vmatpush1.msra.mxu0 %v69
    %243 = vmatprep.subr.mxu0 0.0
    %244 = vmatpush1.msra.mxu0 %v68
    %245 = vmatprep.subr.mxu0 0.0
    %246 = vmatpush1.msra.mxu0 %v67
    %247 = vmatprep.subr.mxu0 0.0
    %248 = vmatpush1.msra.mxu0 %v66
    %249 = vmatprep.subr.mxu0 0.0
    %250 = vmatpush2.msra.mxu0 %v97
    %251 = vmatprep.subr.mxu0 0.0
    %252 = vmatpush2.msra.mxu0 %v96
    %253 = vmatprep.subr.mxu0 0.0
    %254 = vmatpush2.msra.mxu0 %v95
    %255 = vmatprep.subr.mxu0 0.0
    %256 = vmatpush2.msra.mxu0 %v94
    %257 = vmatprep.subr.mxu0 0.0
    %258 = vmatpush2.msra.mxu0 %v93
    %259 = vmatprep.subr.mxu0 0.0
    %260 = vmatpush2.msra.mxu0 %v92
    %261 = vmatprep.subr.mxu0 0.0
    %262 = vmatpush2.msra.mxu0 %v91
    %263 = vmatprep.subr.mxu0 0.0
    %264 = vmatpush2.msra.mxu0 %v90
    %265 = vmatprep.subr.mxu0 0.0
    %266 = vmatpush2.msra.mxu0 %v89
    %267 = vmatprep.subr.mxu0 0.0
    %268 = vmatpush2.msra.mxu0 %v88
    %269 = vmatprep.subr.mxu0 0.0
    %270 = vmatpush2.msra.mxu0 %v87
    %271 = vmatprep.subr.mxu0 0.0
    %272 = vmatpush2.msra.mxu0 %v86
    %273 = vmatprep.subr.mxu0 0.0
    %274 = vmatpush2.msra.mxu0 %v85
    %275 = vmatprep.subr.mxu0 0.0
    %276 = vmatpush2.msra.mxu0 %v84
    %277 = vmatprep.subr.mxu0 0.0
    %278 = vmatpush2.msra.mxu0 %v83
    %279 = vmatprep.subr.mxu0 0.0
    %280 = vmatpush2.msra.mxu0 %v82
    %281 = vmatprep.mubr.f32.mxu0 %v31
    %282 = vmatmul.mubr.f32.gmra.mxu0 %v30
    %v283 = vpop.f32.mrf.mxu0
    %v284 = vadd.f32 %v215, %v283
    %v285 = vpop.f32.mrf.mxu0
    %286 = vmatprep.mubr.f32.mxu0 %v40
    %287 = vmatmul.mubr.f32.gmra.mxu0 %v39
    %v288 = vpop.f32.mrf.mxu0
    %v289 = vadd.f32 %v215, %v288
    %v290 = vpop.f32.mrf.mxu0
    %291 = vmatprep.mubr.f32.mxu0 %v49
    %292 = vmatmul.mubr.f32.gmra.mxu0 %v48
    %v293 = vpop.f32.mrf.mxu0
    %v294 = vadd.f32 %v215, %v293
    %v295 = vpop.f32.mrf.mxu0
    %296 = vmatprep.mubr.f32.mxu0 %v58
    %297 = vmatmul.mubr.f32.gmra.mxu0 %v57
    %v298 = vpop.f32.mrf.mxu0
    %v299 = vadd.f32 %v215, %v298
    %v300 = vpop.f32.mrf.mxu0
    %301 = vdwg.mxu0
    %302 = vmatprep.subr.mxu0 0.0
    %303 = vmatpush1.msra.mxu0 %v113
    %304 = vmatprep.subr.mxu0 0.0
    %305 = vmatpush1.msra.mxu0 %v112
    %306 = vmatprep.subr.mxu0 0.0
    %307 = vmatpush1.msra.mxu0 %v111
    %308 = vmatprep.subr.mxu0 0.0
    %309 = vmatpush1.msra.mxu0 %v110
    %310 = vmatprep.subr.mxu0 0.0
    %311 = vmatpush1.msra.mxu0 %v109
    %312 = vmatprep.subr.mxu0 0.0
    %313 = vmatpush1.msra.mxu0 %v108
    %314 = vmatprep.subr.mxu0 0.0
    %315 = vmatpush1.msra.mxu0 %v107
    %316 = vmatprep.subr.mxu0 0.0
    %317 = vmatpush1.msra.mxu0 %v106
    %318 = vmatprep.subr.mxu0 0.0
    %319 = vmatpush1.msra.mxu0 %v105
    %320 = vmatprep.subr.mxu0 0.0
    %321 = vmatpush1.msra.mxu0 %v104
    %322 = vmatprep.subr.mxu0 0.0
    %323 = vmatpush1.msra.mxu0 %v103
    %324 = vmatprep.subr.mxu0 0.0
    %325 = vmatpush1.msra.mxu0 %v102
    %326 = vmatprep.subr.mxu0 0.0
    %327 = vmatpush1.msra.mxu0 %v101
    %328 = vmatprep.subr.mxu0 0.0
    %329 = vmatpush1.msra.mxu0 %v100
    %330 = vmatprep.subr.mxu0 0.0
    %331 = vmatpush1.msra.mxu0 %v99
    %332 = vmatprep.subr.mxu0 0.0
    %333 = vmatpush1.msra.mxu0 %v98
    %334 = vmatprep.subr.mxu0 0.0
    %335 = vmatpush2.msra.mxu0 %v129
    %336 = vmatprep.subr.mxu0 0.0
    %337 = vmatpush2.msra.mxu0 %v128
    %338 = vmatprep.subr.mxu0 0.0
    %339 = vmatpush2.msra.mxu0 %v127
    %340 = vmatprep.subr.mxu0 0.0
    %341 = vmatpush2.msra.mxu0 %v126
    %342 = vmatprep.subr.mxu0 0.0
    %343 = vmatpush2.msra.mxu0 %v125
    %344 = vmatprep.subr.mxu0 0.0
    %345 = vmatpush2.msra.mxu0 %v124
    %346 = vmatprep.subr.mxu0 0.0
    %347 = vmatpush2.msra.mxu0 %v123
    %348 = vmatprep.subr.mxu0 0.0
    %349 = vmatpush2.msra.mxu0 %v122
    %350 = vmatprep.subr.mxu0 0.0
    %351 = vmatpush2.msra.mxu0 %v121
    %352 = vmatprep.subr.mxu0 0.0
    %353 = vmatpush2.msra.mxu0 %v120
    %354 = vmatprep.subr.mxu0 0.0
    %355 = vmatpush2.msra.mxu0 %v119
    %356 = vmatprep.subr.mxu0 0.0
    %357 = vmatpush2.msra.mxu0 %v118
    %358 = vmatprep.subr.mxu0 0.0
    %359 = vmatpush2.msra.mxu0 %v117
    %360 = vmatprep.subr.mxu0 0.0
    %361 = vmatpush2.msra.mxu0 %v116
    %362 = vmatprep.subr.mxu0 0.0
    %363 = vmatpush2.msra.mxu0 %v115
    %364 = vmatprep.subr.mxu0 0.0
    %365 = vmatpush2.msra.mxu0 %v114
    %366 = vmatprep.mubr.f32.mxu0 %v33
    %367 = vmatmul.mubr.f32.gmra.mxu0 %v32
    %v368 = vpop.f32.mrf.mxu0
    %v369 = vadd.f32 %v284, %v368
    %v370 = vpop.f32.mrf.mxu0
    %371 = vmatprep.mubr.f32.mxu0 %v42
    %372 = vmatmul.mubr.f32.gmra.mxu0 %v41
    %v373 = vpop.f32.mrf.mxu0
    %v374 = vadd.f32 %v289, %v373
    %v375 = vpop.f32.mrf.mxu0
    %376 = vmatprep.mubr.f32.mxu0 %v51
    %377 = vmatmul.mubr.f32.gmra.mxu0 %v50
    %v378 = vpop.f32.mrf.mxu0
    %v379 = vadd.f32 %v294, %v378
    %v380 = vpop.f32.mrf.mxu0
    %381 = vmatprep.mubr.f32.mxu0 %v60
    %382 = vmatmul.mubr.f32.gmra.mxu0 %v59
    %v383 = vpop.f32.mrf.mxu0
    %v384 = vadd.f32 %v299, %v383
    %v385 = vpop.f32.mrf.mxu0
    %386 = vdwg.mxu0
    %387 = vmatprep.subr.mxu0 0.0
    %388 = vmatpush1.msra.mxu0 %v145
    %389 = vmatprep.subr.mxu0 0.0
    %390 = vmatpush1.msra.mxu0 %v144
    %391 = vmatprep.subr.mxu0 0.0
    %392 = vmatpush1.msra.mxu0 %v143
    %393 = vmatprep.subr.mxu0 0.0
    %394 = vmatpush1.msra.mxu0 %v142
    %395 = vmatprep.subr.mxu0 0.0
    %396 = vmatpush1.msra.mxu0 %v141
    %397 = vmatprep.subr.mxu0 0.0
    %398 = vmatpush1.msra.mxu0 %v140
    %399 = vmatprep.subr.mxu0 0.0
    %400 = vmatpush1.msra.mxu0 %v139
    %401 = vmatprep.subr.mxu0 0.0
    %402 = vmatpush1.msra.mxu0 %v138
    %403 = vmatprep.subr.mxu0 0.0
    %404 = vmatpush1.msra.mxu0 %v137
    %405 = vmatprep.subr.mxu0 0.0
    %406 = vmatpush1.msra.mxu0 %v136
    %407 = vmatprep.subr.mxu0 0.0
    %408 = vmatpush1.msra.mxu0 %v135
    %409 = vmatprep.subr.mxu0 0.0
    %410 = vmatpush1.msra.mxu0 %v134
    %411 = vmatprep.subr.mxu0 0.0
    %412 = vmatpush1.msra.mxu0 %v133
    %413 = vmatprep.subr.mxu0 0.0
    %414 = vmatpush1.msra.mxu0 %v132
    %415 = vmatprep.subr.mxu0 0.0
    %416 = vmatpush1.msra.mxu0 %v131
    %417 = vmatprep.subr.mxu0 0.0
    %418 = vmatpush1.msra.mxu0 %v130
    %419 = vmatprep.subr.mxu0 0.0
    %420 = vmatpush2.msra.mxu0 %v161
    %421 = vmatprep.subr.mxu0 0.0
    %422 = vmatpush2.msra.mxu0 %v160
    %423 = vmatprep.subr.mxu0 0.0
    %424 = vmatpush2.msra.mxu0 %v159
    %425 = vmatprep.subr.mxu0 0.0
    %426 = vmatpush2.msra.mxu0 %v158
    %427 = vmatprep.subr.mxu0 0.0
    %428 = vmatpush2.msra.mxu0 %v157
    %429 = vmatprep.subr.mxu0 0.0
    %430 = vmatpush2.msra.mxu0 %v156
    %431 = vmatprep.subr.mxu0 0.0
    %432 = vmatpush2.msra.mxu0 %v155
    %433 = vmatprep.subr.mxu0 0.0
    %434 = vmatpush2.msra.mxu0 %v154
    %435 = vmatprep.subr.mxu0 0.0
    %436 = vmatpush2.msra.mxu0 %v153
    %437 = vmatprep.subr.mxu0 0.0
    %438 = vmatpush2.msra.mxu0 %v152
    %439 = vmatprep.subr.mxu0 0.0
    %440 = vmatpush2.msra.mxu0 %v151
    %441 = vmatprep.subr.mxu0 0.0
    %442 = vmatpush2.msra.mxu0 %v150
    %443 = vmatprep.subr.mxu0 0.0
    %444 = vmatpush2.msra.mxu0 %v149
    %445 = vmatprep.subr.mxu0 0.0
    %446 = vmatpush2.msra.mxu0 %v148
    %447 = vmatprep.subr.mxu0 0.0
    %448 = vmatpush2.msra.mxu0 %v147
    %449 = vmatprep.subr.mxu0 0.0
    %450 = vmatpush2.msra.mxu0 %v146
    %451 = vmatprep.mubr.f32.mxu0 %v35
    %452 = vmatmul.mubr.f32.gmra.mxu0 %v34
    %v453 = vpop.f32.mrf.mxu0
    %v454 = vadd.f32 %v369, %v453
    %v455 = vpop.f32.mrf.mxu0
    %456 = vmatprep.mubr.f32.mxu0 %v44
    %457 = vmatmul.mubr.f32.gmra.mxu0 %v43
    %v458 = vpop.f32.mrf.mxu0
    %v459 = vadd.f32 %v374, %v458
    %v460 = vpop.f32.mrf.mxu0
    %461 = vmatprep.mubr.f32.mxu0 %v53
    %462 = vmatmul.mubr.f32.gmra.mxu0 %v52
    %v463 = vpop.f32.mrf.mxu0
    %v464 = vadd.f32 %v379, %v463
    %v465 = vpop.f32.mrf.mxu0
    %466 = vmatprep.mubr.f32.mxu0 %v62
    %467 = vmatmul.mubr.f32.gmra.mxu0 %v61
    %v468 = vpop.f32.mrf.mxu0
    %v469 = vadd.f32 %v384, %v468
    %v470 = vpop.f32.mrf.mxu0
    %471 = vdwg.mxu0
    %472 = vmatprep.subr.mxu0 0.0
    %473 = vmatpush1.msra.mxu0 %v177
    %474 = vmatprep.subr.mxu0 0.0
    %475 = vmatpush1.msra.mxu0 %v176
    %476 = vmatprep.subr.mxu0 0.0
    %477 = vmatpush1.msra.mxu0 %v175
    %478 = vmatprep.subr.mxu0 0.0
    %479 = vmatpush1.msra.mxu0 %v174
    %480 = vmatprep.subr.mxu0 0.0
    %481 = vmatpush1.msra.mxu0 %v173
    %482 = vmatprep.subr.mxu0 0.0
    %483 = vmatpush1.msra.mxu0 %v172
    %484 = vmatprep.subr.mxu0 0.0
    %485 = vmatpush1.msra.mxu0 %v171
    %486 = vmatprep.subr.mxu0 0.0
    %487 = vmatpush1.msra.mxu0 %v170
    %488 = vmatprep.subr.mxu0 0.0
    %489 = vmatpush1.msra.mxu0 %v169
    %490 = vmatprep.subr.mxu0 0.0
    %491 = vmatpush1.msra.mxu0 %v168
    %492 = vmatprep.subr.mxu0 0.0
    %493 = vmatpush1.msra.mxu0 %v167
    %494 = vmatprep.subr.mxu0 0.0
    %495 = vmatpush1.msra.mxu0 %v166
    %496 = vmatprep.subr.mxu0 0.0
    %497 = vmatpush1.msra.mxu0 %v165
    %498 = vmatprep.subr.mxu0 0.0
    %499 = vmatpush1.msra.mxu0 %v164
    %500 = vmatprep.subr.mxu0 0.0
    %501 = vmatpush1.msra.mxu0 %v163
    %502 = vmatprep.subr.mxu0 0.0
    %503 = vmatpush1.msra.mxu0 %v162
    %504 = vmatprep.subr.mxu0 0.0
    %505 = vmatpush2.msra.mxu0 %v193
    %506 = vmatprep.subr.mxu0 0.0
    %507 = vmatpush2.msra.mxu0 %v192
    %508 = vmatprep.subr.mxu0 0.0
    %509 = vmatpush2.msra.mxu0 %v191
    %510 = vmatprep.subr.mxu0 0.0
    %511 = vmatpush2.msra.mxu0 %v190
    %512 = vmatprep.subr.mxu0 0.0
    %513 = vmatpush2.msra.mxu0 %v189
    %514 = vmatprep.subr.mxu0 0.0
    %515 = vmatpush2.msra.mxu0 %v188
    %516 = vmatprep.subr.mxu0 0.0
    %517 = vmatpush2.msra.mxu0 %v187
    %518 = vmatprep.subr.mxu0 0.0
    %519 = vmatpush2.msra.mxu0 %v186
    %520 = vmatprep.subr.mxu0 0.0
    %521 = vmatpush2.msra.mxu0 %v185
    %522 = vmatprep.subr.mxu0 0.0
    %523 = vmatpush2.msra.mxu0 %v184
    %524 = vmatprep.subr.mxu0 0.0
    %525 = vmatpush2.msra.mxu0 %v183
    %526 = vmatprep.subr.mxu0 0.0
    %527 = vmatpush2.msra.mxu0 %v182
    %528 = vmatprep.subr.mxu0 0.0
    %529 = vmatpush2.msra.mxu0 %v181
    %530 = vmatprep.subr.mxu0 0.0
    %531 = vmatpush2.msra.mxu0 %v180
    %532 = vmatprep.subr.mxu0 0.0
    %533 = vmatpush2.msra.mxu0 %v179
    %534 = vmatprep.subr.mxu0 0.0
    %535 = vmatpush2.msra.mxu0 %v178
    %536 = vmatprep.mubr.f32.mxu0 %v37
    %537 = vmatmul.mubr.f32.gmra.mxu0 %v36
    %v538 = vpop.f32.mrf.mxu0
    %v539 = vadd.f32 %v454, %v538
    %v540 = vpop.f32.mrf.mxu0
    %541 = vmatprep.mubr.f32.mxu0 %v46
    %542 = vmatmul.mubr.f32.gmra.mxu0 %v45
    %v543 = vpop.f32.mrf.mxu0
    %v544 = vadd.f32 %v459, %v543
    %v545 = vpop.f32.mrf.mxu0
    %546 = vmatprep.mubr.f32.mxu0 %v55
    %547 = vmatmul.mubr.f32.gmra.mxu0 %v54
    %v548 = vpop.f32.mrf.mxu0
    %v549 = vadd.f32 %v464, %v548
    %v550 = vpop.f32.mrf.mxu0
    %551 = vmatprep.mubr.f32.mxu0 %v64
    %552 = vmatmul.mubr.f32.gmra.mxu0 %v63
    %v553 = vpop.f32.mrf.mxu0
    %v554 = vadd.f32 %v469, %v553
    %v555 = vpop.f32.mrf.mxu0
    %556 = vdwg.mxu0
    %557 = vmatprep.subr.mxu0 0.0
    %558 = vmatpush1.msra.mxu0 %v209
    %559 = vmatprep.subr.mxu0 0.0
    %560 = vmatpush1.msra.mxu0 %v208
    %561 = vmatprep.subr.mxu0 0.0
    %562 = vmatpush1.msra.mxu0 %v207
    %563 = vmatprep.subr.mxu0 0.0
    %564 = vmatpush1.msra.mxu0 %v206
    %565 = vmatprep.subr.mxu0 0.0
    %566 = vmatpush1.msra.mxu0 %v205
    %567 = vmatprep.subr.mxu0 0.0
    %568 = vmatpush1.msra.mxu0 %v204
    %569 = vmatprep.subr.mxu0 0.0
    %570 = vmatpush1.msra.mxu0 %v203
    %571 = vmatprep.subr.mxu0 0.0
    %572 = vmatpush1.msra.mxu0 %v202
    %573 = vmatprep.subr.mxu0 0.0
    %574 = vmatpush1.msra.mxu0 %v201
    %575 = vmatprep.subr.mxu0 0.0
    %576 = vmatpush1.msra.mxu0 %v200
    %577 = vmatprep.subr.mxu0 0.0
    %578 = vmatpush1.msra.mxu0 %v199
    %579 = vmatprep.subr.mxu0 0.0
    %580 = vmatpush1.msra.mxu0 %v198
    %581 = vmatprep.subr.mxu0 0.0
    %582 = vmatpush1.msra.mxu0 %v197
    %583 = vmatprep.subr.mxu0 0.0
    %584 = vmatpush1.msra.mxu0 %v196
    %585 = vmatprep.subr.mxu0 0.0
    %586 = vmatpush1.msra.mxu0 %v195
    %587 = vmatprep.subr.mxu0 0.0
    %588 = vmatpush1.msra.mxu0 %v194
    %589 = vmatprep.subr.mxu0 0.0
    %590 = vmatpush2.msra.mxu0 0.0
    %591 = vmatprep.subr.mxu0 0.0
    %592 = vmatpush2.msra.mxu0 0.0
    %593 = vmatprep.subr.mxu0 0.0
    %594 = vmatpush2.msra.mxu0 0.0
    %595 = vmatprep.subr.mxu0 0.0
    %596 = vmatpush2.msra.mxu0 0.0
    %597 = vmatprep.subr.mxu0 0.0
    %598 = vmatpush2.msra.mxu0 0.0
    %599 = vmatprep.subr.mxu0 0.0
    %600 = vmatpush2.msra.mxu0 0.0
    %601 = vmatprep.subr.mxu0 0.0
    %602 = vmatpush2.msra.mxu0 0.0
    %603 = vmatprep.subr.mxu0 0.0
    %604 = vmatpush2.msra.mxu0 0.0
    %605 = vmatprep.subr.mxu0 0.0
    %606 = vmatpush2.msra.mxu0 0.0
    %607 = vmatprep.subr.mxu0 0.0
    %608 = vmatpush2.msra.mxu0 0.0
    %609 = vmatprep.subr.mxu0 0.0
    %610 = vmatpush2.msra.mxu0 0.0
    %611 = vmatprep.subr.mxu0 0.0
    %612 = vmatpush2.msra.mxu0 0.0
    %613 = vmatprep.subr.mxu0 0.0
    %614 = vmatpush2.msra.mxu0 0.0
    %615 = vmatprep.subr.mxu0 0.0
    %616 = vmatpush2.msra.mxu0 0.0
    %617 = vmatprep.subr.mxu0 0.0
    %618 = vmatpush2.msra.mxu0 0.0
    %619 = vmatprep.subr.mxu0 0.0
    %620 = vmatpush2.msra.mxu0 0.0
    %621 = vmatprep.mubr.f32.mxu0 0.0
    %622 = vmatmul.mubr.f32.gmra.mxu0 %v38
    %v623 = vpop.f32.mrf.mxu0
    %v624 = vadd.f32 %v539, %v623
    %v625 = vpop.f32.mrf.mxu0
    %626 = vmatprep.mubr.f32.mxu0 0.0
    %627 = vmatmul.mubr.f32.gmra.mxu0 %v47
    %v628 = vpop.f32.mrf.mxu0
    %v629 = vadd.f32 %v544, %v628
    %v630 = vpop.f32.mrf.mxu0
    %631 = vmatprep.mubr.f32.mxu0 0.0
    %632 = vmatmul.mubr.f32.gmra.mxu0 %v56
    %v633 = vpop.f32.mrf.mxu0
    %v634 = vadd.f32 %v549, %v633
    %v635 = vpop.f32.mrf.mxu0
    %636 = vmatprep.mubr.f32.mxu0 0.0
    %637 = vmatmul.mubr.f32.gmra.mxu0 %v65
    %v638 = vpop.f32.mrf.mxu0
    %v639 = vadd.f32 %v554, %v638
    %v640 = vpop.f32.mrf.mxu0
    %641 = vdwg.mxu0
    %v642 = vmax.f32 %v624, 0.0
    %v643 = vmax.f32 %v629, 0.0
    %v644 = vmax.f32 %v634, 0.0
    %v645 = vmax.f32 %v639, 0.0
    %v646 = vmax.f32 %v642, %v643
    %v647 = vmax.f32 %v644, %v645
    %v648 = vmax.f32 %v646, %v647
    %v650 = vrot.slane %v648, 2
    %v652 = vrot.slane %v648, 4
    %v654 = vrot.slane %v648, 6
    %v656 = vld [vmem:[%s3] sm:$0xff]
    %v657 = vld [vmem:[%s3 + $0x8] sm:$0xff]
    %v658 = vld [vmem:[%s3 + $0x10] sm:$0xff]
    %v659 = vld [vmem:[%s3 + $0x18] sm:$0xff]
    %v660 = vld [vmem:[%s3 + $0x20] sm:$0xff]
    %v661 = vld [vmem:[%s3 + $0x28] sm:$0xff]
    %v662 = vld [vmem:[%s3 + $0x30] sm:$0xff]
    %v663 = vld [vmem:[%s3 + $0x38] sm:$0xff]
    %v664 = vld [vmem:[%s3 + $0x40] sm:$0xff]
    %v665 = vld [vmem:[%s3 + $0x48] sm:$0xff]
    %v666 = vld [vmem:[%s3 + $0x50] sm:$0xff]
    %v667 = vld [vmem:[%s3 + $0x58] sm:$0xff]
    %v668 = vld [vmem:[%s3 + $0x60] sm:$0xff]
    %v669 = vld [vmem:[%s3 + $0x68] sm:$0xff]
    %v670 = vld [vmem:[%s3 + $0x70] sm:$0xff]
    %v671 = vld [vmem:[%s3 + $0x78] sm:$0xff]
    %v672 = vld [vmem:[%s3 + $0x80] sm:$0xff]
    %v673 = vld [vmem:[%s3 + $0x88] sm:$0xff]
    %v674 = vld [vmem:[%s3 + $0x90] sm:$0xff]
    %v675 = vld [vmem:[%s3 + $0x98] sm:$0xff]
    %v676 = vld [vmem:[%s3 + $0xa0] sm:$0xff]
    %v677 = vld [vmem:[%s3 + $0xa8] sm:$0xff]
    %v678 = vld [vmem:[%s3 + $0xb0] sm:$0xff]
    %v679 = vld [vmem:[%s3 + $0xb8] sm:$0xff]
    %v680 = vld [vmem:[%s3 + $0xc0] sm:$0xff]
    %v681 = vld [vmem:[%s3 + $0xc8] sm:$0xff]
    %v682 = vld [vmem:[%s3 + $0xd0] sm:$0xff]
    %v683 = vld [vmem:[%s3 + $0xd8] sm:$0xff]
    %v684 = vld [vmem:[%s3 + $0xe0] sm:$0xff]
    %v685 = vld [vmem:[%s3 + $0xe8] sm:$0xff]
    %v686 = vld [vmem:[%s3 + $0xf0] sm:$0xff]
    %v687 = vld [vmem:[%s3 + $0xf8] sm:$0xff]
    %v688 = vld [vmem:[%s3 + $0x100] sm:$0xff]
    %v689 = vld [vmem:[%s3 + $0x108] sm:$0xff]
    %v690 = vld [vmem:[%s3 + $0x110] sm:$0xff]
    %v691 = vld [vmem:[%s3 + $0x118] sm:$0xff]
    %v692 = vld [vmem:[%s3 + $0x120] sm:$0xff]
    %v693 = vld [vmem:[%s3 + $0x128] sm:$0xff]
    %v694 = vld [vmem:[%s3 + $0x130] sm:$0xff]
    %v695 = vld [vmem:[%s3 + $0x138] sm:$0xff]
    %v696 = vld [vmem:[%s3 + $0x140] sm:$0xff]
    %v697 = vld [vmem:[%s3 + $0x148] sm:$0xff]
    %v698 = vld [vmem:[%s3 + $0x150] sm:$0xff]
    %v699 = vld [vmem:[%s3 + $0x158] sm:$0xff]
    %v700 = vld [vmem:[%s3 + $0x160] sm:$0xff]
    %v701 = vld [vmem:[%s3 + $0x168] sm:$0xff]
    %v702 = vld [vmem:[%s3 + $0x170] sm:$0xff]
    %v703 = vld [vmem:[%s3 + $0x178] sm:$0xff]
    %v704 = vld [vmem:[%s3 + $0x180] sm:$0xff]
    %v705 = vld [vmem:[%s3 + $0x188] sm:$0xff]
    %v706 = vld [vmem:[%s3 + $0x190] sm:$0xff]
    %v707 = vld [vmem:[%s3 + $0x198] sm:$0xff]
    %v708 = vld [vmem:[%s3 + $0x1a0] sm:$0xff]
    %v709 = vld [vmem:[%s3 + $0x1a8] sm:$0xff]
    %v710 = vld [vmem:[%s3 + $0x1b0] sm:$0xff]
    %v711 = vld [vmem:[%s3 + $0x1b8] sm:$0xff]
    %v712 = vld [vmem:[%s3 + $0x1c0] sm:$0xff]
    %v713 = vld [vmem:[%s3 + $0x1c8] sm:$0xff]
    %v714 = vld [vmem:[%s3 + $0x1d0] sm:$0xff]
    %v715 = vld [vmem:[%s3 + $0x1d8] sm:$0xff]
    %v716 = vld [vmem:[%s3 + $0x1e0] sm:$0xff]
    %v717 = vld [vmem:[%s3 + $0x1e8] sm:$0xff]
    %v718 = vld [vmem:[%s3 + $0x1f0] sm:$0xff]
    %v719 = vld [vmem:[%s3 + $0x1f8] sm:$0xff]
    %v720 = vld [vmem:[%s3 + $0x200] sm:$0xff]
    %v721 = vld [vmem:[%s3 + $0x208] sm:$0xff]
    %v722 = vld [vmem:[%s3 + $0x210] sm:$0xff]
    %v723 = vld [vmem:[%s3 + $0x218] sm:$0xff]
    %v724 = vld [vmem:[%s3 + $0x220] sm:$0xff]
    %v725 = vld [vmem:[%s3 + $0x228] sm:$0xff]
    %v726 = vld [vmem:[%s3 + $0x230] sm:$0xff]
    %v727 = vld [vmem:[%s3 + $0x238] sm:$0xff]
    %v728 = vld [vmem:[%s3 + $0x240] sm:$0xff]
    %v729 = vld [vmem:[%s3 + $0x248] sm:$0xff]
    %v730 = vld [vmem:[%s3 + $0x250] sm:$0xff]
    %v731 = vld [vmem:[%s3 + $0x258] sm:$0xff]
    %v732 = vld [vmem:[%s3 + $0x260] sm:$0xff]
    %v733 = vld [vmem:[%s3 + $0x268] sm:$0xff]
    %v734 = vld [vmem:[%s3 + $0x270] sm:$0xff]
    %v735 = vld [vmem:[%s3 + $0x278] sm:$0xff]
    %v736 = vld [vmem:[%s3 + $0x280] sm:$0xff]
    %v737 = vld [vmem:[%s3 + $0x288] sm:$0xff]
    %v738 = vld [vmem:[%s3 + $0x290] sm:$0xff]
    %v739 = vld [vmem:[%s3 + $0x298] sm:$0xff]
    %v740 = vld [vmem:[%s3 + $0x2a0] sm:$0xff]
    %v741 = vld [vmem:[%s3 + $0x2a8] sm:$0xff]
    %v742 = vld [vmem:[%s3 + $0x2b0] sm:$0xff]
    %v743 = vld [vmem:[%s3 + $0x2b8] sm:$0xff]
    %v744 = vld [vmem:[%s3 + $0x2c0] sm:$0xff]
    %v745 = vld [vmem:[%s3 + $0x2c8] sm:$0xff]
    %v746 = vld [vmem:[%s3 + $0x2d0] sm:$0xff]
    %v747 = vld [vmem:[%s3 + $0x2d8] sm:$0xff]
    %v748 = vld [vmem:[%s3 + $0x2e0] sm:$0xff]
    %v749 = vld [vmem:[%s3 + $0x2e8] sm:$0xff]
    %v750 = vld [vmem:[%s3 + $0x2f0] sm:$0xff]
    %v751 = vld [vmem:[%s3 + $0x2f8] sm:$0xff]
    %v752 = vld [vmem:[%s3 + $0x300] sm:$0xff]
    %v753 = vld [vmem:[%s3 + $0x308] sm:$0xff]
    %v754 = vld [vmem:[%s3 + $0x310] sm:$0xff]
    %v755 = vld [vmem:[%s3 + $0x318] sm:$0xff]
    %v756 = vld [vmem:[%s3 + $0x320] sm:$0xff]
    %v757 = vld [vmem:[%s3 + $0x328] sm:$0xff]
    %v758 = vld [vmem:[%s3 + $0x330] sm:$0xff]
    %v759 = vld [vmem:[%s3 + $0x338] sm:$0xff]
    %v760 = vld [vmem:[%s3 + $0x340] sm:$0xff]
    %v761 = vld [vmem:[%s3 + $0x348] sm:$0xff]
    %v762 = vld [vmem:[%s3 + $0x350] sm:$0xff]
    %v763 = vld [vmem:[%s3 + $0x358] sm:$0xff]
    %v764 = vld [vmem:[%s3 + $0x360] sm:$0xff]
    %v765 = vld [vmem:[%s3 + $0x368] sm:$0xff]
    %v766 = vld [vmem:[%s3 + $0x370] sm:$0xff]
    %v767 = vld [vmem:[%s3 + $0x378] sm:$0xff]
    %v768 = vld [vmem:[%s3 + $0x380] sm:$0xff]
    %v769 = vld [vmem:[%s3 + $0x388] sm:$0xff]
    %v770 = vld [vmem:[%s3 + $0x390] sm:$0xff]
    %v771 = vld [vmem:[%s3 + $0x398] sm:$0xff]
    %v772 = vld [vmem:[%s3 + $0x3a0] sm:$0xff]
    %v773 = vld [vmem:[%s3 + $0x3a8] sm:$0xff]
    %v774 = vld [vmem:[%s3 + $0x3b0] sm:$0xff]
    %v775 = vld [vmem:[%s3 + $0x3b8] sm:$0xff]
    %v776 = vld [vmem:[%s3 + $0x3c0] sm:$0xff]
    %v777 = vld [vmem:[%s3 + $0x3c8] sm:$0xff]
    %v778 = vld [vmem:[%s3 + $0x3d0] sm:$0xff]
    %v779 = vld [vmem:[%s3 + $0x3d8] sm:$0xff]
    %v780 = vld [vmem:[%s3 + $0x3e0] sm:$0xff]
    %v781 = vld [vmem:[%s3 + $0x3e8] sm:$0xff]
    %v782 = vld [vmem:[%s3 + $0x3f0] sm:$0xff]
    %v783 = vld [vmem:[%s3 + $0x3f8] sm:$0xff]
    %v784 = vld [vmem:[%s3 + $0x400] sm:$0xff]
    %v785 = vld [vmem:[%s3 + $0x408] sm:$0xff]
    %v786 = vld [vmem:[%s3 + $0x410] sm:$0xff]
    %v787 = vld [vmem:[%s3 + $0x418] sm:$0xff]
    %v788 = vld [vmem:[%s3 + $0x420] sm:$0xff]
    %v789 = vld [vmem:[%s3 + $0x428] sm:$0xff]
    %v790 = vld [vmem:[%s3 + $0x430] sm:$0xff]
    %v791 = vld [vmem:[%s3 + $0x438] sm:$0xff]
    %v792 = vld [vmem:[%s3 + $0x440] sm:$0xff]
    %v793 = vld [vmem:[%s3 + $0x448] sm:$0xff]
    %v794 = vld [vmem:[%s3 + $0x450] sm:$0xff]
    %v795 = vld [vmem:[%s3 + $0x458] sm:$0xff]
    %v796 = vld [vmem:[%s3 + $0x460] sm:$0xff]
    %v797 = vld [vmem:[%s3 + $0x468] sm:$0xff]
    %v798 = vld [vmem:[%s3 + $0x470] sm:$0xff]
    %v799 = vld [vmem:[%s3 + $0x478] sm:$0xff]
    %v800 = vld [vmem:[%s3 + $0x480] sm:$0xff]
    %v801 = vld [vmem:[%s3 + $0x488] sm:$0xff]
    %v802 = vld [vmem:[%s3 + $0x490] sm:$0xff]
    %v803 = vld [vmem:[%s3 + $0x498] sm:$0xff]
    %v804 = vld [vmem:[%s3 + $0x4a0] sm:$0xff]
    %v805 = vld [vmem:[%s3 + $0x4a8] sm:$0xff]
    %v806 = vld [vmem:[%s3 + $0x4b0] sm:$0xff]
    %v807 = vld [vmem:[%s3 + $0x4b8] sm:$0xff]
    %v808 = vld [vmem:[%s3 + $0x4c0] sm:$0xff]
    %v809 = vld [vmem:[%s3 + $0x4c8] sm:$0xff]
    %v810 = vld [vmem:[%s3 + $0x4d0] sm:$0xff]
    %v811 = vld [vmem:[%s3 + $0x4d8] sm:$0xff]
    %v812 = vld [vmem:[%s3 + $0x4e0] sm:$0xff]
    %v813 = vld [vmem:[%s3 + $0x4e8] sm:$0xff]
    %v814 = vld [vmem:[%s3 + $0x4f0] sm:$0xff]
    %v815 = vld [vmem:[%s3 + $0x4f8] sm:$0xff]
    %v816 = vld [vmem:[%s3 + $0x500] sm:$0xff]
    %v817 = vld [vmem:[%s3 + $0x508] sm:$0xff]
    %v818 = vld [vmem:[%s3 + $0x510] sm:$0xff]
    %v819 = vld [vmem:[%s3 + $0x518] sm:$0xff]
    %v820 = vld [vmem:[%s3 + $0x520] sm:$0xff]
    %v821 = vld [vmem:[%s3 + $0x528] sm:$0xff]
    %v822 = vld [vmem:[%s3 + $0x530] sm:$0xff]
    %v823 = vld [vmem:[%s3 + $0x538] sm:$0xff]
    %v824 = vld [vmem:[%s3 + $0x540] sm:$0xff]
    %v825 = vld [vmem:[%s3 + $0x548] sm:$0xff]
    %v826 = vld [vmem:[%s3 + $0x550] sm:$0xff]
    %v827 = vld [vmem:[%s3 + $0x558] sm:$0xff]
    %v828 = vld [vmem:[%s3 + $0x560] sm:$0xff]
    %v829 = vld [vmem:[%s3 + $0x568] sm:$0xff]
    %v830 = vld [vmem:[%s3 + $0x570] sm:$0xff]
    %v831 = vld [vmem:[%s3 + $0x578] sm:$0xff]
    %v832 = vld [vmem:[%s3 + $0x580] sm:$0xff]
    %v833 = vld [vmem:[%s3 + $0x588] sm:$0xff]
    %v834 = vld [vmem:[%s3 + $0x590] sm:$0xff]
    %v835 = vld [vmem:[%s3 + $0x598] sm:$0xff]
    %v836 = vld [vmem:[%s3 + $0x5a0] sm:$0xff]
    %v837 = vld [vmem:[%s3 + $0x5a8] sm:$0xff]
    %v838 = vld [vmem:[%s3 + $0x5b0] sm:$0xff]
    %v839 = vld [vmem:[%s3 + $0x5b8] sm:$0xff]
    %v840 = vld [vmem:[%s3 + $0x5c0] sm:$0xff]
    %v841 = vld [vmem:[%s3 + $0x5c8] sm:$0xff]
    %v842 = vld [vmem:[%s3 + $0x5d0] sm:$0xff]
    %v843 = vld [vmem:[%s3 + $0x5d8] sm:$0xff]
    %v844 = vld [vmem:[%s3 + $0x5e0] sm:$0xff]
    %v845 = vld [vmem:[%s3 + $0x5e8] sm:$0xff]
    %v846 = vld [vmem:[%s3 + $0x5f0] sm:$0xff]
    %v847 = vld [vmem:[%s3 + $0x5f8] sm:$0xff]
    %v848 = vld [vmem:[%s3 + $0x600] sm:$0xff]
    %v849 = vld [vmem:[%s3 + $0x608] sm:$0xff]
    %v850 = vld [vmem:[%s3 + $0x610] sm:$0xff]
    %v851 = vld [vmem:[%s3 + $0x618] sm:$0xff]
    %v852 = vld [vmem:[%s3 + $0x620] sm:$0xff]
    %v853 = vld [vmem:[%s3 + $0x628] sm:$0xff]
    %v854 = vld [vmem:[%s3 + $0x630] sm:$0xff]
    %v855 = vld [vmem:[%s3 + $0x638] sm:$0xff]
    %v856 = vld [vmem:[%s3 + $0x640] sm:$0xff]
    %v857 = vld [vmem:[%s3 + $0x648] sm:$0xff]
    %v858 = vld [vmem:[%s3 + $0x650] sm:$0xff]
    %v859 = vld [vmem:[%s3 + $0x658] sm:$0xff]
    %v860 = vld [vmem:[%s3 + $0x660] sm:$0xff]
    %v861 = vld [vmem:[%s3 + $0x668] sm:$0xff]
    %v862 = vld [vmem:[%s3 + $0x670] sm:$0xff]
    %v863 = vld [vmem:[%s3 + $0x678] sm:$0xff]
    %v864 = vld [vmem:[%s3 + $0x680] sm:$0xff]
    %v865 = vld [vmem:[%s3 + $0x688] sm:$0xff]
    %v866 = vld [vmem:[%s3 + $0x690] sm:$0xff]
    %v867 = vld [vmem:[%s3 + $0x698] sm:$0xff]
    %v868 = vld [vmem:[%s3 + $0x6a0] sm:$0xff]
    %v869 = vld [vmem:[%s3 + $0x6a8] sm:$0xff]
    %v870 = vld [vmem:[%s3 + $0x6b0] sm:$0xff]
    %v871 = vld [vmem:[%s3 + $0x6b8] sm:$0xff]
    %v872 = vld [vmem:[%s3 + $0x6c0] sm:$0xff]
    %v873 = vld [vmem:[%s3 + $0x6c8] sm:$0xff]
    %v874 = vld [vmem:[%s3 + $0x6d0] sm:$0xff]
    %v875 = vld [vmem:[%s3 + $0x6d8] sm:$0xff]
    %v876 = vld [vmem:[%s3 + $0x6e0] sm:$0xff]
    %v877 = vld [vmem:[%s3 + $0x6e8] sm:$0xff]
    %v878 = vld [vmem:[%s3 + $0x6f0] sm:$0xff]
    %v879 = vld [vmem:[%s3 + $0x6f8] sm:$0xff]
    %v880 = vld [vmem:[%s3 + $0x700] sm:$0xff]
    %v881 = vld [vmem:[%s3 + $0x708] sm:$0xff]
    %v882 = vld [vmem:[%s3 + $0x710] sm:$0xff]
    %v883 = vld [vmem:[%s3 + $0x718] sm:$0xff]
    %v884 = vld [vmem:[%s3 + $0x720] sm:$0xff]
    %v885 = vld [vmem:[%s3 + $0x728] sm:$0xff]
    %v886 = vld [vmem:[%s3 + $0x730] sm:$0xff]
    %v887 = vld [vmem:[%s3 + $0x738] sm:$0xff]
    %v888 = vld [vmem:[%s3 + $0x740] sm:$0xff]
    %v889 = vld [vmem:[%s3 + $0x748] sm:$0xff]
    %v890 = vld [vmem:[%s3 + $0x750] sm:$0xff]
    %v891 = vld [vmem:[%s3 + $0x758] sm:$0xff]
    %v892 = vld [vmem:[%s3 + $0x760] sm:$0xff]
    %v893 = vld [vmem:[%s3 + $0x768] sm:$0xff]
    %v894 = vld [vmem:[%s3 + $0x770] sm:$0xff]
    %v895 = vld [vmem:[%s3 + $0x778] sm:$0xff]
    %v896 = vld [vmem:[%s3 + $0x780] sm:$0xff]
    %v897 = vld [vmem:[%s3 + $0x788] sm:$0xff]
    %v898 = vld [vmem:[%s3 + $0x790] sm:$0xff]
    %v899 = vld [vmem:[%s3 + $0x798] sm:$0xff]
    %v900 = vld [vmem:[%s3 + $0x7a0] sm:$0xff]
    %v901 = vld [vmem:[%s3 + $0x7a8] sm:$0xff]
    %v902 = vld [vmem:[%s3 + $0x7b0] sm:$0xff]
    %v903 = vld [vmem:[%s3 + $0x7b8] sm:$0xff]
    %v904 = vld [vmem:[%s3 + $0x7c0] sm:$0xff]
    %v905 = vld [vmem:[%s3 + $0x7c8] sm:$0xff]
    %v906 = vld [vmem:[%s3 + $0x7d0] sm:$0xff]
    %v907 = vld [vmem:[%s3 + $0x7d8] sm:$0xff]
    %v908 = vld [vmem:[%s3 + $0x7e0] sm:$0xff]
    %v909 = vld [vmem:[%s3 + $0x7e8] sm:$0xff]
    %v910 = vld [vmem:[%s3 + $0x7f0] sm:$0xff]
    %v911 = vld [vmem:[%s3 + $0x7f8] sm:$0xff]
    %v912 = vld [vmem:[%s4] sm:$0xf]
    %v914 = vlaneseq
    %v915 = vshrl.u32 %v914, 7
    %v916 = vsub.s32 0, %v915
    %v917 = vrot.slane %v912, %v916
    %v918 = vlaneseq
    %v919 = vshrl.u32 %v918, 7
    %v920 = vsub.s32 1, %v919
    %v921 = vrot.slane %v912, %v920
    %v922 = vlaneseq
    %v923 = vshrl.u32 %v922, 7
    %v924 = vsub.s32 2, %v923
    %v925 = vrot.slane %v912, %v924
    %v926 = vlaneseq
    %v927 = vshrl.u32 %v926, 7
    %v928 = vsub.s32 3, %v927
    %v929 = vrot.slane %v912, %v928
    %934 = vmatprep.subr.mxu0 %v717
    %935 = vmatpush1.msra.mxu0 %v716
    %936 = vmatprep.subr.mxu0 %v713
    %937 = vmatpush1.msra.mxu0 %v712
    %938 = vmatprep.subr.mxu0 %v709
    %939 = vmatpush1.msra.mxu0 %v708
    %940 = vmatprep.subr.mxu0 %v705
    %941 = vmatpush1.msra.mxu0 %v704
    %942 = vmatprep.subr.mxu0 %v701
    %943 = vmatpush1.msra.mxu0 %v700
    %944 = vmatprep.subr.mxu0 %v697
    %945 = vmatpush1.msra.mxu0 %v696
    %946 = vmatprep.subr.mxu0 %v693
    %947 = vmatpush1.msra.mxu0 %v692
    %948 = vmatprep.subr.mxu0 %v689
    %949 = vmatpush1.msra.mxu0 %v688
    %950 = vmatprep.subr.mxu0 %v685
    %951 = vmatpush1.msra.mxu0 %v684
    %952 = vmatprep.subr.mxu0 %v681
    %953 = vmatpush1.msra.mxu0 %v680
    %954 = vmatprep.subr.mxu0 %v677
    %955 = vmatpush1.msra.mxu0 %v676
    %956 = vmatprep.subr.mxu0 %v673
    %957 = vmatpush1.msra.mxu0 %v672
    %958 = vmatprep.subr.mxu0 %v669
    %959 = vmatpush1.msra.mxu0 %v668
    %960 = vmatprep.subr.mxu0 %v665
    %961 = vmatpush1.msra.mxu0 %v664
    %962 = vmatprep.subr.mxu0 %v661
    %963 = vmatpush1.msra.mxu0 %v660
    %964 = vmatprep.subr.mxu0 %v657
    %965 = vmatpush1.msra.mxu0 %v656
    %966 = vmatprep.subr.mxu0 %v781
    %967 = vmatpush2.msra.mxu0 %v780
    %968 = vmatprep.subr.mxu0 %v777
    %969 = vmatpush2.msra.mxu0 %v776
    %970 = vmatprep.subr.mxu0 %v773
    %971 = vmatpush2.msra.mxu0 %v772
    %972 = vmatprep.subr.mxu0 %v769
    %973 = vmatpush2.msra.mxu0 %v768
    %974 = vmatprep.subr.mxu0 %v765
    %975 = vmatpush2.msra.mxu0 %v764
    %976 = vmatprep.subr.mxu0 %v761
    %977 = vmatpush2.msra.mxu0 %v760
    %978 = vmatprep.subr.mxu0 %v757
    %979 = vmatpush2.msra.mxu0 %v756
    %980 = vmatprep.subr.mxu0 %v753
    %981 = vmatpush2.msra.mxu0 %v752
    %982 = vmatprep.subr.mxu0 %v749
    %983 = vmatpush2.msra.mxu0 %v748
    %984 = vmatprep.subr.mxu0 %v745
    %985 = vmatpush2.msra.mxu0 %v744
    %986 = vmatprep.subr.mxu0 %v741
    %987 = vmatpush2.msra.mxu0 %v740
    %988 = vmatprep.subr.mxu0 %v737
    %989 = vmatpush2.msra.mxu0 %v736
    %990 = vmatprep.subr.mxu0 %v733
    %991 = vmatpush2.msra.mxu0 %v732
    %992 = vmatprep.subr.mxu0 %v729
    %993 = vmatpush2.msra.mxu0 %v728
    %994 = vmatprep.subr.mxu0 %v725
    %995 = vmatpush2.msra.mxu0 %v724
    %996 = vmatprep.subr.mxu0 %v721
    %997 = vmatpush2.msra.mxu0 %v720
    %998 = vmatprep.mubr.f32.mxu0 %v650
    %999 = vmatmul.mubr.f32.gmra.mxu0 %v648
    %v1000 = vpop.f32.mrf.mxu0
    %v1001 = vadd.f32 %v917, %v1000
    %v1002 = vpop.f32.mrf.mxu0
    %v1003 = vadd.f32 %v921, %v1002
    %1004 = vdwg.mxu0
    %1005 = vmatprep.subr.mxu0 %v845
    %1006 = vmatpush1.msra.mxu0 %v844
    %1007 = vmatprep.subr.mxu0 %v841
    %1008 = vmatpush1.msra.mxu0 %v840
    %1009 = vmatprep.subr.mxu0 %v837
    %1010 = vmatpush1.msra.mxu0 %v836
    %1011 = vmatprep.subr.mxu0 %v833
    %1012 = vmatpush1.msra.mxu0 %v832
    %1013 = vmatprep.subr.mxu0 %v829
    %1014 = vmatpush1.msra.mxu0 %v828
    %1015 = vmatprep.subr.mxu0 %v825
    %1016 = vmatpush1.msra.mxu0 %v824
    %1017 = vmatprep.subr.mxu0 %v821
    %1018 = vmatpush1.msra.mxu0 %v820
    %1019 = vmatprep.subr.mxu0 %v817
    %1020 = vmatpush1.msra.mxu0 %v816
    %1021 = vmatprep.subr.mxu0 %v813
    %1022 = vmatpush1.msra.mxu0 %v812
    %1023 = vmatprep.subr.mxu0 %v809
    %1024 = vmatpush1.msra.mxu0 %v808
    %1025 = vmatprep.subr.mxu0 %v805
    %1026 = vmatpush1.msra.mxu0 %v804
    %1027 = vmatprep.subr.mxu0 %v801
    %1028 = vmatpush1.msra.mxu0 %v800
    %1029 = vmatprep.subr.mxu0 %v797
    %1030 = vmatpush1.msra.mxu0 %v796
    %1031 = vmatprep.subr.mxu0 %v793
    %1032 = vmatpush1.msra.mxu0 %v792
    %1033 = vmatprep.subr.mxu0 %v789
    %1034 = vmatpush1.msra.mxu0 %v788
    %1035 = vmatprep.subr.mxu0 %v785
    %1036 = vmatpush1.msra.mxu0 %v784
    %1037 = vmatprep.subr.mxu0 %v909
    %1038 = vmatpush2.msra.mxu0 %v908
    %1039 = vmatprep.subr.mxu0 %v905
    %1040 = vmatpush2.msra.mxu0 %v904
    %1041 = vmatprep.subr.mxu0 %v901
    %1042 = vmatpush2.msra.mxu0 %v900
    %1043 = vmatprep.subr.mxu0 %v897
    %1044 = vmatpush2.msra.mxu0 %v896
    %1045 = vmatprep.subr.mxu0 %v893
    %1046 = vmatpush2.msra.mxu0 %v892
    %1047 = vmatprep.subr.mxu0 %v889
    %1048 = vmatpush2.msra.mxu0 %v888
    %1049 = vmatprep.subr.mxu0 %v885
    %1050 = vmatpush2.msra.mxu0 %v884
    %1051 = vmatprep.subr.mxu0 %v881
    %1052 = vmatpush2.msra.mxu0 %v880
    %1053 = vmatprep.subr.mxu0 %v877
    %1054 = vmatpush2.msra.mxu0 %v876
    %1055 = vmatprep.subr.mxu0 %v873
    %1056 = vmatpush2.msra.mxu0 %v872
    %1057 = vmatprep.subr.mxu0 %v869
    %1058 = vmatpush2.msra.mxu0 %v868
    %1059 = vmatprep.subr.mxu0 %v865
    %1060 = vmatpush2.msra.mxu0 %v864
    %1061 = vmatprep.subr.mxu0 %v861
    %1062 = vmatpush2.msra.mxu0 %v860
    %1063 = vmatprep.subr.mxu0 %v857
    %1064 = vmatpush2.msra.mxu0 %v856
    %1065 = vmatprep.subr.mxu0 %v853
    %1066 = vmatpush2.msra.mxu0 %v852
    %1067 = vmatprep.subr.mxu0 %v849
    %1068 = vmatpush2.msra.mxu0 %v848
    %1069 = vmatprep.mubr.f32.mxu0 %v654
    %1070 = vmatmul.mubr.f32.gmra.mxu0 %v652
    %v1071 = vpop.f32.mrf.mxu0
    %v1072 = vadd.f32 %v1001, %v1071
    %v1073 = vpop.f32.mrf.mxu0
    %v1074 = vadd.f32 %v1003, %v1073
    %1075 = vdwg.mxu0
    %1076 = vmatprep.subr.mxu0 %v719
    %1077 = vmatpush1.msra.mxu0 %v718
    %1078 = vmatprep.subr.mxu0 %v715
    %1079 = vmatpush1.msra.mxu0 %v714
    %1080 = vmatprep.subr.mxu0 %v711
    %1081 = vmatpush1.msra.mxu0 %v710
    %1082 = vmatprep.subr.mxu0 %v707
    %1083 = vmatpush1.msra.mxu0 %v706
    %1084 = vmatprep.subr.mxu0 %v703
    %1085 = vmatpush1.msra.mxu0 %v702
    %1086 = vmatprep.subr.mxu0 %v699
    %1087 = vmatpush1.msra.mxu0 %v698
    %1088 = vmatprep.subr.mxu0 %v695
    %1089 = vmatpush1.msra.mxu0 %v694
    %1090 = vmatprep.subr.mxu0 %v691
    %1091 = vmatpush1.msra.mxu0 %v690
    %1092 = vmatprep.subr.mxu0 %v687
    %1093 = vmatpush1.msra.mxu0 %v686
    %1094 = vmatprep.subr.mxu0 %v683
    %1095 = vmatpush1.msra.mxu0 %v682
    %1096 = vmatprep.subr.mxu0 %v679
    %1097 = vmatpush1.msra.mxu0 %v678
    %1098 = vmatprep.subr.mxu0 %v675
    %1099 = vmatpush1.msra.mxu0 %v674
    %1100 = vmatprep.subr.mxu0 %v671
    %1101 = vmatpush1.msra.mxu0 %v670
    %1102 = vmatprep.subr.mxu0 %v667
    %1103 = vmatpush1.msra.mxu0 %v666
    %1104 = vmatprep.subr.mxu0 %v663
    %1105 = vmatpush1.msra.mxu0 %v662
    %1106 = vmatprep.subr.mxu0 %v659
    %1107 = vmatpush1.msra.mxu0 %v658
    %1108 = vmatprep.subr.mxu0 %v783
    %1109 = vmatpush2.msra.mxu0 %v782
    %1110 = vmatprep.subr.mxu0 %v779
    %1111 = vmatpush2.msra.mxu0 %v778
    %1112 = vmatprep.subr.mxu0 %v775
    %1113 = vmatpush2.msra.mxu0 %v774
    %1114 = vmatprep.subr.mxu0 %v771
    %1115 = vmatpush2.msra.mxu0 %v770
    %1116 = vmatprep.subr.mxu0 %v767
    %1117 = vmatpush2.msra.mxu0 %v766
    %1118 = vmatprep.subr.mxu0 %v763
    %1119 = vmatpush2.msra.mxu0 %v762
    %1120 = vmatprep.subr.mxu0 %v759
    %1121 = vmatpush2.msra.mxu0 %v758
    %1122 = vmatprep.subr.mxu0 %v755
    %1123 = vmatpush2.msra.mxu0 %v754
    %1124 = vmatprep.subr.mxu0 %v751
    %1125 = vmatpush2.msra.mxu0 %v750
    %1126 = vmatprep.subr.mxu0 %v747
    %1127 = vmatpush2.msra.mxu0 %v746
    %1128 = vmatprep.subr.mxu0 %v743
    %1129 = vmatpush2.msra.mxu0 %v742
    %1130 = vmatprep.subr.mxu0 %v739
    %1131 = vmatpush2.msra.mxu0 %v738
    %1132 = vmatprep.subr.mxu0 %v735
    %1133 = vmatpush2.msra.mxu0 %v734
    %1134 = vmatprep.subr.mxu0 %v731
    %1135 = vmatpush2.msra.mxu0 %v730
    %1136 = vmatprep.subr.mxu0 %v727
    %1137 = vmatpush2.msra.mxu0 %v726
    %1138 = vmatprep.subr.mxu0 %v723
    %1139 = vmatpush2.msra.mxu0 %v722
    %1140 = vmatprep.mubr.f32.mxu0 %v650
    %1141 = vmatmul.mubr.f32.gmra.mxu0 %v648
    %v1142 = vpop.f32.mrf.mxu0
    %v1143 = vadd.f32 %v925, %v1142
    %v1144 = vpop.f32.mrf.mxu0
    %v1145 = vadd.f32 %v929, %v1144
    %1146 = vdwg.mxu0
    %1147 = vmatprep.subr.mxu0 %v847
    %1148 = vmatpush1.msra.mxu0 %v846
    %1149 = vmatprep.subr.mxu0 %v843
    %1150 = vmatpush1.msra.mxu0 %v842
    %1151 = vmatprep.subr.mxu0 %v839
    %1152 = vmatpush1.msra.mxu0 %v838
    %1153 = vmatprep.subr.mxu0 %v835
    %1154 = vmatpush1.msra.mxu0 %v834
    %1155 = vmatprep.subr.mxu0 %v831
    %1156 = vmatpush1.msra.mxu0 %v830
    %1157 = vmatprep.subr.mxu0 %v827
    %1158 = vmatpush1.msra.mxu0 %v826
    %1159 = vmatprep.subr.mxu0 %v823
    %1160 = vmatpush1.msra.mxu0 %v822
    %1161 = vmatprep.subr.mxu0 %v819
    %1162 = vmatpush1.msra.mxu0 %v818
    %1163 = vmatprep.subr.mxu0 %v815
    %1164 = vmatpush1.msra.mxu0 %v814
    %1165 = vmatprep.subr.mxu0 %v811
    %1166 = vmatpush1.msra.mxu0 %v810
    %1167 = vmatprep.subr.mxu0 %v807
    %1168 = vmatpush1.msra.mxu0 %v806
    %1169 = vmatprep.subr.mxu0 %v803
    %1170 = vmatpush1.msra.mxu0 %v802
    %1171 = vmatprep.subr.mxu0 %v799
    %1172 = vmatpush1.msra.mxu0 %v798
    %1173 = vmatprep.subr.mxu0 %v795
    %1174 = vmatpush1.msra.mxu0 %v794
    %1175 = vmatprep.subr.mxu0 %v791
    %1176 = vmatpush1.msra.mxu0 %v790
    %1177 = vmatprep.subr.mxu0 %v787
    %1178 = vmatpush1.msra.mxu0 %v786
    %1179 = vmatprep.subr.mxu0 %v911
    %1180 = vmatpush2.msra.mxu0 %v910
    %1181 = vmatprep.subr.mxu0 %v907
    %1182 = vmatpush2.msra.mxu0 %v906
    %1183 = vmatprep.subr.mxu0 %v903
    %1184 = vmatpush2.msra.mxu0 %v902
    %1185 = vmatprep.subr.mxu0 %v899
    %1186 = vmatpush2.msra.mxu0 %v898
    %1187 = vmatprep.subr.mxu0 %v895
    %1188 = vmatpush2.msra.mxu0 %v894
    %1189 = vmatprep.subr.mxu0 %v891
    %1190 = vmatpush2.msra.mxu0 %v890
    %1191 = vmatprep.subr.mxu0 %v887
    %1192 = vmatpush2.msra.mxu0 %v886
    %1193 = vmatprep.subr.mxu0 %v883
    %1194 = vmatpush2.msra.mxu0 %v882
    %1195 = vmatprep.subr.mxu0 %v879
    %1196 = vmatpush2.msra.mxu0 %v878
    %1197 = vmatprep.subr.mxu0 %v875
    %1198 = vmatpush2.msra.mxu0 %v874
    %1199 = vmatprep.subr.mxu0 %v871
    %1200 = vmatpush2.msra.mxu0 %v870
    %1201 = vmatprep.subr.mxu0 %v867
    %1202 = vmatpush2.msra.mxu0 %v866
    %1203 = vmatprep.subr.mxu0 %v863
    %1204 = vmatpush2.msra.mxu0 %v862
    %1205 = vmatprep.subr.mxu0 %v859
    %1206 = vmatpush2.msra.mxu0 %v858
    %1207 = vmatprep.subr.mxu0 %v855
    %1208 = vmatpush2.msra.mxu0 %v854
    %1209 = vmatprep.subr.mxu0 %v851
    %1210 = vmatpush2.msra.mxu0 %v850
    %1211 = vmatprep.mubr.f32.mxu0 %v654
    %1212 = vmatmul.mubr.f32.gmra.mxu0 %v652
    %v1213 = vpop.f32.mrf.mxu0
    %v1214 = vadd.f32 %v1143, %v1213
    %v1215 = vpop.f32.mrf.mxu0
    %v1216 = vadd.f32 %v1145, %v1215
    %1217 = vdwg.mxu0
    %v1218 = vmax.f32 %v1072, 0.0
    %v1219 = vmax.f32 %v1074, 0.0
    %v1220 = vmax.f32 %v1214, 0.0
    %v1221 = vmax.f32 %v1216, 0.0
    %v1222 = vld [vmem:[%s5] sm:$0xff]
    %v1223 = vld [vmem:[%s5 + $0x8] sm:$0xff]
    %v1224 = vld [vmem:[%s5 + $0x10] sm:$0xff]
    %v1225 = vld [vmem:[%s5 + $0x18] sm:$0xff]
    %v1226 = vld [vmem:[%s5 + $0x20] sm:$0xff]
    %v1227 = vld [vmem:[%s5 + $0x28] sm:$0xff]
    %v1228 = vld [vmem:[%s5 + $0x30] sm:$0xff]
    %v1229 = vld [vmem:[%s5 + $0x38] sm:$0xff]
    %v1230 = vld [vmem:[%s5 + $0x40] sm:$0xff]
    %v1231 = vld [vmem:[%s5 + $0x48] sm:$0xff]
    %v1232 = vld [vmem:[%s5 + $0x50] sm:$0xff]
    %v1233 = vld [vmem:[%s5 + $0x58] sm:$0xff]
    %v1234 = vld [vmem:[%s5 + $0x60] sm:$0xff]
    %v1235 = vld [vmem:[%s5 + $0x68] sm:$0xff]
    %v1236 = vld [vmem:[%s5 + $0x70] sm:$0xff]
    %v1237 = vld [vmem:[%s5 + $0x78] sm:$0xff]
    %v1238 = vld [vmem:[%s5 + $0x80] sm:$0xff]
    %v1239 = vld [vmem:[%s5 + $0x88] sm:$0xff]
    %v1240 = vld [vmem:[%s5 + $0x90] sm:$0xff]
    %v1241 = vld [vmem:[%s5 + $0x98] sm:$0xff]
    %v1242 = vld [vmem:[%s5 + $0xa0] sm:$0xff]
    %v1243 = vld [vmem:[%s5 + $0xa8] sm:$0xff]
    %v1244 = vld [vmem:[%s5 + $0xb0] sm:$0xff]
    %v1245 = vld [vmem:[%s5 + $0xb8] sm:$0xff]
    %v1246 = vld [vmem:[%s5 + $0xc0] sm:$0xff]
    %v1247 = vld [vmem:[%s5 + $0xc8] sm:$0xff]
    %v1248 = vld [vmem:[%s5 + $0xd0] sm:$0xff]
    %v1249 = vld [vmem:[%s5 + $0xd8] sm:$0xff]
    %v1250 = vld [vmem:[%s5 + $0xe0] sm:$0xff]
    %v1251 = vld [vmem:[%s5 + $0xe8] sm:$0xff]
    %v1252 = vld [vmem:[%s5 + $0xf0] sm:$0xff]
    %v1253 = vld [vmem:[%s5 + $0xf8] sm:$0xff]
    %v1254 = vld [vmem:[%s5 + $0x100] sm:$0xff]
    %v1255 = vld [vmem:[%s5 + $0x108] sm:$0xff]
    %v1256 = vld [vmem:[%s5 + $0x110] sm:$0xff]
    %v1257 = vld [vmem:[%s5 + $0x118] sm:$0xff]
    %v1258 = vld [vmem:[%s5 + $0x120] sm:$0xff]
    %v1259 = vld [vmem:[%s5 + $0x128] sm:$0xff]
    %v1260 = vld [vmem:[%s5 + $0x130] sm:$0xff]
    %v1261 = vld [vmem:[%s5 + $0x138] sm:$0xff]
    %v1262 = vld [vmem:[%s5 + $0x140] sm:$0xff]
    %v1263 = vld [vmem:[%s5 + $0x148] sm:$0xff]
    %v1264 = vld [vmem:[%s5 + $0x150] sm:$0xff]
    %v1265 = vld [vmem:[%s5 + $0x158] sm:$0xff]
    %v1266 = vld [vmem:[%s5 + $0x160] sm:$0xff]
    %v1267 = vld [vmem:[%s5 + $0x168] sm:$0xff]
    %v1268 = vld [vmem:[%s5 + $0x170] sm:$0xff]
    %v1269 = vld [vmem:[%s5 + $0x178] sm:$0xff]
    %v1270 = vld [vmem:[%s5 + $0x180] sm:$0xff]
    %v1271 = vld [vmem:[%s5 + $0x188] sm:$0xff]
    %v1272 = vld [vmem:[%s5 + $0x190] sm:$0xff]
    %v1273 = vld [vmem:[%s5 + $0x198] sm:$0xff]
    %v1274 = vld [vmem:[%s5 + $0x1a0] sm:$0xff]
    %v1275 = vld [vmem:[%s5 + $0x1a8] sm:$0xff]
    %v1276 = vld [vmem:[%s5 + $0x1b0] sm:$0xff]
    %v1277 = vld [vmem:[%s5 + $0x1b8] sm:$0xff]
    %v1278 = vld [vmem:[%s5 + $0x1c0] sm:$0xff]
    %v1279 = vld [vmem:[%s5 + $0x1c8] sm:$0xff]
    %v1280 = vld [vmem:[%s5 + $0x1d0] sm:$0xff]
    %v1281 = vld [vmem:[%s5 + $0x1d8] sm:$0xff]
    %v1282 = vld [vmem:[%s5 + $0x1e0] sm:$0xff]
    %v1283 = vld [vmem:[%s5 + $0x1e8] sm:$0xff]
    %v1284 = vld [vmem:[%s5 + $0x1f0] sm:$0xff]
    %v1285 = vld [vmem:[%s5 + $0x1f8] sm:$0xff]
    %v1286 = vld [vmem:[%s6] sm:$0x1]
    %v1288 = vlaneseq
    %v1289 = vshrl.u32 %v1288, 7
    %v1290 = vsub.s32 0, %v1289
    %v1291 = vrot.slane %v1286, %v1290
    %1293 = vmatprep.subr.mxu0 0.0
    %1294 = vmatpush1.msra.mxu0 %v1237
    %1295 = vmatprep.subr.mxu0 0.0
    %1296 = vmatpush1.msra.mxu0 %v1236
    %1297 = vmatprep.subr.mxu0 0.0
    %1298 = vmatpush1.msra.mxu0 %v1235
    %1299 = vmatprep.subr.mxu0 0.0
    %1300 = vmatpush1.msra.mxu0 %v1234
    %1301 = vmatprep.subr.mxu0 0.0
    %1302 = vmatpush1.msra.mxu0 %v1233
    %1303 = vmatprep.subr.mxu0 0.0
    %1304 = vmatpush1.msra.mxu0 %v1232
    %1305 = vmatprep.subr.mxu0 0.0
    %1306 = vmatpush1.msra.mxu0 %v1231
    %1307 = vmatprep.subr.mxu0 0.0
    %1308 = vmatpush1.msra.mxu0 %v1230
    %1309 = vmatprep.subr.mxu0 0.0
    %1310 = vmatpush1.msra.mxu0 %v1229
    %1311 = vmatprep.subr.mxu0 0.0
    %1312 = vmatpush1.msra.mxu0 %v1228
    %1313 = vmatprep.subr.mxu0 0.0
    %1314 = vmatpush1.msra.mxu0 %v1227
    %1315 = vmatprep.subr.mxu0 0.0
    %1316 = vmatpush1.msra.mxu0 %v1226
    %1317 = vmatprep.subr.mxu0 0.0
    %1318 = vmatpush1.msra.mxu0 %v1225
    %1319 = vmatprep.subr.mxu0 0.0
    %1320 = vmatpush1.msra.mxu0 %v1224
    %1321 = vmatprep.subr.mxu0 0.0
    %1322 = vmatpush1.msra.mxu0 %v1223
    %1323 = vmatprep.subr.mxu0 0.0
    %1324 = vmatpush1.msra.mxu0 %v1222
    %1325 = vmatprep.subr.mxu0 0.0
    %1326 = vmatpush2.msra.mxu0 %v1253
    %1327 = vmatprep.subr.mxu0 0.0
    %1328 = vmatpush2.msra.mxu0 %v1252
    %1329 = vmatprep.subr.mxu0 0.0
    %1330 = vmatpush2.msra.mxu0 %v1251
    %1331 = vmatprep.subr.mxu0 0.0
    %1332 = vmatpush2.msra.mxu0 %v1250
    %1333 = vmatprep.subr.mxu0 0.0
    %1334 = vmatpush2.msra.mxu0 %v1249
    %1335 = vmatprep.subr.mxu0 0.0
    %1336 = vmatpush2.msra.mxu0 %v1248
    %1337 = vmatprep.subr.mxu0 0.0
    %1338 = vmatpush2.msra.mxu0 %v1247
    %1339 = vmatprep.subr.mxu0 0.0
    %1340 = vmatpush2.msra.mxu0 %v1246
    %1341 = vmatprep.subr.mxu0 0.0
    %1342 = vmatpush2.msra.mxu0 %v1245
    %1343 = vmatprep.subr.mxu0 0.0
    %1344 = vmatpush2.msra.mxu0 %v1244
    %1345 = vmatprep.subr.mxu0 0.0
    %1346 = vmatpush2.msra.mxu0 %v1243
    %1347 = vmatprep.subr.mxu0 0.0
    %1348 = vmatpush2.msra.mxu0 %v1242
    %1349 = vmatprep.subr.mxu0 0.0
    %1350 = vmatpush2.msra.mxu0 %v1241
    %1351 = vmatprep.subr.mxu0 0.0
    %1352 = vmatpush2.msra.mxu0 %v1240
    %1353 = vmatprep.subr.mxu0 0.0
    %1354 = vmatpush2.msra.mxu0 %v1239
    %1355 = vmatprep.subr.mxu0 0.0
    %1356 = vmatpush2.msra.mxu0 %v1238
    %1357 = vmatprep.mubr.f32.mxu0 %v1219
    %1358 = vmatmul.mubr.f32.gmra.mxu0 %v1218
    %v1359 = vpop.f32.mrf.mxu0
    %v1360 = vadd.f32 %v1291, %v1359
    %v1361 = vpop.f32.mrf.mxu0
    %1362 = vdwg.mxu0
    %1363 = vmatprep.subr.mxu0 0.0
    %1364 = vmatpush1.msra.mxu0 %v1269
    %1365 = vmatprep.subr.mxu0 0.0
    %1366 = vmatpush1.msra.mxu0 %v1268
    %1367 = vmatprep.subr.mxu0 0.0
    %1368 = vmatpush1.msra.mxu0 %v1267
    %1369 = vmatprep.subr.mxu0 0.0
    %1370 = vmatpush1.msra.mxu0 %v1266
    %1371 = vmatprep.subr.mxu0 0.0
    %1372 = vmatpush1.msra.mxu0 %v1265
    %1373 = vmatprep.subr.mxu0 0.0
    %1374 = vmatpush1.msra.mxu0 %v1264
    %1375 = vmatprep.subr.mxu0 0.0
    %1376 = vmatpush1.msra.mxu0 %v1263
    %1377 = vmatprep.subr.mxu0 0.0
    %1378 = vmatpush1.msra.mxu0 %v1262
    %1379 = vmatprep.subr.mxu0 0.0
    %1380 = vmatpush1.msra.mxu0 %v1261
    %1381 = vmatprep.subr.mxu0 0.0
    %1382 = vmatpush1.msra.mxu0 %v1260
    %1383 = vmatprep.subr.mxu0 0.0
    %1384 = vmatpush1.msra.mxu0 %v1259
    %1385 = vmatprep.subr.mxu0 0.0
    %1386 = vmatpush1.msra.mxu0 %v1258
    %1387 = vmatprep.subr.mxu0 0.0
    %1388 = vmatpush1.msra.mxu0 %v1257
    %1389 = vmatprep.subr.mxu0 0.0
    %1390 = vmatpush1.msra.mxu0 %v1256
    %1391 = vmatprep.subr.mxu0 0.0
    %1392 = vmatpush1.msra.mxu0 %v1255
    %1393 = vmatprep.subr.mxu0 0.0
    %1394 = vmatpush1.msra.mxu0 %v1254
    %1395 = vmatprep.subr.mxu0 0.0
    %1396 = vmatpush2.msra.mxu0 %v1285
    %1397 = vmatprep.subr.mxu0 0.0
    %1398 = vmatpush2.msra.mxu0 %v1284
    %1399 = vmatprep.subr.mxu0 0.0
    %1400 = vmatpush2.msra.mxu0 %v1283
    %1401 = vmatprep.subr.mxu0 0.0
    %1402 = vmatpush2.msra.mxu0 %v1282
    %1403 = vmatprep.subr.mxu0 0.0
    %1404 = vmatpush2.msra.mxu0 %v1281
    %1405 = vmatprep.subr.mxu0 0.0
    %1406 = vmatpush2.msra.mxu0 %v1280
    %1407 = vmatprep.subr.mxu0 0.0
    %1408 = vmatpush2.msra.mxu0 %v1279
    %1409 = vmatprep.subr.mxu0 0.0
    %1410 = vmatpush2.msra.mxu0 %v1278
    %1411 = vmatprep.subr.mxu0 0.0
    %1412 = vmatpush2.msra.mxu0 %v1277
    %1413 = vmatprep.subr.mxu0 0.0
    %1414 = vmatpush2.msra.mxu0 %v1276
    %1415 = vmatprep.subr.mxu0 0.0
    %1416 = vmatpush2.msra.mxu0 %v1275
    %1417 = vmatprep.subr.mxu0 0.0
    %1418 = vmatpush2.msra.mxu0 %v1274
    %1419 = vmatprep.subr.mxu0 0.0
    %1420 = vmatpush2.msra.mxu0 %v1273
    %1421 = vmatprep.subr.mxu0 0.0
    %1422 = vmatpush2.msra.mxu0 %v1272
    %1423 = vmatprep.subr.mxu0 0.0
    %1424 = vmatpush2.msra.mxu0 %v1271
    %1425 = vmatprep.subr.mxu0 0.0
    %1426 = vmatpush2.msra.mxu0 %v1270
    %1427 = vmatprep.mubr.f32.mxu0 %v1221
    %1428 = vmatmul.mubr.f32.gmra.mxu0 %v1220
    %v1429 = vpop.f32.mrf.mxu0
    %v1430 = vadd.f32 %v1360, %v1429
    %v1431 = vpop.f32.mrf.mxu0
    %1432 = vdwg.mxu0
    %v1437 = vcombine.low %v1218, %v1219
    %v1438 = vcombine.low %v1220, %v1221
    %v1440 = vunpack.c.l.s4 1983009808
    %v1441 = vunpack.c.0.s8 %v1440
    %v1442 = vlaneseq
    %v1443 = vshrl.u32 %v1442, 7
    %v1444 = vsub.s32 %v1441, %v1443
    %v1445 = vrot.slane %v1437, %v1444
    %v1447 = vunpack.c.l.s4 1983009808
    %v1448 = vunpack.c.0.s8 %v1447
    %v1449 = vlaneseq
    %v1450 = vshrl.u32 %v1449, 7
    %v1451 = vsub.s32 %v1448, %v1450
    %v1452 = vrot.slane %v1438, %v1451
    %v1453 = vcombine.low %v1445, %v1452
    %1455 = vst [vmem:[#allocation4] sm:$0xff] %v1453
    %1456 = vst [vmem:[#allocation2] sm:$0x3] %v1430
    // Predicated region
    $region30: #{medium_forward.5} parent=1 // pred_check
      _
    $region31: #{medium_forward.5} parent=1 // pred_check_branch
      %1458 = sbr.rel (0) target = $region33
    $region32: #{medium_forward.5} parent=1 // pred_region
      %s1460 = ssub.s32 32, 32
      %1461 = vsyncadd [#allocation3], %s1460
      %s1463 = sshll.u32 [#allocation2], 4
      %s1464 = int_to_ptr.vmem [resolvable:$true] %s1463
      %1466 = dma.vmem_to_hbm [thread:$0]  %s1464, 32, %s7, [#allocation3]
    $region33: #{medium_forward.5} parent=1 // pred_fallthru
      _
    // Predicated region
    $region34: #{medium_forward.5} parent=1 // pred_check
      _
    $region35: #{medium_forward.5} parent=1 // pred_check_branch
      %1468 = sbr.rel (0) target = $region37
    $region36: #{medium_forward.5} parent=1 // pred_region
      %s1470 = ssub.s32 128, 128
      %1471 = vsyncadd [#allocation5], %s1470
      %s1473 = sshll.u32 [#allocation4], 4
      %s1474 = int_to_ptr.vmem [resolvable:$true] %s1473
      %1476 = dma.vmem_to_hbm [thread:$0]  %s1474, 128, %s8, [#allocation5]
    $region37: #{medium_forward.5} parent=1 // pred_fallthru
      _
    // Predicated region
    $region38: #{medium_forward.5} parent=1 // pred_check
      _
    $region39: #{medium_forward.5} parent=1 // pred_check_branch
      %1478 = sbr.rel (0) target = $region41
    $region40: #{medium_forward.5} parent=1 // pred_region
      %1479 = dma.done [#allocation3], 32
    $region41: #{medium_forward.5} parent=1 // pred_fallthru
      _
    // Predicated region
    $region42: #{medium_forward.5} parent=1 // pred_check
      _
    $region43: #{medium_forward.5} parent=1 // pred_check_branch
      %1481 = sbr.rel (0) target = $region45
    $region44: #{medium_forward.5} parent=1 // pred_region
      %1482 = dma.done [#allocation5], 128
    $region45: #{medium_forward.5} parent=1 // pred_fallthru
      _
    %1483 = vsyncpa [#allocation3], 1
    %1484 = vsyncpa [#allocation5], 1

</llo_original>
